<compile_context>
chip_gen: v7x
topology: tpu7x:2x2x1
jax: 0.10.0
libtpu: 0.0.40
codegen_flags: <defaults>
</compile_context>

<pallas_src>
import math
import functools

import jax
import jax.numpy as jnp
from jax.experimental import pallas as pl
from jax.experimental.pallas import tpu as pltpu


def _tpu_hints():
    """Best-effort (tensorcores_per_chip, scoped_vmem_default_bytes)."""
    kind = ""
    try:
        kind = jax.devices()[0].device_kind.lower()
    except Exception:
        pass
    if "v7" in kind:
        return 2, 32 << 20          # 2 TCs/chip, 32 MiB scoped-VMEM default
    if "v5 lite" in kind or "v5e" in kind or "v5lite" in kind:
        return 1, 16 << 20          # v5e: 16 MiB scoped-VMEM default
    return 1, 32 << 20              # v6e & default


def _distance_embed_kernel(d_ref, coef_ref, w_ref, b_ref, o_ref, *,
                           cutoff, neg_slope, row_major):
    d = d_ref[...]                                        # (1, TE)   edges in lanes
    coef = coef_ref[...]                                  # (n_rbf, 1) n * pi / cutoff

    # ---- PainnRadialBasis, feature-major: rbf^T of shape (n_rbf, TE) ----
    zero_d = d == 0.0
    denom = jnp.where(zero_d, 1.0, d)
    inv_d = pl.reciprocal(denom, approx=False)            # EUP slot, f32-exact
    num = jnp.where(zero_d, coef, jnp.sin(coef * d))      # (n_rbf, TE)
    # NOTE: the rbf-level `d >= cutoff` mask is redundant -- the envelope below
    # hard-zeroes those columns (padded edges use d == cutoff), so it is omitted.
    rbf_t = num * inv_d                                   # (n_rbf, TE)

    # ---- Dense: W @ rbf^T + b (dropout = eval-mode no-op), leaky_relu ----
    y = jnp.dot(w_ref[...], rbf_t, preferred_element_type=jnp.float32) + b_ref[...]
    if 0.0 < neg_slope < 1.0:
        y = jnp.maximum(y, neg_slope * y)                 # single max on the big tile
    else:
        y = jnp.where(y >= 0.0, y, neg_slope * y)

    # ---- CosineEnvelope (the only cutoff mask; must stay) ----
    env = 0.5 * (jnp.cos((jnp.pi / cutoff) * d) + 1.0)    # (1, TE)
    env = jnp.where(d >= cutoff, 0.0, env)

    out = y * env                                         # (out_rows, TE)
    if row_major:
        out = out.T                                       # XLU transpose -> (TE, out_rows)
    # Lane-dense store: last dim is a multiple of 128 in both layouts -> unmasked vst.
    o_ref[...] = out.astype(o_ref.dtype)


def distance_embed(dist, w, b, n_arange, *, cutoff, neg_slope=0.01, tile_e=4096,
                   out_dtype=jnp.float32, transposed_output=False):
    """DistanceEmbed forward.

    Args:
      dist:      (E,) f32 distances.
      w:         (out_dim, n_rbf) Dense weight, PyTorch layout (out_features, in_features).
      b:         (out_dim,) Dense bias.
      n_arange:  (n_rbf,) PainnRadialBasis `n` (arange(1, n_rbf+1), possibly learnable).
      cutoff:    radial cutoff.
      tile_e:    requested edge tile (forced to a multiple of 128, auto-clamped).
      out_dtype: output dtype (jnp.float32 or jnp.bfloat16; bf16 halves HBM writeback).
      transposed_output: if True return (out_dim, E) feature-major (no transpose, no
                         lane padding) for consumers that can take that layout.

    Returns: (E, out_dim) (or (out_dim, E) if transposed_output) in `out_dtype`.
    """
    E = int(dist.shape[0])
    out_dim, n_rbf = w.shape
    n_cores, scoped_vmem = _tpu_hints()
    itemsize = jnp.dtype(out_dtype).itemsize

    # Row-major path pads the feature dim up to full 128-lane width so the in-kernel
    # transposed store stays unmasked; padded rows of W/b are zero and sliced off below.
    if transposed_output:
        out_rows = out_dim
        w_k = w.astype(jnp.float32)
        b_k = b.astype(jnp.float32).reshape(out_dim, 1)
    else:
        out_rows = pl.cdiv(out_dim, 128) * 128
        w_k = jnp.zeros((out_rows, n_rbf), jnp.float32).at[:out_dim].set(
            w.astype(jnp.float32))
        b_k = jnp.zeros((out_rows, 1), jnp.float32).at[:out_dim, 0].set(
            b.astype(jnp.float32))

    # ---- Edge-tile selection: multiple of 128, VMEM-aware, megacore-aware ----
    e_pad128 = pl.cdiv(max(E, 1), 128) * 128
    tile_e = max(128, (int(tile_e) // 128) * 128)          # force multiple of 128
    tile_e = min(tile_e, e_pad128)

    def _vmem_estimate(te):
        out_blk = out_rows * te * itemsize                 # output block
        temps = (2 * out_rows + 2 * n_rbf + 8) * te * 4    # y, rbf_t, transpose, rows
        return 2 * out_blk + 2 * te * 4 + temps            # double-buffered out + dist

    while tile_e > 128 and _vmem_estimate(tile_e) > int(0.75 * scoped_vmem):
        tile_e = max(128, (tile_e // 2 // 128) * 128)      # v5e 16 MiB scoped default etc.

    if n_cores > 1 and e_pad128 >= 2 * 128:
        # v7x: ensure >= 2 (prefer 4) grid steps so the "parallel" axis feeds both TCs.
        target_steps = 4 if e_pad128 >= 2048 else 2
        cap = pl.cdiv(pl.cdiv(E, target_steps), 128) * 128
        tile_e = min(tile_e, max(128, cap))

    e_pad = pl.cdiv(E, tile_e) * tile_e
    grid = e_pad // tile_e

    # Padded edges get d = cutoff -> envelope-zeroed in the kernel, sliced off below.
    d_row = jnp.pad(dist.astype(jnp.float32), (0, e_pad - E),
                    constant_values=float(cutoff)).reshape(1, e_pad)
    coef_col = (n_arange.astype(jnp.float32) * (math.pi / float(cutoff))).reshape(n_rbf, 1)

    kernel = functools.partial(_distance_embed_kernel, cutoff=float(cutoff),
                               neg_slope=float(neg_slope),
                               row_major=not transposed_output)

    # Advisory cost: firmly HBM-writeback-bound.
    cost = pl.CostEstimate(
        flops=2 * e_pad * n_rbf * out_rows + 8 * e_pad * n_rbf + 6 * e_pad * out_rows,
        transcendentals=e_pad * (n_rbf + 2),
        bytes_accessed=(4 * e_pad + itemsize * e_pad * out_rows
                        + 4 * (out_rows * n_rbf + out_rows + n_rbf)),
    )

    if transposed_output:
        out_shape = jax.ShapeDtypeStruct((out_rows, e_pad), out_dtype)
        out_spec = pl.BlockSpec((out_rows, tile_e), lambda i: (0, i))
    else:
        out_shape = jax.ShapeDtypeStruct((e_pad, out_rows), out_dtype)
        out_spec = pl.BlockSpec((tile_e, out_rows), lambda i: (i, 0))

    out = pl.pallas_call(
        kernel,
        out_shape=out_shape,
        grid_spec=pltpu.PrefetchScalarGridSpec(
            num_scalar_prefetch=0,
            grid=(grid,),
            in_specs=[
                pl.BlockSpec((1, tile_e), lambda i: (0, i)),        # dist (edges in lanes)
                pl.BlockSpec((n_rbf, 1), lambda i: (0, 0)),         # coef column (resident)
                pl.BlockSpec((out_rows, n_rbf), lambda i: (0, 0)),  # Dense weight (resident)
                pl.BlockSpec((out_rows, 1), lambda i: (0, 0)),      # Dense bias (resident)
            ],
            out_specs=out_spec,
        ),
        compiler_params=pltpu.CompilerParams(
            dimension_semantics=("parallel",)),
        cost_estimate=cost,
    )(d_row, coef_col, w_k, b_k)

    if transposed_output:
        return out if e_pad == E else out[:, :E]
    if e_pad == E and out_rows == out_dim:
        return out
    return out[:E, :out_dim]


def distance_embed_ref(dist, w, b, n_arange, *, cutoff, neg_slope=0.01):
    """Plain-JAX reference mirroring the PyTorch forward (row-major)."""
    d = dist.reshape(-1, 1)
    coef = n_arange.reshape(1, -1) * (math.pi / cutoff)
    denom = jnp.where(d == 0.0, 1.0, d)
    num = jnp.where(d == 0.0, coef, jnp.sin(coef * d))
    rbf = jnp.where(d >= cutoff, 0.0, num / denom)
    y = rbf @ w.T + b.reshape(1, -1)
    y = jnp.where(y >= 0.0, y, neg_slope * y)
    env = 0.5 * (jnp.cos(jnp.pi * d / cutoff) + 1.0)
    env = jnp.where(d >= cutoff, 0.0, env)
    return y * env


if __name__ == "__main__":
    # Module hyperparams (consistent with the PyTorch __init__).
    n_rbf = 16
    cutoff = 5.0
    feat_dim = 32
    out_dim = 3 * feat_dim          # 96
    E = 1000                        # ragged edge count (exercises padding + slicing)

    key = jax.random.PRNGKey(0)
    k_d, k_w = jax.random.split(key)

    # Distances in [0, 1.2*cutoff) so some exceed the cutoff; inject an exact zero.
    dist = jax.random.uniform(k_d, (E,), jnp.float32, 0.0, 1.2 * cutoff)
    dist = dist.at[0].set(0.0)

    # Dense params: xavier_uniform_ weight (out_dim, n_rbf), zero bias.
    bound = math.sqrt(6.0 / (n_rbf + out_dim))
    w = jax.random.uniform(k_w, (out_dim, n_rbf), jnp.float32, -bound, bound)
    b = jnp.zeros((out_dim,), jnp.float32)

    # PainnRadialBasis n = arange(1, n_rbf+1) (learnable_k irrelevant at init).
    n_arange = jnp.arange(1, n_rbf + 1, dtype=jnp.float32)

    ref = distance_embed_ref(dist, w, b, n_arange, cutoff=cutoff)

    # Default path: row-major f32 output via in-kernel transpose + 96->128 lane pad.
    out = jax.block_until_ready(distance_embed(dist, w, b, n_arange, cutoff=cutoff))
    assert out.shape == (E, out_dim)
    assert jnp.allclose(out, ref, atol=1e-5, rtol=1e-5), "row-major mismatch vs reference"

    # Feature-major path: (out_dim, E), no transpose/pad at all (for fused consumers).
    out_t = jax.block_until_ready(
        distance_embed(dist, w, b, n_arange, cutoff=cutoff, transposed_output=True))
    assert out_t.shape == (out_dim, E)
    assert jnp.allclose(out_t.T, ref, atol=1e-5, rtol=1e-5), "transposed mismatch vs reference"

    # bf16 writeback path: halves the dominant HBM traffic; compute stays f32.
    out_bf16 = jax.block_until_ready(
        distance_embed(dist, w, b, n_arange, cutoff=cutoff, out_dtype=jnp.bfloat16))
    assert out_bf16.shape == (E, out_dim) and out_bf16.dtype == jnp.bfloat16
    assert jnp.allclose(out_bf16.astype(jnp.float32), ref, atol=5e-2, rtol=5e-2), \
        "bf16 mismatch vs reference"

    print("KERNEL_OK")
</pallas_src>

<mosaic_0001>
module attributes {stable_mosaic.version = 11 : i64} {
  func.func @_distance_embed_kernel(%arg0: i32, %arg1: memref<1x1024xf32, #tpu.memory_space<vmem>>, %arg2: memref<16x1xf32, #tpu.memory_space<vmem>>, %arg3: memref<128x16xf32, #tpu.memory_space<vmem>>, %arg4: memref<128x1xf32, #tpu.memory_space<vmem>>, %arg5: memref<1024x128xf32, #tpu.memory_space<vmem>>) attributes {dimension_semantics = [#tpu.dimension_semantics<parallel>], iteration_bounds = array<i64: 1>, scalar_prefetch = 0 : i64, scratch_operands = 0 : i64, tpu.core_type = #tpu.core_type<tc>, window_params = [{transform_indices = @transform_0, window_bounds = array<i64: 1, 1024>}, {pipeline_mode = #tpu.pipeline_mode<synchronous>, transform_indices = @transform_1, window_bounds = array<i64: 16, 1>}, {pipeline_mode = #tpu.pipeline_mode<synchronous>, transform_indices = @transform_2, window_bounds = array<i64: 128, 16>}, {pipeline_mode = #tpu.pipeline_mode<synchronous>, transform_indices = @transform_3, window_bounds = array<i64: 128, 1>}, {transform_indices = @transform_4, window_bounds = array<i64: 1024, 128>}]} {
    %c0 = arith.constant 0 : index
    %c0_0 = arith.constant 0 : index
    %0 = vector.load %arg1[%c0, %c0_0] : memref<1x1024xf32, #tpu.memory_space<vmem>>, vector<1x1024xf32>
    %c0_1 = arith.constant 0 : index
    %c0_2 = arith.constant 0 : index
    %1 = vector.load %arg2[%c0_1, %c0_2] : memref<16x1xf32, #tpu.memory_space<vmem>>, vector<16x1xf32>
    %cst = arith.constant 0.000000e+00 : f32
    %2 = vector.broadcast %cst : f32 to vector<1x1024xf32>
    %3 = arith.cmpf oeq, %0, %2 : vector<1x1024xf32>
    %cst_3 = arith.constant 1.000000e+00 : f32
    %4 = vector.broadcast %cst_3 : f32 to vector<1x1024xf32>
    %5 = arith.select %3, %4, %0 : vector<1x1024xi1>, vector<1x1024xf32>
    %6 = tpu.reciprocal %5 : vector<1x1024xf32> -> vector<1x1024xf32>
    %7 = vector.broadcast %1 : vector<16x1xf32> to vector<16x1024xf32>
    %8 = vector.broadcast %0 : vector<1x1024xf32> to vector<16x1024xf32>
    %9 = arith.mulf %7, %8 : vector<16x1024xf32>
    %10 = math.sin %9 : vector<16x1024xf32>
    %11 = vector.shape_cast %3 : vector<1x1024xi1> to vector<1x1024xi1>
    %12 = vector.broadcast %11 : vector<1x1024xi1> to vector<16x1024xi1>
    %13 = vector.shape_cast %1 : vector<16x1xf32> to vector<16x1xf32>
    %14 = vector.broadcast %13 : vector<16x1xf32> to vector<16x1024xf32>
    %15 = arith.select %12, %14, %10 : vector<16x1024xi1>, vector<16x1024xf32>
    %16 = vector.broadcast %6 : vector<1x1024xf32> to vector<16x1024xf32>
    %17 = arith.mulf %15, %16 : vector<16x1024xf32>
    %c0_4 = arith.constant 0 : index
    %c0_5 = arith.constant 0 : index
    %18 = vector.load %arg3[%c0_4, %c0_5] : memref<128x16xf32, #tpu.memory_space<vmem>>, vector<128x16xf32>
    %cst_6 = arith.constant dense<0.000000e+00> : vector<128x1024xf32>
    %19 = tpu.matmul %18, %17, %cst_6 {dimension_numbers = #tpu.dot_dimension_numbers<[1], [0], [0], [1], [0, 0, 1, 1], [], []>} : vector<128x16xf32>, vector<16x1024xf32>, vector<128x1024xf32> -> vector<128x1024xf32>
    %c0_7 = arith.constant 0 : index
    %c0_8 = arith.constant 0 : index
    %20 = vector.load %arg4[%c0_7, %c0_8] : memref<128x1xf32, #tpu.memory_space<vmem>>, vector<128x1xf32>
    %21 = vector.broadcast %20 : vector<128x1xf32> to vector<128x1024xf32>
    %22 = arith.addf %19, %21 : vector<128x1024xf32>
    %cst_9 = arith.constant 0.00999999977 : f32
    %23 = vector.broadcast %cst_9 : f32 to vector<128x1024xf32>
    %24 = arith.mulf %23, %22 : vector<128x1024xf32>
    %25 = arith.maximumf %22, %24 : vector<128x1024xf32>
    %cst_10 = arith.constant 0.628318548 : f32
    %26 = vector.broadcast %cst_10 : f32 to vector<1x1024xf32>
    %27 = arith.mulf %26, %0 : vector<1x1024xf32>
    %28 = math.cos %27 : vector<1x1024xf32>
    %cst_11 = arith.constant 1.000000e+00 : f32
    %29 = vector.broadcast %cst_11 : f32 to vector<1x1024xf32>
    %30 = arith.addf %28, %29 : vector<1x1024xf32>
    %cst_12 = arith.constant 5.000000e-01 : f32
    %31 = vector.broadcast %cst_12 : f32 to vector<1x1024xf32>
    %32 = arith.mulf %31, %30 : vector<1x1024xf32>
    %cst_13 = arith.constant 5.000000e+00 : f32
    %33 = vector.broadcast %cst_13 : f32 to vector<1x1024xf32>
    %34 = arith.cmpf oge, %0, %33 : vector<1x1024xf32>
    %cst_14 = arith.constant 0.000000e+00 : f32
    %35 = vector.broadcast %cst_14 : f32 to vector<1x1024xf32>
    %36 = arith.select %34, %35, %32 : vector<1x1024xi1>, vector<1x1024xf32>
    %37 = vector.broadcast %36 : vector<1x1024xf32> to vector<128x1024xf32>
    %38 = arith.mulf %25, %37 : vector<128x1024xf32>
    %39 = tpu.transpose %38, [1, 0] : vector<128x1024xf32> -> vector<1024x128xf32>
    %c0_15 = arith.constant 0 : index
    %c0_16 = arith.constant 0 : index
    %40 = vector.load %arg5[%c0_15, %c0_16] : memref<1024x128xf32, #tpu.memory_space<vmem>>, vector<1024x128xf32>
    tpu.vector_store %arg5[%c0_15, %c0_16], %39 {strides = array<i32>} : memref<1024x128xf32, #tpu.memory_space<vmem>>, vector<1024x128xf32>,
    return
  }
  func.func @transform_0(%arg0: i32) -> (i32, i32) {
    %c0_i32 = arith.constant 0 : i32
    %c0_i32_0 = arith.constant 0 : i32
    return %c0_i32, %arg0 : i32, i32
  }
  func.func @transform_1(%arg0: i32) -> (i32, i32) {
    %c0_i32 = arith.constant 0 : i32
    %c0_i32_0 = arith.constant 0 : i32
    %c0_i32_1 = arith.constant 0 : i32
    return %c0_i32, %c0_i32_0 : i32, i32
  }
  func.func @transform_2(%arg0: i32) -> (i32, i32) {
    %c0_i32 = arith.constant 0 : i32
    %c0_i32_0 = arith.constant 0 : i32
    %c0_i32_1 = arith.constant 0 : i32
    return %c0_i32, %c0_i32_0 : i32, i32
  }
  func.func @transform_3(%arg0: i32) -> (i32, i32) {
    %c0_i32 = arith.constant 0 : i32
    %c0_i32_0 = arith.constant 0 : i32
    %c0_i32_1 = arith.constant 0 : i32
    return %c0_i32, %c0_i32_0 : i32, i32
  }
  func.func @transform_4(%arg0: i32) -> (i32, i32) {
    %c0_i32 = arith.constant 0 : i32
    %c0_i32_0 = arith.constant 0 : i32
    return %arg0, %c0_i32 : i32, i32
  }
}

</mosaic_0001>

<llo_original>
// kernel: tpu_custom_call.1
$region0: #{tpu_custom_call.1}
  #allocation0 [shape = 'u32[]', space=smem, size = 0x4, offset = 0x4, fixed_abs, tag = 'smem constant byte address 0x4 - core index']
  #allocation1 [shape = 'u32[144,128]{1,0:T(1,128)}', space=vmem, size = 0x12000, scoped, tag = 'internal scratch']
  %s0 = inlined_call_operand.vmem [shape: f32[1,1024], index: 0, kind: input, shape index: {}]
  %s1 = inlined_call_operand.vmem [shape: f32[16,1], index: 1, kind: input, shape index: {}]
  %s2 = inlined_call_operand.vmem [shape: f32[128,16], index: 2, kind: input, shape index: {}]
  %s3 = inlined_call_operand.vmem [shape: f32[128,1], index: 3, kind: input, shape index: {}]
  %s4 = inlined_call_operand.hbm [shape: f32[1024,128], index: 4, kind: output, shape index: {}]
  %s5 = sld [smem:[#allocation0]]
  $region26: #{tpu_custom_call.1} parent=0
    _
  %s7 = ssub.s32 1, %s5
  %s8 = scalar_select 0, %s7, %s5
  $region1: #{tpu_custom_call.1} parent=0
    #allocation2 [shape = 'u8[524288]{0}', space=vmem, size = 0x80000, scoped, tag = 'output window, operand 0, single buffered']
    #allocation3 [shape = 's32[1]{0}', space=sflag, size = 0x4, scoped, tag = 'scoped memory for tpu_custom_call.1']
    %9 = vsyncpa [#allocation3], 0
    // Predicated region
    $region2: #{tpu_custom_call.1} parent=1 // pred_check
      _
    $region3: #{tpu_custom_call.1} parent=1 // pred_check_branch
      %11 = sbr.rel (0) target = $region5
    $region4: #{tpu_custom_call.1} parent=1 // pred_region
      _
    $region5: #{tpu_custom_call.1} parent=1 // pred_fallthru
      _
    // Predicated region
    $region6: #{tpu_custom_call.1} parent=1 // pred_check
      _
    $region7: #{tpu_custom_call.1} parent=1 // pred_check_branch
      %13 = sbr.rel (0) target = $region9
    $region8: #{tpu_custom_call.1} parent=1 // pred_region
      _
    $region9: #{tpu_custom_call.1} parent=1 // pred_fallthru
      _
    // Predicated region
    $region10: #{tpu_custom_call.1} parent=1 // pred_check
      _
    $region11: #{tpu_custom_call.1} parent=1 // pred_check_branch
      %15 = sbr.rel (0) target = $region13
    $region12: #{tpu_custom_call.1} parent=1 // pred_region
      _
    $region13: #{tpu_custom_call.1} parent=1 // pred_fallthru
      _
    // Predicated region
    $region14: #{tpu_custom_call.1} parent=1 // pred_check
      _
    $region15: #{tpu_custom_call.1} parent=1 // pred_check_branch
      %17 = sbr.rel (0) target = $region17
    $region16: #{tpu_custom_call.1} parent=1 // pred_region
      _
    $region17: #{tpu_custom_call.1} parent=1 // pred_fallthru
      _
    %v18 = vld [vmem:[%s0] sm:$0xff]
    %v19 = vld [vmem:[%s1] sm:$0xff]
    %v20 = vld [vmem:[%s1 + $0x8] sm:$0xff]
    %vm21 = vcmp.eq.f32.partialorder %v18, 0.0
    %v22 = vsel %vm21, 1.0, %v18
    %v23 = vrcp.pop %v22
    %25 = vset.pattern.permute.xlu0 0
    %26 = vperm.xlu0 %25, %v19
    %v27 = vpop.permute.xlu0 %26
    %30 = vset.pattern.permute.xlu0 0
    %31 = vperm.xlu0 %30, %v20
    %v32 = vpop.permute.xlu0 %31
    %v35 = vlaneseq
    %v36 = vshrl.u32 %v35, 7
    %v37 = vsub.s32 0, %v36
    %v38 = vrot.slane %v18, %v37
    %v39 = vlaneseq
    %v40 = vshrl.u32 %v39, 7
    %v41 = vsub.s32 1, %v40
    %v42 = vrot.slane %v18, %v41
    %v43 = vlaneseq
    %v44 = vshrl.u32 %v43, 7
    %v45 = vsub.s32 2, %v44
    %v46 = vrot.slane %v18, %v45
    %v47 = vlaneseq
    %v48 = vshrl.u32 %v47, 7
    %v49 = vsub.s32 3, %v48
    %v50 = vrot.slane %v18, %v49
    %v51 = vlaneseq
    %v52 = vshrl.u32 %v51, 7
    %v53 = vsub.s32 4, %v52
    %v54 = vrot.slane %v18, %v53
    %v55 = vlaneseq
    %v56 = vshrl.u32 %v55, 7
    %v57 = vsub.s32 5, %v56
    %v58 = vrot.slane %v18, %v57
    %v59 = vlaneseq
    %v60 = vshrl.u32 %v59, 7
    %v61 = vsub.s32 6, %v60
    %v62 = vrot.slane %v18, %v61
    %v63 = vlaneseq
    %v64 = vshrl.u32 %v63, 7
    %v65 = vsub.s32 7, %v64
    %v66 = vrot.slane %v18, %v65
    %v75 = vmul.f32 %v27, %v38
    %v76 = vmul.f32 %v27, %v42
    %v77 = vmul.f32 %v27, %v46
    %v78 = vmul.f32 %v27, %v50
    %v79 = vmul.f32 %v27, %v54
    %v80 = vmul.f32 %v27, %v58
    %v81 = vmul.f32 %v27, %v62
    %v82 = vmul.f32 %v27, %v66
    %v83 = vmul.f32 %v32, %v38
    %v84 = vmul.f32 %v32, %v42
    %v85 = vmul.f32 %v32, %v46
    %v86 = vmul.f32 %v32, %v50
    %v87 = vmul.f32 %v32, %v54
    %v88 = vmul.f32 %v32, %v58
    %v89 = vmul.f32 %v32, %v62
    %v90 = vmul.f32 %v32, %v66
    %v91 = vand.u32 2147483647, %v75
    %vm92 = vcmp.le.f32.partialorder %v91, 0.7853982
    %vm93 = vcmp.lt.s32.totalorder %v75, 0
    %v94 = vand.u32 %v75, 2139095040
    %v95 = vshrl.u32 %v94, 23
    %v96 = vsub.s32 %v95, 127
    %v97 = vand.u32 2147483647, %v75
    %v98 = vand.u32 %v97, 8388607
    %v99 = vor.u32 %v98, 8388608
    %v100 = vsub.s32 0, %v99
    %v101 = vadd.s32 %v96, 1
    %vm102 = vcmp.gt.s32.totalorder %v101, 0
    %v103 = vsel %vm102, %v101, 0
    %v104 = vshrl.u32 %v103, 5
    %v105 = vand.u32 %v103, 31
    %v106 = vsub.s32 32, %v105
    %v107 = vshrl.u32 683565275, %v106
    %v108 = vshll.u32 683565275, %v105
    %v109 = vshrl.u32 2475754826, %v106
    %v110 = vor.u32 %v108, %v109
    %v111 = vshll.u32 2475754826, %v105
    %v112 = vshrl.u32 2131351028, %v106
    %v113 = vor.u32 %v111, %v112
    %v114 = vshll.u32 2131351028, %v105
    %v115 = vshrl.u32 2102212464, %v106
    %v116 = vor.u32 %v114, %v115
    %v117 = vshll.u32 2102212464, %v105
    %v118 = vshrl.u32 920167782, %v106
    %v119 = vor.u32 %v117, %v118
    %v120 = vshll.u32 920167782, %v105
    %v121 = vshrl.u32 1326507024, %v106
    %v122 = vor.u32 %v120, %v121
    %vm123 = vcmp.lt.s32.totalorder %v104, 1
    %vm124 = vcmp.lt.s32.totalorder %v104, 2
    %vm125 = vcmp.lt.s32.totalorder %v104, 3
    %vm126 = vcmp.lt.s32.totalorder %v104, 4
    %v127 = vsel %vm123, %v107, %v110
    %v128 = vsel %vm126, %v116, 2102212464
    %v129 = vsel %vm125, %v113, %v128
    %v130 = vsel %vm124, %v127, %v129
    %v131 = vsel %vm123, %v110, %v113
    %v132 = vsel %vm126, %v119, 920167782
    %v133 = vsel %vm125, %v116, %v132
    %v134 = vsel %vm124, %v131, %v133
    %v135 = vsel %vm123, %v113, %v116
    %v136 = vsel %vm126, %v122, 1326507024
    %v137 = vsel %vm125, %v119, %v136
    %v138 = vsel %vm124, %v135, %v137
    %v139 = vshll.u32 %v99, 8
    %v140 = vmul.u32.u64.compose %v139, %v138
    %v141 = vextract.low.u32 %v140
    %v142 = vextract.high.u32 %v140
    %v143 = vmul.u32.u64.compose %v139, %v134
    %v144 = vextract.low.u32 %v143
    %v145 = vextract.high.u32 %v143
    %v146 = vmul.u32 %v139, %v130
    %v147 = vadd.s32 %v142, %v144
    %vm148 = vc.u32 %v142, %v144
    %v149 = vadd.s32 %v145, 1
    %v150 = vsel %vm148, %v149, %v145
    %v151 = vadd.s32 %v146, %v150
    %v152 = vadd.s32 %v151, 536870912
    %v153 = vshrl.u32 %v152, 30
    %v154 = vshll.u32 %v153, 30
    %v155 = vsub.s32 %v151, %v154
    %vm156 = vcmp.lt.s32.totalorder %v155, 0
    %v157 = vsub.s32 0, %v155
    %v158 = vsel %vm156, %v157, %v155
    %v159 = vclz %v158
    %v160 = vsub.s32 %v159, 2
    %vm161 = vcmp.gt.s32.totalorder 0, %v160
    %v162 = vsel %vm161, 0, %v160
    %v163 = vsub.s32 32, %v162
    %v164 = vshll.u32 %v155, %v162
    %v165 = vshrl.u32 %v147, %v163
    %v166 = vor.u32 %v164, %v165
    %v167 = vsub.s32 4294967266, %v162
    %v168 = vadd.s32 %v167, 127
    %v169 = vshll.u32 %v168, 23
    %v170 = vor.u32 4788187, %v169
    %v171 = vand.u32 2147483647, %v170
    %v173 = vcvt.s32.f32 %v166
    %v174 = vmul.f32 %v173, %v171
    %v175 = vxor.u32 %v174, 2147483648
    %v176 = vsel %vm93, %v175, %v174
    %v177 = vsub.s32 4, %v153
    %v178 = vsel %vm93, %v177, %v153
    %v179 = vsel %vm92, %v75, %v176
    %v180 = vsel %vm92, 0, %v178
    %v181 = vcosq.f32.pop %v179
    %v182 = vsinq.f32.pop %v179
    %vm183 = vweird.f32 %v75
    %v184 = vadd.s32 %v180, 3
    %v185 = vand.u32 %v184, 3
    %vm186 = vcmp.lt.s32.totalorder %v185, 2
    %vm187 = vcmp.eq.s32.totalorder %v185, 0
    %v188 = vxor.u32 %v182, 2147483648
    %v189 = vsel %vm187, %v181, %v188
    %vm190 = vcmp.eq.s32.totalorder %v185, 2
    %v191 = vxor.u32 %v181, 2147483648
    %v192 = vsel %vm190, %v191, %v182
    %v193 = vsel %vm186, %v189, %v192
    %v194 = vsel %vm183, nan, %v193
    %v195 = vand.u32 2147483647, %v76
    %vm196 = vcmp.le.f32.partialorder %v195, 0.7853982
    %vm197 = vcmp.lt.s32.totalorder %v76, 0
    %v198 = vand.u32 %v76, 2139095040
    %v199 = vshrl.u32 %v198, 23
    %v200 = vsub.s32 %v199, 127
    %v201 = vand.u32 2147483647, %v76
    %v202 = vand.u32 %v201, 8388607
    %v203 = vor.u32 %v202, 8388608
    %v204 = vsub.s32 0, %v203
    %v205 = vadd.s32 %v200, 1
    %vm206 = vcmp.gt.s32.totalorder %v205, 0
    %v207 = vsel %vm206, %v205, 0
    %v208 = vshrl.u32 %v207, 5
    %v209 = vand.u32 %v207, 31
    %v210 = vsub.s32 32, %v209
    %v211 = vshrl.u32 683565275, %v210
    %v212 = vshll.u32 683565275, %v209
    %v213 = vshrl.u32 2475754826, %v210
    %v214 = vor.u32 %v212, %v213
    %v215 = vshll.u32 2475754826, %v209
    %v216 = vshrl.u32 2131351028, %v210
    %v217 = vor.u32 %v215, %v216
    %v218 = vshll.u32 2131351028, %v209
    %v219 = vshrl.u32 2102212464, %v210
    %v220 = vor.u32 %v218, %v219
    %v221 = vshll.u32 2102212464, %v209
    %v222 = vshrl.u32 920167782, %v210
    %v223 = vor.u32 %v221, %v222
    %v224 = vshll.u32 920167782, %v209
    %v225 = vshrl.u32 1326507024, %v210
    %v226 = vor.u32 %v224, %v225
    %vm227 = vcmp.lt.s32.totalorder %v208, 1
    %vm228 = vcmp.lt.s32.totalorder %v208, 2
    %vm229 = vcmp.lt.s32.totalorder %v208, 3
    %vm230 = vcmp.lt.s32.totalorder %v208, 4
    %v231 = vsel %vm227, %v211, %v214
    %v232 = vsel %vm230, %v220, 2102212464
    %v233 = vsel %vm229, %v217, %v232
    %v234 = vsel %vm228, %v231, %v233
    %v235 = vsel %vm227, %v214, %v217
    %v236 = vsel %vm230, %v223, 920167782
    %v237 = vsel %vm229, %v220, %v236
    %v238 = vsel %vm228, %v235, %v237
    %v239 = vsel %vm227, %v217, %v220
    %v240 = vsel %vm230, %v226, 1326507024
    %v241 = vsel %vm229, %v223, %v240
    %v242 = vsel %vm228, %v239, %v241
    %v243 = vshll.u32 %v203, 8
    %v244 = vmul.u32.u64.compose %v243, %v242
    %v245 = vextract.low.u32 %v244
    %v246 = vextract.high.u32 %v244
    %v247 = vmul.u32.u64.compose %v243, %v238
    %v248 = vextract.low.u32 %v247
    %v249 = vextract.high.u32 %v247
    %v250 = vmul.u32 %v243, %v234
    %v251 = vadd.s32 %v246, %v248
    %vm252 = vc.u32 %v246, %v248
    %v253 = vadd.s32 %v249, 1
    %v254 = vsel %vm252, %v253, %v249
    %v255 = vadd.s32 %v250, %v254
    %v256 = vadd.s32 %v255, 536870912
    %v257 = vshrl.u32 %v256, 30
    %v258 = vshll.u32 %v257, 30
    %v259 = vsub.s32 %v255, %v258
    %vm260 = vcmp.lt.s32.totalorder %v259, 0
    %v261 = vsub.s32 0, %v259
    %v262 = vsel %vm260, %v261, %v259
    %v263 = vclz %v262
    %v264 = vsub.s32 %v263, 2
    %vm265 = vcmp.gt.s32.totalorder 0, %v264
    %v266 = vsel %vm265, 0, %v264
    %v267 = vsub.s32 32, %v266
    %v268 = vshll.u32 %v259, %v266
    %v269 = vshrl.u32 %v251, %v267
    %v270 = vor.u32 %v268, %v269
    %v271 = vsub.s32 4294967266, %v266
    %v272 = vadd.s32 %v271, 127
    %v273 = vshll.u32 %v272, 23
    %v274 = vor.u32 4788187, %v273
    %v275 = vand.u32 2147483647, %v274
    %v277 = vcvt.s32.f32 %v270
    %v278 = vmul.f32 %v277, %v275
    %v279 = vxor.u32 %v278, 2147483648
    %v280 = vsel %vm197, %v279, %v278
    %v281 = vsub.s32 4, %v257
    %v282 = vsel %vm197, %v281, %v257
    %v283 = vsel %vm196, %v76, %v280
    %v284 = vsel %vm196, 0, %v282
    %v285 = vcosq.f32.pop %v283
    %v286 = vsinq.f32.pop %v283
    %vm287 = vweird.f32 %v76
    %v288 = vadd.s32 %v284, 3
    %v289 = vand.u32 %v288, 3
    %vm290 = vcmp.lt.s32.totalorder %v289, 2
    %vm291 = vcmp.eq.s32.totalorder %v289, 0
    %v292 = vxor.u32 %v286, 2147483648
    %v293 = vsel %vm291, %v285, %v292
    %vm294 = vcmp.eq.s32.totalorder %v289, 2
    %v295 = vxor.u32 %v285, 2147483648
    %v296 = vsel %vm294, %v295, %v286
    %v297 = vsel %vm290, %v293, %v296
    %v298 = vsel %vm287, nan, %v297
    %v299 = vand.u32 2147483647, %v77
    %vm300 = vcmp.le.f32.partialorder %v299, 0.7853982
    %vm301 = vcmp.lt.s32.totalorder %v77, 0
    %v302 = vand.u32 %v77, 2139095040
    %v303 = vshrl.u32 %v302, 23
    %v304 = vsub.s32 %v303, 127
    %v305 = vand.u32 2147483647, %v77
    %v306 = vand.u32 %v305, 8388607
    %v307 = vor.u32 %v306, 8388608
    %v308 = vsub.s32 0, %v307
    %v309 = vadd.s32 %v304, 1
    %vm310 = vcmp.gt.s32.totalorder %v309, 0
    %v311 = vsel %vm310, %v309, 0
    %v312 = vshrl.u32 %v311, 5
    %v313 = vand.u32 %v311, 31
    %v314 = vsub.s32 32, %v313
    %v315 = vshrl.u32 683565275, %v314
    %v316 = vshll.u32 683565275, %v313
    %v317 = vshrl.u32 2475754826, %v314
    %v318 = vor.u32 %v316, %v317
    %v319 = vshll.u32 2475754826, %v313
    %v320 = vshrl.u32 2131351028, %v314
    %v321 = vor.u32 %v319, %v320
    %v322 = vshll.u32 2131351028, %v313
    %v323 = vshrl.u32 2102212464, %v314
    %v324 = vor.u32 %v322, %v323
    %v325 = vshll.u32 2102212464, %v313
    %v326 = vshrl.u32 920167782, %v314
    %v327 = vor.u32 %v325, %v326
    %v328 = vshll.u32 920167782, %v313
    %v329 = vshrl.u32 1326507024, %v314
    %v330 = vor.u32 %v328, %v329
    %vm331 = vcmp.lt.s32.totalorder %v312, 1
    %vm332 = vcmp.lt.s32.totalorder %v312, 2
    %vm333 = vcmp.lt.s32.totalorder %v312, 3
    %vm334 = vcmp.lt.s32.totalorder %v312, 4
    %v335 = vsel %vm331, %v315, %v318
    %v336 = vsel %vm334, %v324, 2102212464
    %v337 = vsel %vm333, %v321, %v336
    %v338 = vsel %vm332, %v335, %v337
    %v339 = vsel %vm331, %v318, %v321
    %v340 = vsel %vm334, %v327, 920167782
    %v341 = vsel %vm333, %v324, %v340
    %v342 = vsel %vm332, %v339, %v341
    %v343 = vsel %vm331, %v321, %v324
    %v344 = vsel %vm334, %v330, 1326507024
    %v345 = vsel %vm333, %v327, %v344
    %v346 = vsel %vm332, %v343, %v345
    %v347 = vshll.u32 %v307, 8
    %v348 = vmul.u32.u64.compose %v347, %v346
    %v349 = vextract.low.u32 %v348
    %v350 = vextract.high.u32 %v348
    %v351 = vmul.u32.u64.compose %v347, %v342
    %v352 = vextract.low.u32 %v351
    %v353 = vextract.high.u32 %v351
    %v354 = vmul.u32 %v347, %v338
    %v355 = vadd.s32 %v350, %v352
    %vm356 = vc.u32 %v350, %v352
    %v357 = vadd.s32 %v353, 1
    %v358 = vsel %vm356, %v357, %v353
    %v359 = vadd.s32 %v354, %v358
    %v360 = vadd.s32 %v359, 536870912
    %v361 = vshrl.u32 %v360, 30
    %v362 = vshll.u32 %v361, 30
    %v363 = vsub.s32 %v359, %v362
    %vm364 = vcmp.lt.s32.totalorder %v363, 0
    %v365 = vsub.s32 0, %v363
    %v366 = vsel %vm364, %v365, %v363
    %v367 = vclz %v366
    %v368 = vsub.s32 %v367, 2
    %vm369 = vcmp.gt.s32.totalorder 0, %v368
    %v370 = vsel %vm369, 0, %v368
    %v371 = vsub.s32 32, %v370
    %v372 = vshll.u32 %v363, %v370
    %v373 = vshrl.u32 %v355, %v371
    %v374 = vor.u32 %v372, %v373
    %v375 = vsub.s32 4294967266, %v370
    %v376 = vadd.s32 %v375, 127
    %v377 = vshll.u32 %v376, 23
    %v378 = vor.u32 4788187, %v377
    %v379 = vand.u32 2147483647, %v378
    %v381 = vcvt.s32.f32 %v374
    %v382 = vmul.f32 %v381, %v379
    %v383 = vxor.u32 %v382, 2147483648
    %v384 = vsel %vm301, %v383, %v382
    %v385 = vsub.s32 4, %v361
    %v386 = vsel %vm301, %v385, %v361
    %v387 = vsel %vm300, %v77, %v384
    %v388 = vsel %vm300, 0, %v386
    %v389 = vcosq.f32.pop %v387
    %v390 = vsinq.f32.pop %v387
    %vm391 = vweird.f32 %v77
    %v392 = vadd.s32 %v388, 3
    %v393 = vand.u32 %v392, 3
    %vm394 = vcmp.lt.s32.totalorder %v393, 2
    %vm395 = vcmp.eq.s32.totalorder %v393, 0
    %v396 = vxor.u32 %v390, 2147483648
    %v397 = vsel %vm395, %v389, %v396
    %vm398 = vcmp.eq.s32.totalorder %v393, 2
    %v399 = vxor.u32 %v389, 2147483648
    %v400 = vsel %vm398, %v399, %v390
    %v401 = vsel %vm394, %v397, %v400
    %v402 = vsel %vm391, nan, %v401
    %v403 = vand.u32 2147483647, %v78
    %vm404 = vcmp.le.f32.partialorder %v403, 0.7853982
    %vm405 = vcmp.lt.s32.totalorder %v78, 0
    %v406 = vand.u32 %v78, 2139095040
    %v407 = vshrl.u32 %v406, 23
    %v408 = vsub.s32 %v407, 127
    %v409 = vand.u32 2147483647, %v78
    %v410 = vand.u32 %v409, 8388607
    %v411 = vor.u32 %v410, 8388608
    %v412 = vsub.s32 0, %v411
    %v413 = vadd.s32 %v408, 1
    %vm414 = vcmp.gt.s32.totalorder %v413, 0
    %v415 = vsel %vm414, %v413, 0
    %v416 = vshrl.u32 %v415, 5
    %v417 = vand.u32 %v415, 31
    %v418 = vsub.s32 32, %v417
    %v419 = vshrl.u32 683565275, %v418
    %v420 = vshll.u32 683565275, %v417
    %v421 = vshrl.u32 2475754826, %v418
    %v422 = vor.u32 %v420, %v421
    %v423 = vshll.u32 2475754826, %v417
    %v424 = vshrl.u32 2131351028, %v418
    %v425 = vor.u32 %v423, %v424
    %v426 = vshll.u32 2131351028, %v417
    %v427 = vshrl.u32 2102212464, %v418
    %v428 = vor.u32 %v426, %v427
    %v429 = vshll.u32 2102212464, %v417
    %v430 = vshrl.u32 920167782, %v418
    %v431 = vor.u32 %v429, %v430
    %v432 = vshll.u32 920167782, %v417
    %v433 = vshrl.u32 1326507024, %v418
    %v434 = vor.u32 %v432, %v433
    %vm435 = vcmp.lt.s32.totalorder %v416, 1
    %vm436 = vcmp.lt.s32.totalorder %v416, 2
    %vm437 = vcmp.lt.s32.totalorder %v416, 3
    %vm438 = vcmp.lt.s32.totalorder %v416, 4
    %v439 = vsel %vm435, %v419, %v422
    %v440 = vsel %vm438, %v428, 2102212464
    %v441 = vsel %vm437, %v425, %v440
    %v442 = vsel %vm436, %v439, %v441
    %v443 = vsel %vm435, %v422, %v425
    %v444 = vsel %vm438, %v431, 920167782
    %v445 = vsel %vm437, %v428, %v444
    %v446 = vsel %vm436, %v443, %v445
    %v447 = vsel %vm435, %v425, %v428
    %v448 = vsel %vm438, %v434, 1326507024
    %v449 = vsel %vm437, %v431, %v448
    %v450 = vsel %vm436, %v447, %v449
    %v451 = vshll.u32 %v411, 8
    %v452 = vmul.u32.u64.compose %v451, %v450
    %v453 = vextract.low.u32 %v452
    %v454 = vextract.high.u32 %v452
    %v455 = vmul.u32.u64.compose %v451, %v446
    %v456 = vextract.low.u32 %v455
    %v457 = vextract.high.u32 %v455
    %v458 = vmul.u32 %v451, %v442
    %v459 = vadd.s32 %v454, %v456
    %vm460 = vc.u32 %v454, %v456
    %v461 = vadd.s32 %v457, 1
    %v462 = vsel %vm460, %v461, %v457
    %v463 = vadd.s32 %v458, %v462
    %v464 = vadd.s32 %v463, 536870912
    %v465 = vshrl.u32 %v464, 30
    %v466 = vshll.u32 %v465, 30
    %v467 = vsub.s32 %v463, %v466
    %vm468 = vcmp.lt.s32.totalorder %v467, 0
    %v469 = vsub.s32 0, %v467
    %v470 = vsel %vm468, %v469, %v467
    %v471 = vclz %v470
    %v472 = vsub.s32 %v471, 2
    %vm473 = vcmp.gt.s32.totalorder 0, %v472
    %v474 = vsel %vm473, 0, %v472
    %v475 = vsub.s32 32, %v474
    %v476 = vshll.u32 %v467, %v474
    %v477 = vshrl.u32 %v459, %v475
    %v478 = vor.u32 %v476, %v477
    %v479 = vsub.s32 4294967266, %v474
    %v480 = vadd.s32 %v479, 127
    %v481 = vshll.u32 %v480, 23
    %v482 = vor.u32 4788187, %v481
    %v483 = vand.u32 2147483647, %v482
    %v485 = vcvt.s32.f32 %v478
    %v486 = vmul.f32 %v485, %v483
    %v487 = vxor.u32 %v486, 2147483648
    %v488 = vsel %vm405, %v487, %v486
    %v489 = vsub.s32 4, %v465
    %v490 = vsel %vm405, %v489, %v465
    %v491 = vsel %vm404, %v78, %v488
    %v492 = vsel %vm404, 0, %v490
    %v493 = vcosq.f32.pop %v491
    %v494 = vsinq.f32.pop %v491
    %vm495 = vweird.f32 %v78
    %v496 = vadd.s32 %v492, 3
    %v497 = vand.u32 %v496, 3
    %vm498 = vcmp.lt.s32.totalorder %v497, 2
    %vm499 = vcmp.eq.s32.totalorder %v497, 0
    %v500 = vxor.u32 %v494, 2147483648
    %v501 = vsel %vm499, %v493, %v500
    %vm502 = vcmp.eq.s32.totalorder %v497, 2
    %v503 = vxor.u32 %v493, 2147483648
    %v504 = vsel %vm502, %v503, %v494
    %v505 = vsel %vm498, %v501, %v504
    %v506 = vsel %vm495, nan, %v505
    %v507 = vand.u32 2147483647, %v79
    %vm508 = vcmp.le.f32.partialorder %v507, 0.7853982
    %vm509 = vcmp.lt.s32.totalorder %v79, 0
    %v510 = vand.u32 %v79, 2139095040
    %v511 = vshrl.u32 %v510, 23
    %v512 = vsub.s32 %v511, 127
    %v513 = vand.u32 2147483647, %v79
    %v514 = vand.u32 %v513, 8388607
    %v515 = vor.u32 %v514, 8388608
    %v516 = vsub.s32 0, %v515
    %v517 = vadd.s32 %v512, 1
    %vm518 = vcmp.gt.s32.totalorder %v517, 0
    %v519 = vsel %vm518, %v517, 0
    %v520 = vshrl.u32 %v519, 5
    %v521 = vand.u32 %v519, 31
    %v522 = vsub.s32 32, %v521
    %v523 = vshrl.u32 683565275, %v522
    %v524 = vshll.u32 683565275, %v521
    %v525 = vshrl.u32 2475754826, %v522
    %v526 = vor.u32 %v524, %v525
    %v527 = vshll.u32 2475754826, %v521
    %v528 = vshrl.u32 2131351028, %v522
    %v529 = vor.u32 %v527, %v528
    %v530 = vshll.u32 2131351028, %v521
    %v531 = vshrl.u32 2102212464, %v522
    %v532 = vor.u32 %v530, %v531
    %v533 = vshll.u32 2102212464, %v521
    %v534 = vshrl.u32 920167782, %v522
    %v535 = vor.u32 %v533, %v534
    %v536 = vshll.u32 920167782, %v521
    %v537 = vshrl.u32 1326507024, %v522
    %v538 = vor.u32 %v536, %v537
    %vm539 = vcmp.lt.s32.totalorder %v520, 1
    %vm540 = vcmp.lt.s32.totalorder %v520, 2
    %vm541 = vcmp.lt.s32.totalorder %v520, 3
    %vm542 = vcmp.lt.s32.totalorder %v520, 4
    %v543 = vsel %vm539, %v523, %v526
    %v544 = vsel %vm542, %v532, 2102212464
    %v545 = vsel %vm541, %v529, %v544
    %v546 = vsel %vm540, %v543, %v545
    %v547 = vsel %vm539, %v526, %v529
    %v548 = vsel %vm542, %v535, 920167782
    %v549 = vsel %vm541, %v532, %v548
    %v550 = vsel %vm540, %v547, %v549
    %v551 = vsel %vm539, %v529, %v532
    %v552 = vsel %vm542, %v538, 1326507024
    %v553 = vsel %vm541, %v535, %v552
    %v554 = vsel %vm540, %v551, %v553
    %v555 = vshll.u32 %v515, 8
    %v556 = vmul.u32.u64.compose %v555, %v554
    %v557 = vextract.low.u32 %v556
    %v558 = vextract.high.u32 %v556
    %v559 = vmul.u32.u64.compose %v555, %v550
    %v560 = vextract.low.u32 %v559
    %v561 = vextract.high.u32 %v559
    %v562 = vmul.u32 %v555, %v546
    %v563 = vadd.s32 %v558, %v560
    %vm564 = vc.u32 %v558, %v560
    %v565 = vadd.s32 %v561, 1
    %v566 = vsel %vm564, %v565, %v561
    %v567 = vadd.s32 %v562, %v566
    %v568 = vadd.s32 %v567, 536870912
    %v569 = vshrl.u32 %v568, 30
    %v570 = vshll.u32 %v569, 30
    %v571 = vsub.s32 %v567, %v570
    %vm572 = vcmp.lt.s32.totalorder %v571, 0
    %v573 = vsub.s32 0, %v571
    %v574 = vsel %vm572, %v573, %v571
    %v575 = vclz %v574
    %v576 = vsub.s32 %v575, 2
    %vm577 = vcmp.gt.s32.totalorder 0, %v576
    %v578 = vsel %vm577, 0, %v576
    %v579 = vsub.s32 32, %v578
    %v580 = vshll.u32 %v571, %v578
    %v581 = vshrl.u32 %v563, %v579
    %v582 = vor.u32 %v580, %v581
    %v583 = vsub.s32 4294967266, %v578
    %v584 = vadd.s32 %v583, 127
    %v585 = vshll.u32 %v584, 23
    %v586 = vor.u32 4788187, %v585
    %v587 = vand.u32 2147483647, %v586
    %v589 = vcvt.s32.f32 %v582
    %v590 = vmul.f32 %v589, %v587
    %v591 = vxor.u32 %v590, 2147483648
    %v592 = vsel %vm509, %v591, %v590
    %v593 = vsub.s32 4, %v569
    %v594 = vsel %vm509, %v593, %v569
    %v595 = vsel %vm508, %v79, %v592
    %v596 = vsel %vm508, 0, %v594
    %v597 = vcosq.f32.pop %v595
    %v598 = vsinq.f32.pop %v595
    %vm599 = vweird.f32 %v79
    %v600 = vadd.s32 %v596, 3
    %v601 = vand.u32 %v600, 3
    %vm602 = vcmp.lt.s32.totalorder %v601, 2
    %vm603 = vcmp.eq.s32.totalorder %v601, 0
    %v604 = vxor.u32 %v598, 2147483648
    %v605 = vsel %vm603, %v597, %v604
    %vm606 = vcmp.eq.s32.totalorder %v601, 2
    %v607 = vxor.u32 %v597, 2147483648
    %v608 = vsel %vm606, %v607, %v598
    %v609 = vsel %vm602, %v605, %v608
    %v610 = vsel %vm599, nan, %v609
    %v611 = vand.u32 2147483647, %v80
    %vm612 = vcmp.le.f32.partialorder %v611, 0.7853982
    %vm613 = vcmp.lt.s32.totalorder %v80, 0
    %v614 = vand.u32 %v80, 2139095040
    %v615 = vshrl.u32 %v614, 23
    %v616 = vsub.s32 %v615, 127
    %v617 = vand.u32 2147483647, %v80
    %v618 = vand.u32 %v617, 8388607
    %v619 = vor.u32 %v618, 8388608
    %v620 = vsub.s32 0, %v619
    %v621 = vadd.s32 %v616, 1
    %vm622 = vcmp.gt.s32.totalorder %v621, 0
    %v623 = vsel %vm622, %v621, 0
    %v624 = vshrl.u32 %v623, 5
    %v625 = vand.u32 %v623, 31
    %v626 = vsub.s32 32, %v625
    %v627 = vshrl.u32 683565275, %v626
    %v628 = vshll.u32 683565275, %v625
    %v629 = vshrl.u32 2475754826, %v626
    %v630 = vor.u32 %v628, %v629
    %v631 = vshll.u32 2475754826, %v625
    %v632 = vshrl.u32 2131351028, %v626
    %v633 = vor.u32 %v631, %v632
    %v634 = vshll.u32 2131351028, %v625
    %v635 = vshrl.u32 2102212464, %v626
    %v636 = vor.u32 %v634, %v635
    %v637 = vshll.u32 2102212464, %v625
    %v638 = vshrl.u32 920167782, %v626
    %v639 = vor.u32 %v637, %v638
    %v640 = vshll.u32 920167782, %v625
    %v641 = vshrl.u32 1326507024, %v626
    %v642 = vor.u32 %v640, %v641
    %vm643 = vcmp.lt.s32.totalorder %v624, 1
    %vm644 = vcmp.lt.s32.totalorder %v624, 2
    %vm645 = vcmp.lt.s32.totalorder %v624, 3
    %vm646 = vcmp.lt.s32.totalorder %v624, 4
    %v647 = vsel %vm643, %v627, %v630
    %v648 = vsel %vm646, %v636, 2102212464
    %v649 = vsel %vm645, %v633, %v648
    %v650 = vsel %vm644, %v647, %v649
    %v651 = vsel %vm643, %v630, %v633
    %v652 = vsel %vm646, %v639, 920167782
    %v653 = vsel %vm645, %v636, %v652
    %v654 = vsel %vm644, %v651, %v653
    %v655 = vsel %vm643, %v633, %v636
    %v656 = vsel %vm646, %v642, 1326507024
    %v657 = vsel %vm645, %v639, %v656
    %v658 = vsel %vm644, %v655, %v657
    %v659 = vshll.u32 %v619, 8
    %v660 = vmul.u32.u64.compose %v659, %v658
    %v661 = vextract.low.u32 %v660
    %v662 = vextract.high.u32 %v660
    %v663 = vmul.u32.u64.compose %v659, %v654
    %v664 = vextract.low.u32 %v663
    %v665 = vextract.high.u32 %v663
    %v666 = vmul.u32 %v659, %v650
    %v667 = vadd.s32 %v662, %v664
    %vm668 = vc.u32 %v662, %v664
    %v669 = vadd.s32 %v665, 1
    %v670 = vsel %vm668, %v669, %v665
    %v671 = vadd.s32 %v666, %v670
    %v672 = vadd.s32 %v671, 536870912
    %v673 = vshrl.u32 %v672, 30
    %v674 = vshll.u32 %v673, 30
    %v675 = vsub.s32 %v671, %v674
    %vm676 = vcmp.lt.s32.totalorder %v675, 0
    %v677 = vsub.s32 0, %v675
    %v678 = vsel %vm676, %v677, %v675
    %v679 = vclz %v678
    %v680 = vsub.s32 %v679, 2
    %vm681 = vcmp.gt.s32.totalorder 0, %v680
    %v682 = vsel %vm681, 0, %v680
    %v683 = vsub.s32 32, %v682
    %v684 = vshll.u32 %v675, %v682
    %v685 = vshrl.u32 %v667, %v683
    %v686 = vor.u32 %v684, %v685
    %v687 = vsub.s32 4294967266, %v682
    %v688 = vadd.s32 %v687, 127
    %v689 = vshll.u32 %v688, 23
    %v690 = vor.u32 4788187, %v689
    %v691 = vand.u32 2147483647, %v690
    %v693 = vcvt.s32.f32 %v686
    %v694 = vmul.f32 %v693, %v691
    %v695 = vxor.u32 %v694, 2147483648
    %v696 = vsel %vm613, %v695, %v694
    %v697 = vsub.s32 4, %v673
    %v698 = vsel %vm613, %v697, %v673
    %v699 = vsel %vm612, %v80, %v696
    %v700 = vsel %vm612, 0, %v698
    %v701 = vcosq.f32.pop %v699
    %v702 = vsinq.f32.pop %v699
    %vm703 = vweird.f32 %v80
    %v704 = vadd.s32 %v700, 3
    %v705 = vand.u32 %v704, 3
    %vm706 = vcmp.lt.s32.totalorder %v705, 2
    %vm707 = vcmp.eq.s32.totalorder %v705, 0
    %v708 = vxor.u32 %v702, 2147483648
    %v709 = vsel %vm707, %v701, %v708
    %vm710 = vcmp.eq.s32.totalorder %v705, 2
    %v711 = vxor.u32 %v701, 2147483648
    %v712 = vsel %vm710, %v711, %v702
    %v713 = vsel %vm706, %v709, %v712
    %v714 = vsel %vm703, nan, %v713
    %v715 = vand.u32 2147483647, %v81
    %vm716 = vcmp.le.f32.partialorder %v715, 0.7853982
    %vm717 = vcmp.lt.s32.totalorder %v81, 0
    %v718 = vand.u32 %v81, 2139095040
    %v719 = vshrl.u32 %v718, 23
    %v720 = vsub.s32 %v719, 127
    %v721 = vand.u32 2147483647, %v81
    %v722 = vand.u32 %v721, 8388607
    %v723 = vor.u32 %v722, 8388608
    %v724 = vsub.s32 0, %v723
    %v725 = vadd.s32 %v720, 1
    %vm726 = vcmp.gt.s32.totalorder %v725, 0
    %v727 = vsel %vm726, %v725, 0
    %v728 = vshrl.u32 %v727, 5
    %v729 = vand.u32 %v727, 31
    %v730 = vsub.s32 32, %v729
    %v731 = vshrl.u32 683565275, %v730
    %v732 = vshll.u32 683565275, %v729
    %v733 = vshrl.u32 2475754826, %v730
    %v734 = vor.u32 %v732, %v733
    %v735 = vshll.u32 2475754826, %v729
    %v736 = vshrl.u32 2131351028, %v730
    %v737 = vor.u32 %v735, %v736
    %v738 = vshll.u32 2131351028, %v729
    %v739 = vshrl.u32 2102212464, %v730
    %v740 = vor.u32 %v738, %v739
    %v741 = vshll.u32 2102212464, %v729
    %v742 = vshrl.u32 920167782, %v730
    %v743 = vor.u32 %v741, %v742
    %v744 = vshll.u32 920167782, %v729
    %v745 = vshrl.u32 1326507024, %v730
    %v746 = vor.u32 %v744, %v745
    %vm747 = vcmp.lt.s32.totalorder %v728, 1
    %vm748 = vcmp.lt.s32.totalorder %v728, 2
    %vm749 = vcmp.lt.s32.totalorder %v728, 3
    %vm750 = vcmp.lt.s32.totalorder %v728, 4
    %v751 = vsel %vm747, %v731, %v734
    %v752 = vsel %vm750, %v740, 2102212464
    %v753 = vsel %vm749, %v737, %v752
    %v754 = vsel %vm748, %v751, %v753
    %v755 = vsel %vm747, %v734, %v737
    %v756 = vsel %vm750, %v743, 920167782
    %v757 = vsel %vm749, %v740, %v756
    %v758 = vsel %vm748, %v755, %v757
    %v759 = vsel %vm747, %v737, %v740
    %v760 = vsel %vm750, %v746, 1326507024
    %v761 = vsel %vm749, %v743, %v760
    %v762 = vsel %vm748, %v759, %v761
    %v763 = vshll.u32 %v723, 8
    %v764 = vmul.u32.u64.compose %v763, %v762
    %v765 = vextract.low.u32 %v764
    %v766 = vextract.high.u32 %v764
    %v767 = vmul.u32.u64.compose %v763, %v758
    %v768 = vextract.low.u32 %v767
    %v769 = vextract.high.u32 %v767
    %v770 = vmul.u32 %v763, %v754
    %v771 = vadd.s32 %v766, %v768
    %vm772 = vc.u32 %v766, %v768
    %v773 = vadd.s32 %v769, 1
    %v774 = vsel %vm772, %v773, %v769
    %v775 = vadd.s32 %v770, %v774
    %v776 = vadd.s32 %v775, 536870912
    %v777 = vshrl.u32 %v776, 30
    %v778 = vshll.u32 %v777, 30
    %v779 = vsub.s32 %v775, %v778
    %vm780 = vcmp.lt.s32.totalorder %v779, 0
    %v781 = vsub.s32 0, %v779
    %v782 = vsel %vm780, %v781, %v779
    %v783 = vclz %v782
    %v784 = vsub.s32 %v783, 2
    %vm785 = vcmp.gt.s32.totalorder 0, %v784
    %v786 = vsel %vm785, 0, %v784
    %v787 = vsub.s32 32, %v786
    %v788 = vshll.u32 %v779, %v786
    %v789 = vshrl.u32 %v771, %v787
    %v790 = vor.u32 %v788, %v789
    %v791 = vsub.s32 4294967266, %v786
    %v792 = vadd.s32 %v791, 127
    %v793 = vshll.u32 %v792, 23
    %v794 = vor.u32 4788187, %v793
    %v795 = vand.u32 2147483647, %v794
    %v797 = vcvt.s32.f32 %v790
    %v798 = vmul.f32 %v797, %v795
    %v799 = vxor.u32 %v798, 2147483648
    %v800 = vsel %vm717, %v799, %v798
    %v801 = vsub.s32 4, %v777
    %v802 = vsel %vm717, %v801, %v777
    %v803 = vsel %vm716, %v81, %v800
    %v804 = vsel %vm716, 0, %v802
    %v805 = vcosq.f32.pop %v803
    %v806 = vsinq.f32.pop %v803
    %vm807 = vweird.f32 %v81
    %v808 = vadd.s32 %v804, 3
    %v809 = vand.u32 %v808, 3
    %vm810 = vcmp.lt.s32.totalorder %v809, 2
    %vm811 = vcmp.eq.s32.totalorder %v809, 0
    %v812 = vxor.u32 %v806, 2147483648
    %v813 = vsel %vm811, %v805, %v812
    %vm814 = vcmp.eq.s32.totalorder %v809, 2
    %v815 = vxor.u32 %v805, 2147483648
    %v816 = vsel %vm814, %v815, %v806
    %v817 = vsel %vm810, %v813, %v816
    %v818 = vsel %vm807, nan, %v817
    %v819 = vand.u32 2147483647, %v82
    %vm820 = vcmp.le.f32.partialorder %v819, 0.7853982
    %vm821 = vcmp.lt.s32.totalorder %v82, 0
    %v822 = vand.u32 %v82, 2139095040
    %v823 = vshrl.u32 %v822, 23
    %v824 = vsub.s32 %v823, 127
    %v825 = vand.u32 2147483647, %v82
    %v826 = vand.u32 %v825, 8388607
    %v827 = vor.u32 %v826, 8388608
    %v828 = vsub.s32 0, %v827
    %v829 = vadd.s32 %v824, 1
    %vm830 = vcmp.gt.s32.totalorder %v829, 0
    %v831 = vsel %vm830, %v829, 0
    %v832 = vshrl.u32 %v831, 5
    %v833 = vand.u32 %v831, 31
    %v834 = vsub.s32 32, %v833
    %v835 = vshrl.u32 683565275, %v834
    %v836 = vshll.u32 683565275, %v833
    %v837 = vshrl.u32 2475754826, %v834
    %v838 = vor.u32 %v836, %v837
    %v839 = vshll.u32 2475754826, %v833
    %v840 = vshrl.u32 2131351028, %v834
    %v841 = vor.u32 %v839, %v840
    %v842 = vshll.u32 2131351028, %v833
    %v843 = vshrl.u32 2102212464, %v834
    %v844 = vor.u32 %v842, %v843
    %v845 = vshll.u32 2102212464, %v833
    %v846 = vshrl.u32 920167782, %v834
    %v847 = vor.u32 %v845, %v846
    %v848 = vshll.u32 920167782, %v833
    %v849 = vshrl.u32 1326507024, %v834
    %v850 = vor.u32 %v848, %v849
    %vm851 = vcmp.lt.s32.totalorder %v832, 1
    %vm852 = vcmp.lt.s32.totalorder %v832, 2
    %vm853 = vcmp.lt.s32.totalorder %v832, 3
    %vm854 = vcmp.lt.s32.totalorder %v832, 4
    %v855 = vsel %vm851, %v835, %v838
    %v856 = vsel %vm854, %v844, 2102212464
    %v857 = vsel %vm853, %v841, %v856
    %v858 = vsel %vm852, %v855, %v857
    %v859 = vsel %vm851, %v838, %v841
    %v860 = vsel %vm854, %v847, 920167782
    %v861 = vsel %vm853, %v844, %v860
    %v862 = vsel %vm852, %v859, %v861
    %v863 = vsel %vm851, %v841, %v844
    %v864 = vsel %vm854, %v850, 1326507024
    %v865 = vsel %vm853, %v847, %v864
    %v866 = vsel %vm852, %v863, %v865
    %v867 = vshll.u32 %v827, 8
    %v868 = vmul.u32.u64.compose %v867, %v866
    %v869 = vextract.low.u32 %v868
    %v870 = vextract.high.u32 %v868
    %v871 = vmul.u32.u64.compose %v867, %v862
    %v872 = vextract.low.u32 %v871
    %v873 = vextract.high.u32 %v871
    %v874 = vmul.u32 %v867, %v858
    %v875 = vadd.s32 %v870, %v872
    %vm876 = vc.u32 %v870, %v872
    %v877 = vadd.s32 %v873, 1
    %v878 = vsel %vm876, %v877, %v873
    %v879 = vadd.s32 %v874, %v878
    %v880 = vadd.s32 %v879, 536870912
    %v881 = vshrl.u32 %v880, 30
    %v882 = vshll.u32 %v881, 30
    %v883 = vsub.s32 %v879, %v882
    %vm884 = vcmp.lt.s32.totalorder %v883, 0
    %v885 = vsub.s32 0, %v883
    %v886 = vsel %vm884, %v885, %v883
    %v887 = vclz %v886
    %v888 = vsub.s32 %v887, 2
    %vm889 = vcmp.gt.s32.totalorder 0, %v888
    %v890 = vsel %vm889, 0, %v888
    %v891 = vsub.s32 32, %v890
    %v892 = vshll.u32 %v883, %v890
    %v893 = vshrl.u32 %v875, %v891
    %v894 = vor.u32 %v892, %v893
    %v895 = vsub.s32 4294967266, %v890
    %v896 = vadd.s32 %v895, 127
    %v897 = vshll.u32 %v896, 23
    %v898 = vor.u32 4788187, %v897
    %v899 = vand.u32 2147483647, %v898
    %v901 = vcvt.s32.f32 %v894
    %v902 = vmul.f32 %v901, %v899
    %v903 = vxor.u32 %v902, 2147483648
    %v904 = vsel %vm821, %v903, %v902
    %v905 = vsub.s32 4, %v881
    %v906 = vsel %vm821, %v905, %v881
    %v907 = vsel %vm820, %v82, %v904
    %v908 = vsel %vm820, 0, %v906
    %v909 = vcosq.f32.pop %v907
    %v910 = vsinq.f32.pop %v907
    %vm911 = vweird.f32 %v82
    %v912 = vadd.s32 %v908, 3
    %v913 = vand.u32 %v912, 3
    %vm914 = vcmp.lt.s32.totalorder %v913, 2
    %vm915 = vcmp.eq.s32.totalorder %v913, 0
    %v916 = vxor.u32 %v910, 2147483648
    %v917 = vsel %vm915, %v909, %v916
    %vm918 = vcmp.eq.s32.totalorder %v913, 2
    %v919 = vxor.u32 %v909, 2147483648
    %v920 = vsel %vm918, %v919, %v910
    %v921 = vsel %vm914, %v917, %v920
    %v922 = vsel %vm911, nan, %v921
    %v923 = vand.u32 2147483647, %v83
    %vm924 = vcmp.le.f32.partialorder %v923, 0.7853982
    %vm925 = vcmp.lt.s32.totalorder %v83, 0
    %v926 = vand.u32 %v83, 2139095040
    %v927 = vshrl.u32 %v926, 23
    %v928 = vsub.s32 %v927, 127
    %v929 = vand.u32 2147483647, %v83
    %v930 = vand.u32 %v929, 8388607
    %v931 = vor.u32 %v930, 8388608
    %v932 = vsub.s32 0, %v931
    %v933 = vadd.s32 %v928, 1
    %vm934 = vcmp.gt.s32.totalorder %v933, 0
    %v935 = vsel %vm934, %v933, 0
    %v936 = vshrl.u32 %v935, 5
    %v937 = vand.u32 %v935, 31
    %v938 = vsub.s32 32, %v937
    %v939 = vshrl.u32 683565275, %v938
    %v940 = vshll.u32 683565275, %v937
    %v941 = vshrl.u32 2475754826, %v938
    %v942 = vor.u32 %v940, %v941
    %v943 = vshll.u32 2475754826, %v937
    %v944 = vshrl.u32 2131351028, %v938
    %v945 = vor.u32 %v943, %v944
    %v946 = vshll.u32 2131351028, %v937
    %v947 = vshrl.u32 2102212464, %v938
    %v948 = vor.u32 %v946, %v947
    %v949 = vshll.u32 2102212464, %v937
    %v950 = vshrl.u32 920167782, %v938
    %v951 = vor.u32 %v949, %v950
    %v952 = vshll.u32 920167782, %v937
    %v953 = vshrl.u32 1326507024, %v938
    %v954 = vor.u32 %v952, %v953
    %vm955 = vcmp.lt.s32.totalorder %v936, 1
    %vm956 = vcmp.lt.s32.totalorder %v936, 2
    %vm957 = vcmp.lt.s32.totalorder %v936, 3
    %vm958 = vcmp.lt.s32.totalorder %v936, 4
    %v959 = vsel %vm955, %v939, %v942
    %v960 = vsel %vm958, %v948, 2102212464
    %v961 = vsel %vm957, %v945, %v960
    %v962 = vsel %vm956, %v959, %v961
    %v963 = vsel %vm955, %v942, %v945
    %v964 = vsel %vm958, %v951, 920167782
    %v965 = vsel %vm957, %v948, %v964
    %v966 = vsel %vm956, %v963, %v965
    %v967 = vsel %vm955, %v945, %v948
    %v968 = vsel %vm958, %v954, 1326507024
    %v969 = vsel %vm957, %v951, %v968
    %v970 = vsel %vm956, %v967, %v969
    %v971 = vshll.u32 %v931, 8
    %v972 = vmul.u32.u64.compose %v971, %v970
    %v973 = vextract.low.u32 %v972
    %v974 = vextract.high.u32 %v972
    %v975 = vmul.u32.u64.compose %v971, %v966
    %v976 = vextract.low.u32 %v975
    %v977 = vextract.high.u32 %v975
    %v978 = vmul.u32 %v971, %v962
    %v979 = vadd.s32 %v974, %v976
    %vm980 = vc.u32 %v974, %v976
    %v981 = vadd.s32 %v977, 1
    %v982 = vsel %vm980, %v981, %v977
    %v983 = vadd.s32 %v978, %v982
    %v984 = vadd.s32 %v983, 536870912
    %v985 = vshrl.u32 %v984, 30
    %v986 = vshll.u32 %v985, 30
    %v987 = vsub.s32 %v983, %v986
    %vm988 = vcmp.lt.s32.totalorder %v987, 0
    %v989 = vsub.s32 0, %v987
    %v990 = vsel %vm988, %v989, %v987
    %v991 = vclz %v990
    %v992 = vsub.s32 %v991, 2
    %vm993 = vcmp.gt.s32.totalorder 0, %v992
    %v994 = vsel %vm993, 0, %v992
    %v995 = vsub.s32 32, %v994
    %v996 = vshll.u32 %v987, %v994
    %v997 = vshrl.u32 %v979, %v995
    %v998 = vor.u32 %v996, %v997
    %v999 = vsub.s32 4294967266, %v994
    %v1000 = vadd.s32 %v999, 127
    %v1001 = vshll.u32 %v1000, 23
    %v1002 = vor.u32 4788187, %v1001
    %v1003 = vand.u32 2147483647, %v1002
    %v1005 = vcvt.s32.f32 %v998
    %v1006 = vmul.f32 %v1005, %v1003
    %v1007 = vxor.u32 %v1006, 2147483648
    %v1008 = vsel %vm925, %v1007, %v1006
    %v1009 = vsub.s32 4, %v985
    %v1010 = vsel %vm925, %v1009, %v985
    %v1011 = vsel %vm924, %v83, %v1008
    %v1012 = vsel %vm924, 0, %v1010
    %v1013 = vcosq.f32.pop %v1011
    %v1014 = vsinq.f32.pop %v1011
    %vm1015 = vweird.f32 %v83
    %v1016 = vadd.s32 %v1012, 3
    %v1017 = vand.u32 %v1016, 3
    %vm1018 = vcmp.lt.s32.totalorder %v1017, 2
    %vm1019 = vcmp.eq.s32.totalorder %v1017, 0
    %v1020 = vxor.u32 %v1014, 2147483648
    %v1021 = vsel %vm1019, %v1013, %v1020
    %vm1022 = vcmp.eq.s32.totalorder %v1017, 2
    %v1023 = vxor.u32 %v1013, 2147483648
    %v1024 = vsel %vm1022, %v1023, %v1014
    %v1025 = vsel %vm1018, %v1021, %v1024
    %v1026 = vsel %vm1015, nan, %v1025
    %v1027 = vand.u32 2147483647, %v84
    %vm1028 = vcmp.le.f32.partialorder %v1027, 0.7853982
    %vm1029 = vcmp.lt.s32.totalorder %v84, 0
    %v1030 = vand.u32 %v84, 2139095040
    %v1031 = vshrl.u32 %v1030, 23
    %v1032 = vsub.s32 %v1031, 127
    %v1033 = vand.u32 2147483647, %v84
    %v1034 = vand.u32 %v1033, 8388607
    %v1035 = vor.u32 %v1034, 8388608
    %v1036 = vsub.s32 0, %v1035
    %v1037 = vadd.s32 %v1032, 1
    %vm1038 = vcmp.gt.s32.totalorder %v1037, 0
    %v1039 = vsel %vm1038, %v1037, 0
    %v1040 = vshrl.u32 %v1039, 5
    %v1041 = vand.u32 %v1039, 31
    %v1042 = vsub.s32 32, %v1041
    %v1043 = vshrl.u32 683565275, %v1042
    %v1044 = vshll.u32 683565275, %v1041
    %v1045 = vshrl.u32 2475754826, %v1042
    %v1046 = vor.u32 %v1044, %v1045
    %v1047 = vshll.u32 2475754826, %v1041
    %v1048 = vshrl.u32 2131351028, %v1042
    %v1049 = vor.u32 %v1047, %v1048
    %v1050 = vshll.u32 2131351028, %v1041
    %v1051 = vshrl.u32 2102212464, %v1042
    %v1052 = vor.u32 %v1050, %v1051
    %v1053 = vshll.u32 2102212464, %v1041
    %v1054 = vshrl.u32 920167782, %v1042
    %v1055 = vor.u32 %v1053, %v1054
    %v1056 = vshll.u32 920167782, %v1041
    %v1057 = vshrl.u32 1326507024, %v1042
    %v1058 = vor.u32 %v1056, %v1057
    %vm1059 = vcmp.lt.s32.totalorder %v1040, 1
    %vm1060 = vcmp.lt.s32.totalorder %v1040, 2
    %vm1061 = vcmp.lt.s32.totalorder %v1040, 3
    %vm1062 = vcmp.lt.s32.totalorder %v1040, 4
    %v1063 = vsel %vm1059, %v1043, %v1046
    %v1064 = vsel %vm1062, %v1052, 2102212464
    %v1065 = vsel %vm1061, %v1049, %v1064
    %v1066 = vsel %vm1060, %v1063, %v1065
    %v1067 = vsel %vm1059, %v1046, %v1049
    %v1068 = vsel %vm1062, %v1055, 920167782
    %v1069 = vsel %vm1061, %v1052, %v1068
    %v1070 = vsel %vm1060, %v1067, %v1069
    %v1071 = vsel %vm1059, %v1049, %v1052
    %v1072 = vsel %vm1062, %v1058, 1326507024
    %v1073 = vsel %vm1061, %v1055, %v1072
    %v1074 = vsel %vm1060, %v1071, %v1073
    %v1075 = vshll.u32 %v1035, 8
    %v1076 = vmul.u32.u64.compose %v1075, %v1074
    %v1077 = vextract.low.u32 %v1076
    %v1078 = vextract.high.u32 %v1076
    %v1079 = vmul.u32.u64.compose %v1075, %v1070
    %v1080 = vextract.low.u32 %v1079
    %v1081 = vextract.high.u32 %v1079
    %v1082 = vmul.u32 %v1075, %v1066
    %v1083 = vadd.s32 %v1078, %v1080
    %vm1084 = vc.u32 %v1078, %v1080
    %v1085 = vadd.s32 %v1081, 1
    %v1086 = vsel %vm1084, %v1085, %v1081
    %v1087 = vadd.s32 %v1082, %v1086
    %v1088 = vadd.s32 %v1087, 536870912
    %v1089 = vshrl.u32 %v1088, 30
    %v1090 = vshll.u32 %v1089, 30
    %v1091 = vsub.s32 %v1087, %v1090
    %vm1092 = vcmp.lt.s32.totalorder %v1091, 0
    %v1093 = vsub.s32 0, %v1091
    %v1094 = vsel %vm1092, %v1093, %v1091
    %v1095 = vclz %v1094
    %v1096 = vsub.s32 %v1095, 2
    %vm1097 = vcmp.gt.s32.totalorder 0, %v1096
    %v1098 = vsel %vm1097, 0, %v1096
    %v1099 = vsub.s32 32, %v1098
    %v1100 = vshll.u32 %v1091, %v1098
    %v1101 = vshrl.u32 %v1083, %v1099
    %v1102 = vor.u32 %v1100, %v1101
    %v1103 = vsub.s32 4294967266, %v1098
    %v1104 = vadd.s32 %v1103, 127
    %v1105 = vshll.u32 %v1104, 23
    %v1106 = vor.u32 4788187, %v1105
    %v1107 = vand.u32 2147483647, %v1106
    %v1109 = vcvt.s32.f32 %v1102
    %v1110 = vmul.f32 %v1109, %v1107
    %v1111 = vxor.u32 %v1110, 2147483648
    %v1112 = vsel %vm1029, %v1111, %v1110
    %v1113 = vsub.s32 4, %v1089
    %v1114 = vsel %vm1029, %v1113, %v1089
    %v1115 = vsel %vm1028, %v84, %v1112
    %v1116 = vsel %vm1028, 0, %v1114
    %v1117 = vcosq.f32.pop %v1115
    %v1118 = vsinq.f32.pop %v1115
    %vm1119 = vweird.f32 %v84
    %v1120 = vadd.s32 %v1116, 3
    %v1121 = vand.u32 %v1120, 3
    %vm1122 = vcmp.lt.s32.totalorder %v1121, 2
    %vm1123 = vcmp.eq.s32.totalorder %v1121, 0
    %v1124 = vxor.u32 %v1118, 2147483648
    %v1125 = vsel %vm1123, %v1117, %v1124
    %vm1126 = vcmp.eq.s32.totalorder %v1121, 2
    %v1127 = vxor.u32 %v1117, 2147483648
    %v1128 = vsel %vm1126, %v1127, %v1118
    %v1129 = vsel %vm1122, %v1125, %v1128
    %v1130 = vsel %vm1119, nan, %v1129
    %v1131 = vand.u32 2147483647, %v85
    %vm1132 = vcmp.le.f32.partialorder %v1131, 0.7853982
    %vm1133 = vcmp.lt.s32.totalorder %v85, 0
    %v1134 = vand.u32 %v85, 2139095040
    %v1135 = vshrl.u32 %v1134, 23
    %v1136 = vsub.s32 %v1135, 127
    %v1137 = vand.u32 2147483647, %v85
    %v1138 = vand.u32 %v1137, 8388607
    %v1139 = vor.u32 %v1138, 8388608
    %v1140 = vsub.s32 0, %v1139
    %v1141 = vadd.s32 %v1136, 1
    %vm1142 = vcmp.gt.s32.totalorder %v1141, 0
    %v1143 = vsel %vm1142, %v1141, 0
    %v1144 = vshrl.u32 %v1143, 5
    %v1145 = vand.u32 %v1143, 31
    %v1146 = vsub.s32 32, %v1145
    %v1147 = vshrl.u32 683565275, %v1146
    %v1148 = vshll.u32 683565275, %v1145
    %v1149 = vshrl.u32 2475754826, %v1146
    %v1150 = vor.u32 %v1148, %v1149
    %v1151 = vshll.u32 2475754826, %v1145
    %v1152 = vshrl.u32 2131351028, %v1146
    %v1153 = vor.u32 %v1151, %v1152
    %v1154 = vshll.u32 2131351028, %v1145
    %v1155 = vshrl.u32 2102212464, %v1146
    %v1156 = vor.u32 %v1154, %v1155
    %v1157 = vshll.u32 2102212464, %v1145
    %v1158 = vshrl.u32 920167782, %v1146
    %v1159 = vor.u32 %v1157, %v1158
    %v1160 = vshll.u32 920167782, %v1145
    %v1161 = vshrl.u32 1326507024, %v1146
    %v1162 = vor.u32 %v1160, %v1161
    %vm1163 = vcmp.lt.s32.totalorder %v1144, 1
    %vm1164 = vcmp.lt.s32.totalorder %v1144, 2
    %vm1165 = vcmp.lt.s32.totalorder %v1144, 3
    %vm1166 = vcmp.lt.s32.totalorder %v1144, 4
    %v1167 = vsel %vm1163, %v1147, %v1150
    %v1168 = vsel %vm1166, %v1156, 2102212464
    %v1169 = vsel %vm1165, %v1153, %v1168
    %v1170 = vsel %vm1164, %v1167, %v1169
    %v1171 = vsel %vm1163, %v1150, %v1153
    %v1172 = vsel %vm1166, %v1159, 920167782
    %v1173 = vsel %vm1165, %v1156, %v1172
    %v1174 = vsel %vm1164, %v1171, %v1173
    %v1175 = vsel %vm1163, %v1153, %v1156
    %v1176 = vsel %vm1166, %v1162, 1326507024
    %v1177 = vsel %vm1165, %v1159, %v1176
    %v1178 = vsel %vm1164, %v1175, %v1177
    %v1179 = vshll.u32 %v1139, 8
    %v1180 = vmul.u32.u64.compose %v1179, %v1178
    %v1181 = vextract.low.u32 %v1180
    %v1182 = vextract.high.u32 %v1180
    %v1183 = vmul.u32.u64.compose %v1179, %v1174
    %v1184 = vextract.low.u32 %v1183
    %v1185 = vextract.high.u32 %v1183
    %v1186 = vmul.u32 %v1179, %v1170
    %v1187 = vadd.s32 %v1182, %v1184
    %vm1188 = vc.u32 %v1182, %v1184
    %v1189 = vadd.s32 %v1185, 1
    %v1190 = vsel %vm1188, %v1189, %v1185
    %v1191 = vadd.s32 %v1186, %v1190
    %v1192 = vadd.s32 %v1191, 536870912
    %v1193 = vshrl.u32 %v1192, 30
    %v1194 = vshll.u32 %v1193, 30
    %v1195 = vsub.s32 %v1191, %v1194
    %vm1196 = vcmp.lt.s32.totalorder %v1195, 0
    %v1197 = vsub.s32 0, %v1195
    %v1198 = vsel %vm1196, %v1197, %v1195
    %v1199 = vclz %v1198
    %v1200 = vsub.s32 %v1199, 2
    %vm1201 = vcmp.gt.s32.totalorder 0, %v1200
    %v1202 = vsel %vm1201, 0, %v1200
    %v1203 = vsub.s32 32, %v1202
    %v1204 = vshll.u32 %v1195, %v1202
    %v1205 = vshrl.u32 %v1187, %v1203
    %v1206 = vor.u32 %v1204, %v1205
    %v1207 = vsub.s32 4294967266, %v1202
    %v1208 = vadd.s32 %v1207, 127
    %v1209 = vshll.u32 %v1208, 23
    %v1210 = vor.u32 4788187, %v1209
    %v1211 = vand.u32 2147483647, %v1210
    %v1213 = vcvt.s32.f32 %v1206
    %v1214 = vmul.f32 %v1213, %v1211
    %v1215 = vxor.u32 %v1214, 2147483648
    %v1216 = vsel %vm1133, %v1215, %v1214
    %v1217 = vsub.s32 4, %v1193
    %v1218 = vsel %vm1133, %v1217, %v1193
    %v1219 = vsel %vm1132, %v85, %v1216
    %v1220 = vsel %vm1132, 0, %v1218
    %v1221 = vcosq.f32.pop %v1219
    %v1222 = vsinq.f32.pop %v1219
    %vm1223 = vweird.f32 %v85
    %v1224 = vadd.s32 %v1220, 3
    %v1225 = vand.u32 %v1224, 3
    %vm1226 = vcmp.lt.s32.totalorder %v1225, 2
    %vm1227 = vcmp.eq.s32.totalorder %v1225, 0
    %v1228 = vxor.u32 %v1222, 2147483648
    %v1229 = vsel %vm1227, %v1221, %v1228
    %vm1230 = vcmp.eq.s32.totalorder %v1225, 2
    %v1231 = vxor.u32 %v1221, 2147483648
    %v1232 = vsel %vm1230, %v1231, %v1222
    %v1233 = vsel %vm1226, %v1229, %v1232
    %v1234 = vsel %vm1223, nan, %v1233
    %v1235 = vand.u32 2147483647, %v86
    %vm1236 = vcmp.le.f32.partialorder %v1235, 0.7853982
    %vm1237 = vcmp.lt.s32.totalorder %v86, 0
    %v1238 = vand.u32 %v86, 2139095040
    %v1239 = vshrl.u32 %v1238, 23
    %v1240 = vsub.s32 %v1239, 127
    %v1241 = vand.u32 2147483647, %v86
    %v1242 = vand.u32 %v1241, 8388607
    %v1243 = vor.u32 %v1242, 8388608
    %v1244 = vsub.s32 0, %v1243
    %v1245 = vadd.s32 %v1240, 1
    %vm1246 = vcmp.gt.s32.totalorder %v1245, 0
    %v1247 = vsel %vm1246, %v1245, 0
    %v1248 = vshrl.u32 %v1247, 5
    %v1249 = vand.u32 %v1247, 31
    %v1250 = vsub.s32 32, %v1249
    %v1251 = vshrl.u32 683565275, %v1250
    %v1252 = vshll.u32 683565275, %v1249
    %v1253 = vshrl.u32 2475754826, %v1250
    %v1254 = vor.u32 %v1252, %v1253
    %v1255 = vshll.u32 2475754826, %v1249
    %v1256 = vshrl.u32 2131351028, %v1250
    %v1257 = vor.u32 %v1255, %v1256
    %v1258 = vshll.u32 2131351028, %v1249
    %v1259 = vshrl.u32 2102212464, %v1250
    %v1260 = vor.u32 %v1258, %v1259
    %v1261 = vshll.u32 2102212464, %v1249
    %v1262 = vshrl.u32 920167782, %v1250
    %v1263 = vor.u32 %v1261, %v1262
    %v1264 = vshll.u32 920167782, %v1249
    %v1265 = vshrl.u32 1326507024, %v1250
    %v1266 = vor.u32 %v1264, %v1265
    %vm1267 = vcmp.lt.s32.totalorder %v1248, 1
    %vm1268 = vcmp.lt.s32.totalorder %v1248, 2
    %vm1269 = vcmp.lt.s32.totalorder %v1248, 3
    %vm1270 = vcmp.lt.s32.totalorder %v1248, 4
    %v1271 = vsel %vm1267, %v1251, %v1254
    %v1272 = vsel %vm1270, %v1260, 2102212464
    %v1273 = vsel %vm1269, %v1257, %v1272
    %v1274 = vsel %vm1268, %v1271, %v1273
    %v1275 = vsel %vm1267, %v1254, %v1257
    %v1276 = vsel %vm1270, %v1263, 920167782
    %v1277 = vsel %vm1269, %v1260, %v1276
    %v1278 = vsel %vm1268, %v1275, %v1277
    %v1279 = vsel %vm1267, %v1257, %v1260
    %v1280 = vsel %vm1270, %v1266, 1326507024
    %v1281 = vsel %vm1269, %v1263, %v1280
    %v1282 = vsel %vm1268, %v1279, %v1281
    %v1283 = vshll.u32 %v1243, 8
    %v1284 = vmul.u32.u64.compose %v1283, %v1282
    %v1285 = vextract.low.u32 %v1284
    %v1286 = vextract.high.u32 %v1284
    %v1287 = vmul.u32.u64.compose %v1283, %v1278
    %v1288 = vextract.low.u32 %v1287
    %v1289 = vextract.high.u32 %v1287
    %v1290 = vmul.u32 %v1283, %v1274
    %v1291 = vadd.s32 %v1286, %v1288
    %vm1292 = vc.u32 %v1286, %v1288
    %v1293 = vadd.s32 %v1289, 1
    %v1294 = vsel %vm1292, %v1293, %v1289
    %v1295 = vadd.s32 %v1290, %v1294
    %v1296 = vadd.s32 %v1295, 536870912
    %v1297 = vshrl.u32 %v1296, 30
    %v1298 = vshll.u32 %v1297, 30
    %v1299 = vsub.s32 %v1295, %v1298
    %vm1300 = vcmp.lt.s32.totalorder %v1299, 0
    %v1301 = vsub.s32 0, %v1299
    %v1302 = vsel %vm1300, %v1301, %v1299
    %v1303 = vclz %v1302
    %v1304 = vsub.s32 %v1303, 2
    %vm1305 = vcmp.gt.s32.totalorder 0, %v1304
    %v1306 = vsel %vm1305, 0, %v1304
    %v1307 = vsub.s32 32, %v1306
    %v1308 = vshll.u32 %v1299, %v1306
    %v1309 = vshrl.u32 %v1291, %v1307
    %v1310 = vor.u32 %v1308, %v1309
    %v1311 = vsub.s32 4294967266, %v1306
    %v1312 = vadd.s32 %v1311, 127
    %v1313 = vshll.u32 %v1312, 23
    %v1314 = vor.u32 4788187, %v1313
    %v1315 = vand.u32 2147483647, %v1314
    %v1317 = vcvt.s32.f32 %v1310
    %v1318 = vmul.f32 %v1317, %v1315
    %v1319 = vxor.u32 %v1318, 2147483648
    %v1320 = vsel %vm1237, %v1319, %v1318
    %v1321 = vsub.s32 4, %v1297
    %v1322 = vsel %vm1237, %v1321, %v1297
    %v1323 = vsel %vm1236, %v86, %v1320
    %v1324 = vsel %vm1236, 0, %v1322
    %v1325 = vcosq.f32.pop %v1323
    %v1326 = vsinq.f32.pop %v1323
    %vm1327 = vweird.f32 %v86
    %v1328 = vadd.s32 %v1324, 3
    %v1329 = vand.u32 %v1328, 3
    %vm1330 = vcmp.lt.s32.totalorder %v1329, 2
    %vm1331 = vcmp.eq.s32.totalorder %v1329, 0
    %v1332 = vxor.u32 %v1326, 2147483648
    %v1333 = vsel %vm1331, %v1325, %v1332
    %vm1334 = vcmp.eq.s32.totalorder %v1329, 2
    %v1335 = vxor.u32 %v1325, 2147483648
    %v1336 = vsel %vm1334, %v1335, %v1326
    %v1337 = vsel %vm1330, %v1333, %v1336
    %v1338 = vsel %vm1327, nan, %v1337
    %v1339 = vand.u32 2147483647, %v87
    %vm1340 = vcmp.le.f32.partialorder %v1339, 0.7853982
    %vm1341 = vcmp.lt.s32.totalorder %v87, 0
    %v1342 = vand.u32 %v87, 2139095040
    %v1343 = vshrl.u32 %v1342, 23
    %v1344 = vsub.s32 %v1343, 127
    %v1345 = vand.u32 2147483647, %v87
    %v1346 = vand.u32 %v1345, 8388607
    %v1347 = vor.u32 %v1346, 8388608
    %v1348 = vsub.s32 0, %v1347
    %v1349 = vadd.s32 %v1344, 1
    %vm1350 = vcmp.gt.s32.totalorder %v1349, 0
    %v1351 = vsel %vm1350, %v1349, 0
    %v1352 = vshrl.u32 %v1351, 5
    %v1353 = vand.u32 %v1351, 31
    %v1354 = vsub.s32 32, %v1353
    %v1355 = vshrl.u32 683565275, %v1354
    %v1356 = vshll.u32 683565275, %v1353
    %v1357 = vshrl.u32 2475754826, %v1354
    %v1358 = vor.u32 %v1356, %v1357
    %v1359 = vshll.u32 2475754826, %v1353
    %v1360 = vshrl.u32 2131351028, %v1354
    %v1361 = vor.u32 %v1359, %v1360
    %v1362 = vshll.u32 2131351028, %v1353
    %v1363 = vshrl.u32 2102212464, %v1354
    %v1364 = vor.u32 %v1362, %v1363
    %v1365 = vshll.u32 2102212464, %v1353
    %v1366 = vshrl.u32 920167782, %v1354
    %v1367 = vor.u32 %v1365, %v1366
    %v1368 = vshll.u32 920167782, %v1353
    %v1369 = vshrl.u32 1326507024, %v1354
    %v1370 = vor.u32 %v1368, %v1369
    %vm1371 = vcmp.lt.s32.totalorder %v1352, 1
    %vm1372 = vcmp.lt.s32.totalorder %v1352, 2
    %vm1373 = vcmp.lt.s32.totalorder %v1352, 3
    %vm1374 = vcmp.lt.s32.totalorder %v1352, 4
    %v1375 = vsel %vm1371, %v1355, %v1358
    %v1376 = vsel %vm1374, %v1364, 2102212464
    %v1377 = vsel %vm1373, %v1361, %v1376
    %v1378 = vsel %vm1372, %v1375, %v1377
    %v1379 = vsel %vm1371, %v1358, %v1361
    %v1380 = vsel %vm1374, %v1367, 920167782
    %v1381 = vsel %vm1373, %v1364, %v1380
    %v1382 = vsel %vm1372, %v1379, %v1381
    %v1383 = vsel %vm1371, %v1361, %v1364
    %v1384 = vsel %vm1374, %v1370, 1326507024
    %v1385 = vsel %vm1373, %v1367, %v1384
    %v1386 = vsel %vm1372, %v1383, %v1385
    %v1387 = vshll.u32 %v1347, 8
    %v1388 = vmul.u32.u64.compose %v1387, %v1386
    %v1389 = vextract.low.u32 %v1388
    %v1390 = vextract.high.u32 %v1388
    %v1391 = vmul.u32.u64.compose %v1387, %v1382
    %v1392 = vextract.low.u32 %v1391
    %v1393 = vextract.high.u32 %v1391
    %v1394 = vmul.u32 %v1387, %v1378
    %v1395 = vadd.s32 %v1390, %v1392
    %vm1396 = vc.u32 %v1390, %v1392
    %v1397 = vadd.s32 %v1393, 1
    %v1398 = vsel %vm1396, %v1397, %v1393
    %v1399 = vadd.s32 %v1394, %v1398
    %v1400 = vadd.s32 %v1399, 536870912
    %v1401 = vshrl.u32 %v1400, 30
    %v1402 = vshll.u32 %v1401, 30
    %v1403 = vsub.s32 %v1399, %v1402
    %vm1404 = vcmp.lt.s32.totalorder %v1403, 0
    %v1405 = vsub.s32 0, %v1403
    %v1406 = vsel %vm1404, %v1405, %v1403
    %v1407 = vclz %v1406
    %v1408 = vsub.s32 %v1407, 2
    %vm1409 = vcmp.gt.s32.totalorder 0, %v1408
    %v1410 = vsel %vm1409, 0, %v1408
    %v1411 = vsub.s32 32, %v1410
    %v1412 = vshll.u32 %v1403, %v1410
    %v1413 = vshrl.u32 %v1395, %v1411
    %v1414 = vor.u32 %v1412, %v1413
    %v1415 = vsub.s32 4294967266, %v1410
    %v1416 = vadd.s32 %v1415, 127
    %v1417 = vshll.u32 %v1416, 23
    %v1418 = vor.u32 4788187, %v1417
    %v1419 = vand.u32 2147483647, %v1418
    %v1421 = vcvt.s32.f32 %v1414
    %v1422 = vmul.f32 %v1421, %v1419
    %v1423 = vxor.u32 %v1422, 2147483648
    %v1424 = vsel %vm1341, %v1423, %v1422
    %v1425 = vsub.s32 4, %v1401
    %v1426 = vsel %vm1341, %v1425, %v1401
    %v1427 = vsel %vm1340, %v87, %v1424
    %v1428 = vsel %vm1340, 0, %v1426
    %v1429 = vcosq.f32.pop %v1427
    %v1430 = vsinq.f32.pop %v1427
    %vm1431 = vweird.f32 %v87
    %v1432 = vadd.s32 %v1428, 3
    %v1433 = vand.u32 %v1432, 3
    %vm1434 = vcmp.lt.s32.totalorder %v1433, 2
    %vm1435 = vcmp.eq.s32.totalorder %v1433, 0
    %v1436 = vxor.u32 %v1430, 2147483648
    %v1437 = vsel %vm1435, %v1429, %v1436
    %vm1438 = vcmp.eq.s32.totalorder %v1433, 2
    %v1439 = vxor.u32 %v1429, 2147483648
    %v1440 = vsel %vm1438, %v1439, %v1430
    %v1441 = vsel %vm1434, %v1437, %v1440
    %v1442 = vsel %vm1431, nan, %v1441
    %v1443 = vand.u32 2147483647, %v88
    %vm1444 = vcmp.le.f32.partialorder %v1443, 0.7853982
    %vm1445 = vcmp.lt.s32.totalorder %v88, 0
    %v1446 = vand.u32 %v88, 2139095040
    %v1447 = vshrl.u32 %v1446, 23
    %v1448 = vsub.s32 %v1447, 127
    %v1449 = vand.u32 2147483647, %v88
    %v1450 = vand.u32 %v1449, 8388607
    %v1451 = vor.u32 %v1450, 8388608
    %v1452 = vsub.s32 0, %v1451
    %v1453 = vadd.s32 %v1448, 1
    %vm1454 = vcmp.gt.s32.totalorder %v1453, 0
    %v1455 = vsel %vm1454, %v1453, 0
    %v1456 = vshrl.u32 %v1455, 5
    %v1457 = vand.u32 %v1455, 31
    %v1458 = vsub.s32 32, %v1457
    %v1459 = vshrl.u32 683565275, %v1458
    %v1460 = vshll.u32 683565275, %v1457
    %v1461 = vshrl.u32 2475754826, %v1458
    %v1462 = vor.u32 %v1460, %v1461
    %v1463 = vshll.u32 2475754826, %v1457
    %v1464 = vshrl.u32 2131351028, %v1458
    %v1465 = vor.u32 %v1463, %v1464
    %v1466 = vshll.u32 2131351028, %v1457
    %v1467 = vshrl.u32 2102212464, %v1458
    %v1468 = vor.u32 %v1466, %v1467
    %v1469 = vshll.u32 2102212464, %v1457
    %v1470 = vshrl.u32 920167782, %v1458
    %v1471 = vor.u32 %v1469, %v1470
    %v1472 = vshll.u32 920167782, %v1457
    %v1473 = vshrl.u32 1326507024, %v1458
    %v1474 = vor.u32 %v1472, %v1473
    %vm1475 = vcmp.lt.s32.totalorder %v1456, 1
    %vm1476 = vcmp.lt.s32.totalorder %v1456, 2
    %vm1477 = vcmp.lt.s32.totalorder %v1456, 3
    %vm1478 = vcmp.lt.s32.totalorder %v1456, 4
    %v1479 = vsel %vm1475, %v1459, %v1462
    %v1480 = vsel %vm1478, %v1468, 2102212464
    %v1481 = vsel %vm1477, %v1465, %v1480
    %v1482 = vsel %vm1476, %v1479, %v1481
    %v1483 = vsel %vm1475, %v1462, %v1465
    %v1484 = vsel %vm1478, %v1471, 920167782
    %v1485 = vsel %vm1477, %v1468, %v1484
    %v1486 = vsel %vm1476, %v1483, %v1485
    %v1487 = vsel %vm1475, %v1465, %v1468
    %v1488 = vsel %vm1478, %v1474, 1326507024
    %v1489 = vsel %vm1477, %v1471, %v1488
    %v1490 = vsel %vm1476, %v1487, %v1489
    %v1491 = vshll.u32 %v1451, 8
    %v1492 = vmul.u32.u64.compose %v1491, %v1490
    %v1493 = vextract.low.u32 %v1492
    %v1494 = vextract.high.u32 %v1492
    %v1495 = vmul.u32.u64.compose %v1491, %v1486
    %v1496 = vextract.low.u32 %v1495
    %v1497 = vextract.high.u32 %v1495
    %v1498 = vmul.u32 %v1491, %v1482
    %v1499 = vadd.s32 %v1494, %v1496
    %vm1500 = vc.u32 %v1494, %v1496
    %v1501 = vadd.s32 %v1497, 1
    %v1502 = vsel %vm1500, %v1501, %v1497
    %v1503 = vadd.s32 %v1498, %v1502
    %v1504 = vadd.s32 %v1503, 536870912
    %v1505 = vshrl.u32 %v1504, 30
    %v1506 = vshll.u32 %v1505, 30
    %v1507 = vsub.s32 %v1503, %v1506
    %vm1508 = vcmp.lt.s32.totalorder %v1507, 0
    %v1509 = vsub.s32 0, %v1507
    %v1510 = vsel %vm1508, %v1509, %v1507
    %v1511 = vclz %v1510
    %v1512 = vsub.s32 %v1511, 2
    %vm1513 = vcmp.gt.s32.totalorder 0, %v1512
    %v1514 = vsel %vm1513, 0, %v1512
    %v1515 = vsub.s32 32, %v1514
    %v1516 = vshll.u32 %v1507, %v1514
    %v1517 = vshrl.u32 %v1499, %v1515
    %v1518 = vor.u32 %v1516, %v1517
    %v1519 = vsub.s32 4294967266, %v1514
    %v1520 = vadd.s32 %v1519, 127
    %v1521 = vshll.u32 %v1520, 23
    %v1522 = vor.u32 4788187, %v1521
    %v1523 = vand.u32 2147483647, %v1522
    %v1525 = vcvt.s32.f32 %v1518
    %v1526 = vmul.f32 %v1525, %v1523
    %v1527 = vxor.u32 %v1526, 2147483648
    %v1528 = vsel %vm1445, %v1527, %v1526
    %v1529 = vsub.s32 4, %v1505
    %v1530 = vsel %vm1445, %v1529, %v1505
    %v1531 = vsel %vm1444, %v88, %v1528
    %v1532 = vsel %vm1444, 0, %v1530
    %v1533 = vcosq.f32.pop %v1531
    %v1534 = vsinq.f32.pop %v1531
    %vm1535 = vweird.f32 %v88
    %v1536 = vadd.s32 %v1532, 3
    %v1537 = vand.u32 %v1536, 3
    %vm1538 = vcmp.lt.s32.totalorder %v1537, 2
    %vm1539 = vcmp.eq.s32.totalorder %v1537, 0
    %v1540 = vxor.u32 %v1534, 2147483648
    %v1541 = vsel %vm1539, %v1533, %v1540
    %vm1542 = vcmp.eq.s32.totalorder %v1537, 2
    %v1543 = vxor.u32 %v1533, 2147483648
    %v1544 = vsel %vm1542, %v1543, %v1534
    %v1545 = vsel %vm1538, %v1541, %v1544
    %v1546 = vsel %vm1535, nan, %v1545
    %v1547 = vand.u32 2147483647, %v89
    %vm1548 = vcmp.le.f32.partialorder %v1547, 0.7853982
    %vm1549 = vcmp.lt.s32.totalorder %v89, 0
    %v1550 = vand.u32 %v89, 2139095040
    %v1551 = vshrl.u32 %v1550, 23
    %v1552 = vsub.s32 %v1551, 127
    %v1553 = vand.u32 2147483647, %v89
    %v1554 = vand.u32 %v1553, 8388607
    %v1555 = vor.u32 %v1554, 8388608
    %v1556 = vsub.s32 0, %v1555
    %v1557 = vadd.s32 %v1552, 1
    %vm1558 = vcmp.gt.s32.totalorder %v1557, 0
    %v1559 = vsel %vm1558, %v1557, 0
    %v1560 = vshrl.u32 %v1559, 5
    %v1561 = vand.u32 %v1559, 31
    %v1562 = vsub.s32 32, %v1561
    %v1563 = vshrl.u32 683565275, %v1562
    %v1564 = vshll.u32 683565275, %v1561
    %v1565 = vshrl.u32 2475754826, %v1562
    %v1566 = vor.u32 %v1564, %v1565
    %v1567 = vshll.u32 2475754826, %v1561
    %v1568 = vshrl.u32 2131351028, %v1562
    %v1569 = vor.u32 %v1567, %v1568
    %v1570 = vshll.u32 2131351028, %v1561
    %v1571 = vshrl.u32 2102212464, %v1562
    %v1572 = vor.u32 %v1570, %v1571
    %v1573 = vshll.u32 2102212464, %v1561
    %v1574 = vshrl.u32 920167782, %v1562
    %v1575 = vor.u32 %v1573, %v1574
    %v1576 = vshll.u32 920167782, %v1561
    %v1577 = vshrl.u32 1326507024, %v1562
    %v1578 = vor.u32 %v1576, %v1577
    %vm1579 = vcmp.lt.s32.totalorder %v1560, 1
    %vm1580 = vcmp.lt.s32.totalorder %v1560, 2
    %vm1581 = vcmp.lt.s32.totalorder %v1560, 3
    %vm1582 = vcmp.lt.s32.totalorder %v1560, 4
    %v1583 = vsel %vm1579, %v1563, %v1566
    %v1584 = vsel %vm1582, %v1572, 2102212464
    %v1585 = vsel %vm1581, %v1569, %v1584
    %v1586 = vsel %vm1580, %v1583, %v1585
    %v1587 = vsel %vm1579, %v1566, %v1569
    %v1588 = vsel %vm1582, %v1575, 920167782
    %v1589 = vsel %vm1581, %v1572, %v1588
    %v1590 = vsel %vm1580, %v1587, %v1589
    %v1591 = vsel %vm1579, %v1569, %v1572
    %v1592 = vsel %vm1582, %v1578, 1326507024
    %v1593 = vsel %vm1581, %v1575, %v1592
    %v1594 = vsel %vm1580, %v1591, %v1593
    %v1595 = vshll.u32 %v1555, 8
    %v1596 = vmul.u32.u64.compose %v1595, %v1594
    %v1597 = vextract.low.u32 %v1596
    %v1598 = vextract.high.u32 %v1596
    %v1599 = vmul.u32.u64.compose %v1595, %v1590
    %v1600 = vextract.low.u32 %v1599
    %v1601 = vextract.high.u32 %v1599
    %v1602 = vmul.u32 %v1595, %v1586
    %v1603 = vadd.s32 %v1598, %v1600
    %vm1604 = vc.u32 %v1598, %v1600
    %v1605 = vadd.s32 %v1601, 1
    %v1606 = vsel %vm1604, %v1605, %v1601
    %v1607 = vadd.s32 %v1602, %v1606
    %v1608 = vadd.s32 %v1607, 536870912
    %v1609 = vshrl.u32 %v1608, 30
    %v1610 = vshll.u32 %v1609, 30
    %v1611 = vsub.s32 %v1607, %v1610
    %vm1612 = vcmp.lt.s32.totalorder %v1611, 0
    %v1613 = vsub.s32 0, %v1611
    %v1614 = vsel %vm1612, %v1613, %v1611
    %v1615 = vclz %v1614
    %v1616 = vsub.s32 %v1615, 2
    %vm1617 = vcmp.gt.s32.totalorder 0, %v1616
    %v1618 = vsel %vm1617, 0, %v1616
    %v1619 = vsub.s32 32, %v1618
    %v1620 = vshll.u32 %v1611, %v1618
    %v1621 = vshrl.u32 %v1603, %v1619
    %v1622 = vor.u32 %v1620, %v1621
    %v1623 = vsub.s32 4294967266, %v1618
    %v1624 = vadd.s32 %v1623, 127
    %v1625 = vshll.u32 %v1624, 23
    %v1626 = vor.u32 4788187, %v1625
    %v1627 = vand.u32 2147483647, %v1626
    %v1629 = vcvt.s32.f32 %v1622
    %v1630 = vmul.f32 %v1629, %v1627
    %v1631 = vxor.u32 %v1630, 2147483648
    %v1632 = vsel %vm1549, %v1631, %v1630
    %v1633 = vsub.s32 4, %v1609
    %v1634 = vsel %vm1549, %v1633, %v1609
    %v1635 = vsel %vm1548, %v89, %v1632
    %v1636 = vsel %vm1548, 0, %v1634
    %v1637 = vcosq.f32.pop %v1635
    %v1638 = vsinq.f32.pop %v1635
    %vm1639 = vweird.f32 %v89
    %v1640 = vadd.s32 %v1636, 3
    %v1641 = vand.u32 %v1640, 3
    %vm1642 = vcmp.lt.s32.totalorder %v1641, 2
    %vm1643 = vcmp.eq.s32.totalorder %v1641, 0
    %v1644 = vxor.u32 %v1638, 2147483648
    %v1645 = vsel %vm1643, %v1637, %v1644
    %vm1646 = vcmp.eq.s32.totalorder %v1641, 2
    %v1647 = vxor.u32 %v1637, 2147483648
    %v1648 = vsel %vm1646, %v1647, %v1638
    %v1649 = vsel %vm1642, %v1645, %v1648
    %v1650 = vsel %vm1639, nan, %v1649
    %v1651 = vand.u32 2147483647, %v90
    %vm1652 = vcmp.le.f32.partialorder %v1651, 0.7853982
    %vm1653 = vcmp.lt.s32.totalorder %v90, 0
    %v1654 = vand.u32 %v90, 2139095040
    %v1655 = vshrl.u32 %v1654, 23
    %v1656 = vsub.s32 %v1655, 127
    %v1657 = vand.u32 2147483647, %v90
    %v1658 = vand.u32 %v1657, 8388607
    %v1659 = vor.u32 %v1658, 8388608
    %v1660 = vsub.s32 0, %v1659
    %v1661 = vadd.s32 %v1656, 1
    %vm1662 = vcmp.gt.s32.totalorder %v1661, 0
    %v1663 = vsel %vm1662, %v1661, 0
    %v1664 = vshrl.u32 %v1663, 5
    %v1665 = vand.u32 %v1663, 31
    %v1666 = vsub.s32 32, %v1665
    %v1667 = vshrl.u32 683565275, %v1666
    %v1668 = vshll.u32 683565275, %v1665
    %v1669 = vshrl.u32 2475754826, %v1666
    %v1670 = vor.u32 %v1668, %v1669
    %v1671 = vshll.u32 2475754826, %v1665
    %v1672 = vshrl.u32 2131351028, %v1666
    %v1673 = vor.u32 %v1671, %v1672
    %v1674 = vshll.u32 2131351028, %v1665
    %v1675 = vshrl.u32 2102212464, %v1666
    %v1676 = vor.u32 %v1674, %v1675
    %v1677 = vshll.u32 2102212464, %v1665
    %v1678 = vshrl.u32 920167782, %v1666
    %v1679 = vor.u32 %v1677, %v1678
    %v1680 = vshll.u32 920167782, %v1665
    %v1681 = vshrl.u32 1326507024, %v1666
    %v1682 = vor.u32 %v1680, %v1681
    %vm1683 = vcmp.lt.s32.totalorder %v1664, 1
    %vm1684 = vcmp.lt.s32.totalorder %v1664, 2
    %vm1685 = vcmp.lt.s32.totalorder %v1664, 3
    %vm1686 = vcmp.lt.s32.totalorder %v1664, 4
    %v1687 = vsel %vm1683, %v1667, %v1670
    %v1688 = vsel %vm1686, %v1676, 2102212464
    %v1689 = vsel %vm1685, %v1673, %v1688
    %v1690 = vsel %vm1684, %v1687, %v1689
    %v1691 = vsel %vm1683, %v1670, %v1673
    %v1692 = vsel %vm1686, %v1679, 920167782
    %v1693 = vsel %vm1685, %v1676, %v1692
    %v1694 = vsel %vm1684, %v1691, %v1693
    %v1695 = vsel %vm1683, %v1673, %v1676
    %v1696 = vsel %vm1686, %v1682, 1326507024
    %v1697 = vsel %vm1685, %v1679, %v1696
    %v1698 = vsel %vm1684, %v1695, %v1697
    %v1699 = vshll.u32 %v1659, 8
    %v1700 = vmul.u32.u64.compose %v1699, %v1698
    %v1701 = vextract.low.u32 %v1700
    %v1702 = vextract.high.u32 %v1700
    %v1703 = vmul.u32.u64.compose %v1699, %v1694
    %v1704 = vextract.low.u32 %v1703
    %v1705 = vextract.high.u32 %v1703
    %v1706 = vmul.u32 %v1699, %v1690
    %v1707 = vadd.s32 %v1702, %v1704
    %vm1708 = vc.u32 %v1702, %v1704
    %v1709 = vadd.s32 %v1705, 1
    %v1710 = vsel %vm1708, %v1709, %v1705
    %v1711 = vadd.s32 %v1706, %v1710
    %v1712 = vadd.s32 %v1711, 536870912
    %v1713 = vshrl.u32 %v1712, 30
    %v1714 = vshll.u32 %v1713, 30
    %v1715 = vsub.s32 %v1711, %v1714
    %vm1716 = vcmp.lt.s32.totalorder %v1715, 0
    %v1717 = vsub.s32 0, %v1715
    %v1718 = vsel %vm1716, %v1717, %v1715
    %v1719 = vclz %v1718
    %v1720 = vsub.s32 %v1719, 2
    %vm1721 = vcmp.gt.s32.totalorder 0, %v1720
    %v1722 = vsel %vm1721, 0, %v1720
    %v1723 = vsub.s32 32, %v1722
    %v1724 = vshll.u32 %v1715, %v1722
    %v1725 = vshrl.u32 %v1707, %v1723
    %v1726 = vor.u32 %v1724, %v1725
    %v1727 = vsub.s32 4294967266, %v1722
    %v1728 = vadd.s32 %v1727, 127
    %v1729 = vshll.u32 %v1728, 23
    %v1730 = vor.u32 4788187, %v1729
    %v1731 = vand.u32 2147483647, %v1730
    %v1733 = vcvt.s32.f32 %v1726
    %v1734 = vmul.f32 %v1733, %v1731
    %v1735 = vxor.u32 %v1734, 2147483648
    %v1736 = vsel %vm1653, %v1735, %v1734
    %v1737 = vsub.s32 4, %v1713
    %v1738 = vsel %vm1653, %v1737, %v1713
    %v1739 = vsel %vm1652, %v90, %v1736
    %v1740 = vsel %vm1652, 0, %v1738
    %v1741 = vcosq.f32.pop %v1739
    %v1742 = vsinq.f32.pop %v1739
    %vm1743 = vweird.f32 %v90
    %v1744 = vadd.s32 %v1740, 3
    %v1745 = vand.u32 %v1744, 3
    %vm1746 = vcmp.lt.s32.totalorder %v1745, 2
    %vm1747 = vcmp.eq.s32.totalorder %v1745, 0
    %v1748 = vxor.u32 %v1742, 2147483648
    %v1749 = vsel %vm1747, %v1741, %v1748
    %vm1750 = vcmp.eq.s32.totalorder %v1745, 2
    %v1751 = vxor.u32 %v1741, 2147483648
    %v1752 = vsel %vm1750, %v1751, %v1742
    %v1753 = vsel %vm1746, %v1749, %v1752
    %v1754 = vsel %vm1743, nan, %v1753
    %v1755 = vsel %vm21, 1, 0
    %v1756 = vlaneseq
    %v1757 = vshrl.u32 %v1756, 7
    %v1758 = vsub.s32 0, %v1757
    %v1759 = vrot.slane %v1755, %v1758
    %v1760 = vlaneseq
    %v1761 = vshrl.u32 %v1760, 7
    %v1762 = vsub.s32 1, %v1761
    %v1763 = vrot.slane %v1755, %v1762
    %v1764 = vlaneseq
    %v1765 = vshrl.u32 %v1764, 7
    %v1766 = vsub.s32 2, %v1765
    %v1767 = vrot.slane %v1755, %v1766
    %v1768 = vlaneseq
    %v1769 = vshrl.u32 %v1768, 7
    %v1770 = vsub.s32 3, %v1769
    %v1771 = vrot.slane %v1755, %v1770
    %v1772 = vlaneseq
    %v1773 = vshrl.u32 %v1772, 7
    %v1774 = vsub.s32 4, %v1773
    %v1775 = vrot.slane %v1755, %v1774
    %v1776 = vlaneseq
    %v1777 = vshrl.u32 %v1776, 7
    %v1778 = vsub.s32 5, %v1777
    %v1779 = vrot.slane %v1755, %v1778
    %v1780 = vlaneseq
    %v1781 = vshrl.u32 %v1780, 7
    %v1782 = vsub.s32 6, %v1781
    %v1783 = vrot.slane %v1755, %v1782
    %v1784 = vlaneseq
    %v1785 = vshrl.u32 %v1784, 7
    %v1786 = vsub.s32 7, %v1785
    %v1787 = vrot.slane %v1755, %v1786
    %vm1788 = vcmp.eq.s32.totalorder %v1759, 1
    %vm1789 = vcmp.eq.s32.totalorder %v1763, 1
    %vm1790 = vcmp.eq.s32.totalorder %v1767, 1
    %vm1791 = vcmp.eq.s32.totalorder %v1771, 1
    %vm1792 = vcmp.eq.s32.totalorder %v1775, 1
    %vm1793 = vcmp.eq.s32.totalorder %v1779, 1
    %vm1794 = vcmp.eq.s32.totalorder %v1783, 1
    %vm1795 = vcmp.eq.s32.totalorder %v1787, 1
    %v1796 = vsel %vm1788, %v27, %v194
    %v1797 = vsel %vm1789, %v27, %v298
    %v1798 = vsel %vm1790, %v27, %v402
    %v1799 = vsel %vm1791, %v27, %v506
    %v1800 = vsel %vm1792, %v27, %v610
    %v1801 = vsel %vm1793, %v27, %v714
    %v1802 = vsel %vm1794, %v27, %v818
    %v1803 = vsel %vm1795, %v27, %v922
    %v1804 = vsel %vm1788, %v32, %v1026
    %v1805 = vsel %vm1789, %v32, %v1130
    %v1806 = vsel %vm1790, %v32, %v1234
    %v1807 = vsel %vm1791, %v32, %v1338
    %v1808 = vsel %vm1792, %v32, %v1442
    %v1809 = vsel %vm1793, %v32, %v1546
    %v1810 = vsel %vm1794, %v32, %v1650
    %v1811 = vsel %vm1795, %v32, %v1754
    %v1813 = vlaneseq
    %v1814 = vshrl.u32 %v1813, 7
    %v1815 = vsub.s32 0, %v1814
    %v1816 = vrot.slane %v23, %v1815
    %v1817 = vlaneseq
    %v1818 = vshrl.u32 %v1817, 7
    %v1819 = vsub.s32 1, %v1818
    %v1820 = vrot.slane %v23, %v1819
    %v1821 = vlaneseq
    %v1822 = vshrl.u32 %v1821, 7
    %v1823 = vsub.s32 2, %v1822
    %v1824 = vrot.slane %v23, %v1823
    %v1825 = vlaneseq
    %v1826 = vshrl.u32 %v1825, 7
    %v1827 = vsub.s32 3, %v1826
    %v1828 = vrot.slane %v23, %v1827
    %v1829 = vlaneseq
    %v1830 = vshrl.u32 %v1829, 7
    %v1831 = vsub.s32 4, %v1830
    %v1832 = vrot.slane %v23, %v1831
    %v1833 = vlaneseq
    %v1834 = vshrl.u32 %v1833, 7
    %v1835 = vsub.s32 5, %v1834
    %v1836 = vrot.slane %v23, %v1835
    %v1837 = vlaneseq
    %v1838 = vshrl.u32 %v1837, 7
    %v1839 = vsub.s32 6, %v1838
    %v1840 = vrot.slane %v23, %v1839
    %v1841 = vlaneseq
    %v1842 = vshrl.u32 %v1841, 7
    %v1843 = vsub.s32 7, %v1842
    %v1844 = vrot.slane %v23, %v1843
    %v1853 = vmul.f32 %v1796, %v1816
    %v1854 = vmul.f32 %v1797, %v1820
    %v1855 = vmul.f32 %v1798, %v1824
    %v1856 = vmul.f32 %v1799, %v1828
    %v1857 = vmul.f32 %v1800, %v1832
    %v1858 = vmul.f32 %v1801, %v1836
    %v1859 = vmul.f32 %v1802, %v1840
    %v1860 = vmul.f32 %v1803, %v1844
    %v1861 = vmul.f32 %v1804, %v1816
    %v1862 = vmul.f32 %v1805, %v1820
    %v1863 = vmul.f32 %v1806, %v1824
    %v1864 = vmul.f32 %v1807, %v1828
    %v1865 = vmul.f32 %v1808, %v1832
    %v1866 = vmul.f32 %v1809, %v1836
    %v1867 = vmul.f32 %v1810, %v1840
    %v1868 = vmul.f32 %v1811, %v1844
    %v1869 = vld [vmem:[%s2] sm:$0xff]
    %v1870 = vld [vmem:[%s2 + $0x8] sm:$0xff]
    %v1871 = vld [vmem:[%s2 + $0x10] sm:$0xff]
    %v1872 = vld [vmem:[%s2 + $0x18] sm:$0xff]
    %v1873 = vld [vmem:[%s2 + $0x20] sm:$0xff]
    %v1874 = vld [vmem:[%s2 + $0x28] sm:$0xff]
    %v1875 = vld [vmem:[%s2 + $0x30] sm:$0xff]
    %v1876 = vld [vmem:[%s2 + $0x38] sm:$0xff]
    %v1877 = vld [vmem:[%s2 + $0x40] sm:$0xff]
    %v1878 = vld [vmem:[%s2 + $0x48] sm:$0xff]
    %v1879 = vld [vmem:[%s2 + $0x50] sm:$0xff]
    %v1880 = vld [vmem:[%s2 + $0x58] sm:$0xff]
    %v1881 = vld [vmem:[%s2 + $0x60] sm:$0xff]
    %v1882 = vld [vmem:[%s2 + $0x68] sm:$0xff]
    %v1883 = vld [vmem:[%s2 + $0x70] sm:$0xff]
    %v1884 = vld [vmem:[%s2 + $0x78] sm:$0xff]
    %v1885 = vld [vmem:[%s3] sm:$0xff]
    %v1886 = vld [vmem:[%s3 + $0x8] sm:$0xff]
    %v1887 = vld [vmem:[%s3 + $0x10] sm:$0xff]
    %v1888 = vld [vmem:[%s3 + $0x18] sm:$0xff]
    %v1889 = vld [vmem:[%s3 + $0x20] sm:$0xff]
    %v1890 = vld [vmem:[%s3 + $0x28] sm:$0xff]
    %v1891 = vld [vmem:[%s3 + $0x30] sm:$0xff]
    %v1892 = vld [vmem:[%s3 + $0x38] sm:$0xff]
    %v1893 = vld [vmem:[%s3 + $0x40] sm:$0xff]
    %v1894 = vld [vmem:[%s3 + $0x48] sm:$0xff]
    %v1895 = vld [vmem:[%s3 + $0x50] sm:$0xff]
    %v1896 = vld [vmem:[%s3 + $0x58] sm:$0xff]
    %v1897 = vld [vmem:[%s3 + $0x60] sm:$0xff]
    %v1898 = vld [vmem:[%s3 + $0x68] sm:$0xff]
    %v1899 = vld [vmem:[%s3 + $0x70] sm:$0xff]
    %v1900 = vld [vmem:[%s3 + $0x78] sm:$0xff]
    %1902 = vset.pattern.permute.xlu0 0
    %1903 = vperm.xlu0 %1902, %v1885
    %v1904 = vpop.permute.xlu0 %1903
    %1907 = vset.pattern.permute.xlu0 0
    %1908 = vperm.xlu0 %1907, %v1886
    %v1909 = vpop.permute.xlu0 %1908
    %1912 = vset.pattern.permute.xlu0 0
    %1913 = vperm.xlu0 %1912, %v1887
    %v1914 = vpop.permute.xlu0 %1913
    %1917 = vset.pattern.permute.xlu0 0
    %1918 = vperm.xlu0 %1917, %v1888
    %v1919 = vpop.permute.xlu0 %1918
    %1922 = vset.pattern.permute.xlu0 0
    %1923 = vperm.xlu0 %1922, %v1889
    %v1924 = vpop.permute.xlu0 %1923
    %1927 = vset.pattern.permute.xlu0 0
    %1928 = vperm.xlu0 %1927, %v1890
    %v1929 = vpop.permute.xlu0 %1928
    %1932 = vset.pattern.permute.xlu0 0
    %1933 = vperm.xlu0 %1932, %v1891
    %v1934 = vpop.permute.xlu0 %1933
    %1937 = vset.pattern.permute.xlu0 0
    %1938 = vperm.xlu0 %1937, %v1892
    %v1939 = vpop.permute.xlu0 %1938
    %1942 = vset.pattern.permute.xlu0 0
    %1943 = vperm.xlu0 %1942, %v1893
    %v1944 = vpop.permute.xlu0 %1943
    %1947 = vset.pattern.permute.xlu0 0
    %1948 = vperm.xlu0 %1947, %v1894
    %v1949 = vpop.permute.xlu0 %1948
    %1952 = vset.pattern.permute.xlu0 0
    %1953 = vperm.xlu0 %1952, %v1895
    %v1954 = vpop.permute.xlu0 %1953
    %1957 = vset.pattern.permute.xlu0 0
    %1958 = vperm.xlu0 %1957, %v1896
    %v1959 = vpop.permute.xlu0 %1958
    %1962 = vset.pattern.permute.xlu0 0
    %1963 = vperm.xlu0 %1962, %v1897
    %v1964 = vpop.permute.xlu0 %1963
    %1967 = vset.pattern.permute.xlu0 0
    %1968 = vperm.xlu0 %1967, %v1898
    %v1969 = vpop.permute.xlu0 %1968
    %1972 = vset.pattern.permute.xlu0 0
    %1973 = vperm.xlu0 %1972, %v1899
    %v1974 = vpop.permute.xlu0 %1973
    %1977 = vset.pattern.permute.xlu0 0
    %1978 = vperm.xlu0 %1977, %v1900
    %v1979 = vpop.permute.xlu0 %1978
    %vm1981 = vcmask 130048
    %v1983 = vsel %vm1981, %v1869, 0
    %v1986 = vsel %vm1981, %v1870, 0
    %v1989 = vsel %vm1981, %v1871, 0
    %v1992 = vsel %vm1981, %v1872, 0
    %v1995 = vsel %vm1981, %v1873, 0
    %v1998 = vsel %vm1981, %v1874, 0
    %v2001 = vsel %vm1981, %v1875, 0
    %v2004 = vsel %vm1981, %v1876, 0
    %v2007 = vsel %vm1981, %v1877, 0
    %v2010 = vsel %vm1981, %v1878, 0
    %v2013 = vsel %vm1981, %v1879, 0
    %v2016 = vsel %vm1981, %v1880, 0
    %v2019 = vsel %vm1981, %v1881, 0
    %v2022 = vsel %vm1981, %v1882, 0
    %v2025 = vsel %vm1981, %v1883, 0
    %v2028 = vsel %vm1981, %v1884, 0
    %2030 = vmatprep.subr.mxu0 %v1854
    %2031 = vmatpush1.msra.mxu0 %v1853
    %2032 = vmatprep.subr.mxu0 %v1862
    %2033 = vmatpush1.msra.mxu0 %v1861
    %2034 = vmatprep.subr.mxu0 0.0
    %2035 = vmatpush1.msra.mxu0 0.0
    %2036 = vmatprep.subr.mxu0 0.0
    %2037 = vmatpush1.msra.mxu0 0.0
    %2038 = vmatprep.subr.mxu0 0.0
    %2039 = vmatpush1.msra.mxu0 0.0
    %2040 = vmatprep.subr.mxu0 0.0
    %2041 = vmatpush1.msra.mxu0 0.0
    %2042 = vmatprep.subr.mxu0 0.0
    %2043 = vmatpush1.msra.mxu0 0.0
    %2044 = vmatprep.subr.mxu0 0.0
    %2045 = vmatpush1.msra.mxu0 0.0
    %2046 = vmatprep.subr.mxu0 0.0
    %2047 = vmatpush1.msra.mxu0 0.0
    %2048 = vmatprep.subr.mxu0 0.0
    %2049 = vmatpush1.msra.mxu0 0.0
    %2050 = vmatprep.subr.mxu0 0.0
    %2051 = vmatpush1.msra.mxu0 0.0
    %2052 = vmatprep.subr.mxu0 0.0
    %2053 = vmatpush1.msra.mxu0 0.0
    %2054 = vmatprep.subr.mxu0 0.0
    %2055 = vmatpush1.msra.mxu0 0.0
    %2056 = vmatprep.subr.mxu0 0.0
    %2057 = vmatpush1.msra.mxu0 0.0
    %2058 = vmatprep.subr.mxu0 0.0
    %2059 = vmatpush1.msra.mxu0 0.0
    %2060 = vmatprep.subr.mxu0 0.0
    %2061 = vmatpush1.msra.mxu0 0.0
    %2062 = vmatprep.subr.mxu0 0.0
    %2063 = vmatpush1.msra.mxu0 0.0
    %2064 = vmatprep.subr.mxu0 0.0
    %2065 = vmatpush1.msra.mxu0 0.0
    %2066 = vmatprep.subr.mxu0 0.0
    %2067 = vmatpush1.msra.mxu0 0.0
    %2068 = vmatprep.subr.mxu0 0.0
    %2069 = vmatpush1.msra.mxu0 0.0
    %2070 = vmatprep.subr.mxu0 0.0
    %2071 = vmatpush1.msra.mxu0 0.0
    %2072 = vmatprep.subr.mxu0 0.0
    %2073 = vmatpush1.msra.mxu0 0.0
    %2074 = vmatprep.subr.mxu0 0.0
    %2075 = vmatpush1.msra.mxu0 0.0
    %2076 = vmatprep.subr.mxu0 0.0
    %2077 = vmatpush1.msra.mxu0 0.0
    %2078 = vmatprep.subr.mxu0 0.0
    %2079 = vmatpush1.msra.mxu0 0.0
    %2080 = vmatprep.subr.mxu0 0.0
    %2081 = vmatpush1.msra.mxu0 0.0
    %2082 = vmatprep.subr.mxu0 0.0
    %2083 = vmatpush1.msra.mxu0 0.0
    %2084 = vmatprep.subr.mxu0 0.0
    %2085 = vmatpush1.msra.mxu0 0.0
    %2086 = vmatprep.subr.mxu0 0.0
    %2087 = vmatpush1.msra.mxu0 0.0
    %2088 = vmatprep.subr.mxu0 0.0
    %2089 = vmatpush1.msra.mxu0 0.0
    %2090 = vmatprep.subr.mxu0 0.0
    %2091 = vmatpush1.msra.mxu0 0.0
    %2092 = vmatprep.subr.mxu0 0.0
    %2093 = vmatpush1.msra.mxu0 0.0
    %2094 = vmatprep.mubr.f32.mxu0 0.0
    %2095 = vmatmul.mubr.f32.gmra.mrb[0].mxu0 %v1983
    %v2096 = vpop.f32.mrb[0].mxu0
    %v2097 = vadd.f32 %v1904, %v2096
    %v2098 = vpop.f32.mrb[0].mxu0
    %v2099 = vadd.f32 %v1904, %v2098
    %2100 = vmatprep.mubr.f32.mxu0 0.0
    %2101 = vmatmul.mubr.f32.gmra.mrb[0].mxu0 %v1986
    %v2102 = vpop.f32.mrb[0].mxu0
    %v2103 = vadd.f32 %v1909, %v2102
    %v2104 = vpop.f32.mrb[0].mxu0
    %v2105 = vadd.f32 %v1909, %v2104
    %2106 = vmatprep.mubr.f32.mxu0 0.0
    %2107 = vmatmul.mubr.f32.gmra.mrb[0].mxu0 %v1989
    %v2108 = vpop.f32.mrb[0].mxu0
    %v2109 = vadd.f32 %v1914, %v2108
    %v2110 = vpop.f32.mrb[0].mxu0
    %v2111 = vadd.f32 %v1914, %v2110
    %2112 = vmatprep.mubr.f32.mxu0 0.0
    %2113 = vmatmul.mubr.f32.gmra.mrb[0].mxu0 %v1992
    %v2114 = vpop.f32.mrb[0].mxu0
    %v2115 = vadd.f32 %v1919, %v2114
    %v2116 = vpop.f32.mrb[0].mxu0
    %v2117 = vadd.f32 %v1919, %v2116
    %2118 = vmatprep.mubr.f32.mxu0 0.0
    %2119 = vmatmul.mubr.f32.gmra.mrb[0].mxu0 %v1995
    %v2120 = vpop.f32.mrb[0].mxu0
    %v2121 = vadd.f32 %v1924, %v2120
    %v2122 = vpop.f32.mrb[0].mxu0
    %v2123 = vadd.f32 %v1924, %v2122
    %2124 = vmatprep.mubr.f32.mxu0 0.0
    %2125 = vmatmul.mubr.f32.gmra.mrb[0].mxu0 %v1998
    %v2126 = vpop.f32.mrb[0].mxu0
    %v2127 = vadd.f32 %v1929, %v2126
    %v2128 = vpop.f32.mrb[0].mxu0
    %v2129 = vadd.f32 %v1929, %v2128
    %2130 = vmatprep.mubr.f32.mxu0 0.0
    %2131 = vmatmul.mubr.f32.gmra.mrb[0].mxu0 %v2001
    %v2132 = vpop.f32.mrb[0].mxu0
    %v2133 = vadd.f32 %v1934, %v2132
    %v2134 = vpop.f32.mrb[0].mxu0
    %v2135 = vadd.f32 %v1934, %v2134
    %2136 = vmatprep.mubr.f32.mxu0 0.0
    %2137 = vmatmul.mubr.f32.gmra.mrb[0].mxu0 %v2004
    %v2138 = vpop.f32.mrb[0].mxu0
    %v2139 = vadd.f32 %v1939, %v2138
    %v2140 = vpop.f32.mrb[0].mxu0
    %v2141 = vadd.f32 %v1939, %v2140
    %2142 = vmatprep.mubr.f32.mxu0 0.0
    %2143 = vmatmul.mubr.f32.gmra.mrb[0].mxu0 %v2007
    %v2144 = vpop.f32.mrb[0].mxu0
    %v2145 = vadd.f32 %v1944, %v2144
    %v2146 = vpop.f32.mrb[0].mxu0
    %v2147 = vadd.f32 %v1944, %v2146
    %2148 = vmatprep.mubr.f32.mxu0 0.0
    %2149 = vmatmul.mubr.f32.gmra.mrb[0].mxu0 %v2010
    %v2150 = vpop.f32.mrb[0].mxu0
    %v2151 = vadd.f32 %v1949, %v2150
    %v2152 = vpop.f32.mrb[0].mxu0
    %v2153 = vadd.f32 %v1949, %v2152
    %2154 = vmatprep.mubr.f32.mxu0 0.0
    %2155 = vmatmul.mubr.f32.gmra.mrb[0].mxu0 %v2013
    %v2156 = vpop.f32.mrb[0].mxu0
    %v2157 = vadd.f32 %v1954, %v2156
    %v2158 = vpop.f32.mrb[0].mxu0
    %v2159 = vadd.f32 %v1954, %v2158
    %2160 = vmatprep.mubr.f32.mxu0 0.0
    %2161 = vmatmul.mubr.f32.gmra.mrb[0].mxu0 %v2016
    %v2162 = vpop.f32.mrb[0].mxu0
    %v2163 = vadd.f32 %v1959, %v2162
    %v2164 = vpop.f32.mrb[0].mxu0
    %v2165 = vadd.f32 %v1959, %v2164
    %2166 = vmatprep.mubr.f32.mxu0 0.0
    %2167 = vmatmul.mubr.f32.gmra.mrb[0].mxu0 %v2019
    %v2168 = vpop.f32.mrb[0].mxu0
    %v2169 = vadd.f32 %v1964, %v2168
    %v2170 = vpop.f32.mrb[0].mxu0
    %v2171 = vadd.f32 %v1964, %v2170
    %2172 = vmatprep.mubr.f32.mxu0 0.0
    %2173 = vmatmul.mubr.f32.gmra.mrb[0].mxu0 %v2022
    %v2174 = vpop.f32.mrb[0].mxu0
    %v2175 = vadd.f32 %v1969, %v2174
    %v2176 = vpop.f32.mrb[0].mxu0
    %v2177 = vadd.f32 %v1969, %v2176
    %2178 = vmatprep.mubr.f32.mxu0 0.0
    %2179 = vmatmul.mubr.f32.gmra.mrb[0].mxu0 %v2025
    %v2180 = vpop.f32.mrb[0].mxu0
    %v2181 = vadd.f32 %v1974, %v2180
    %v2182 = vpop.f32.mrb[0].mxu0
    %v2183 = vadd.f32 %v1974, %v2182
    %2184 = vmatprep.mubr.f32.mxu0 0.0
    %2185 = vmatmul.mubr.f32.gmra.mrb[0].mxu0 %v2028
    %v2186 = vpop.f32.mrb[0].mxu0
    %v2187 = vadd.f32 %v1979, %v2186
    %v2188 = vpop.f32.mrb[0].mxu0
    %v2189 = vadd.f32 %v1979, %v2188
    %2190 = vdwg.mxu0
    %2191 = vmatprep.subr.mxu0 %v1856
    %2192 = vmatpush1.msra.mxu0 %v1855
    %2193 = vmatprep.subr.mxu0 %v1864
    %2194 = vmatpush1.msra.mxu0 %v1863
    %2195 = vmatprep.subr.mxu0 0.0
    %2196 = vmatpush1.msra.mxu0 0.0
    %2197 = vmatprep.subr.mxu0 0.0
    %2198 = vmatpush1.msra.mxu0 0.0
    %2199 = vmatprep.subr.mxu0 0.0
    %2200 = vmatpush1.msra.mxu0 0.0
    %2201 = vmatprep.subr.mxu0 0.0
    %2202 = vmatpush1.msra.mxu0 0.0
    %2203 = vmatprep.subr.mxu0 0.0
    %2204 = vmatpush1.msra.mxu0 0.0
    %2205 = vmatprep.subr.mxu0 0.0
    %2206 = vmatpush1.msra.mxu0 0.0
    %2207 = vmatprep.subr.mxu0 0.0
    %2208 = vmatpush1.msra.mxu0 0.0
    %2209 = vmatprep.subr.mxu0 0.0
    %2210 = vmatpush1.msra.mxu0 0.0
    %2211 = vmatprep.subr.mxu0 0.0
    %2212 = vmatpush1.msra.mxu0 0.0
    %2213 = vmatprep.subr.mxu0 0.0
    %2214 = vmatpush1.msra.mxu0 0.0
    %2215 = vmatprep.subr.mxu0 0.0
    %2216 = vmatpush1.msra.mxu0 0.0
    %2217 = vmatprep.subr.mxu0 0.0
    %2218 = vmatpush1.msra.mxu0 0.0
    %2219 = vmatprep.subr.mxu0 0.0
    %2220 = vmatpush1.msra.mxu0 0.0
    %2221 = vmatprep.subr.mxu0 0.0
    %2222 = vmatpush1.msra.mxu0 0.0
    %2223 = vmatprep.subr.mxu0 0.0
    %2224 = vmatpush1.msra.mxu0 0.0
    %2225 = vmatprep.subr.mxu0 0.0
    %2226 = vmatpush1.msra.mxu0 0.0
    %2227 = vmatprep.subr.mxu0 0.0
    %2228 = vmatpush1.msra.mxu0 0.0
    %2229 = vmatprep.subr.mxu0 0.0
    %2230 = vmatpush1.msra.mxu0 0.0
    %2231 = vmatprep.subr.mxu0 0.0
    %2232 = vmatpush1.msra.mxu0 0.0
    %2233 = vmatprep.subr.mxu0 0.0
    %2234 = vmatpush1.msra.mxu0 0.0
    %2235 = vmatprep.subr.mxu0 0.0
    %2236 = vmatpush1.msra.mxu0 0.0
    %2237 = vmatprep.subr.mxu0 0.0
    %2238 = vmatpush1.msra.mxu0 0.0
    %2239 = vmatprep.subr.mxu0 0.0
    %2240 = vmatpush1.msra.mxu0 0.0
    %2241 = vmatprep.subr.mxu0 0.0
    %2242 = vmatpush1.msra.mxu0 0.0
    %2243 = vmatprep.subr.mxu0 0.0
    %2244 = vmatpush1.msra.mxu0 0.0
    %2245 = vmatprep.subr.mxu0 0.0
    %2246 = vmatpush1.msra.mxu0 0.0
    %2247 = vmatprep.subr.mxu0 0.0
    %2248 = vmatpush1.msra.mxu0 0.0
    %2249 = vmatprep.subr.mxu0 0.0
    %2250 = vmatpush1.msra.mxu0 0.0
    %2251 = vmatprep.subr.mxu0 0.0
    %2252 = vmatpush1.msra.mxu0 0.0
    %2253 = vmatprep.subr.mxu0 0.0
    %2254 = vmatpush1.msra.mxu0 0.0
    %2255 = vmatprep.mubr.f32.mxu0 0.0
    %2256 = vmatmul.mubr.f32.gmra.mrb[0].mxu0 %v1983
    %v2257 = vpop.f32.mrb[0].mxu0
    %v2258 = vadd.f32 %v1904, %v2257
    %v2259 = vpop.f32.mrb[0].mxu0
    %v2260 = vadd.f32 %v1904, %v2259
    %2261 = vmatprep.mubr.f32.mxu0 0.0
    %2262 = vmatmul.mubr.f32.gmra.mrb[0].mxu0 %v1986
    %v2263 = vpop.f32.mrb[0].mxu0
    %v2264 = vadd.f32 %v1909, %v2263
    %v2265 = vpop.f32.mrb[0].mxu0
    %v2266 = vadd.f32 %v1909, %v2265
    %2267 = vmatprep.mubr.f32.mxu0 0.0
    %2268 = vmatmul.mubr.f32.gmra.mrb[0].mxu0 %v1989
    %v2269 = vpop.f32.mrb[0].mxu0
    %v2270 = vadd.f32 %v1914, %v2269
    %v2271 = vpop.f32.mrb[0].mxu0
    %v2272 = vadd.f32 %v1914, %v2271
    %2273 = vmatprep.mubr.f32.mxu0 0.0
    %2274 = vmatmul.mubr.f32.gmra.mrb[0].mxu0 %v1992
    %v2275 = vpop.f32.mrb[0].mxu0
    %v2276 = vadd.f32 %v1919, %v2275
    %v2277 = vpop.f32.mrb[0].mxu0
    %v2278 = vadd.f32 %v1919, %v2277
    %2279 = vmatprep.mubr.f32.mxu0 0.0
    %2280 = vmatmul.mubr.f32.gmra.mrb[0].mxu0 %v1995
    %v2281 = vpop.f32.mrb[0].mxu0
    %v2282 = vadd.f32 %v1924, %v2281
    %v2283 = vpop.f32.mrb[0].mxu0
    %v2284 = vadd.f32 %v1924, %v2283
    %2285 = vmatprep.mubr.f32.mxu0 0.0
    %2286 = vmatmul.mubr.f32.gmra.mrb[0].mxu0 %v1998
    %v2287 = vpop.f32.mrb[0].mxu0
    %v2288 = vadd.f32 %v1929, %v2287
    %v2289 = vpop.f32.mrb[0].mxu0
    %v2290 = vadd.f32 %v1929, %v2289
    %2291 = vmatprep.mubr.f32.mxu0 0.0
    %2292 = vmatmul.mubr.f32.gmra.mrb[0].mxu0 %v2001
    %v2293 = vpop.f32.mrb[0].mxu0
    %v2294 = vadd.f32 %v1934, %v2293
    %v2295 = vpop.f32.mrb[0].mxu0
    %v2296 = vadd.f32 %v1934, %v2295
    %2297 = vmatprep.mubr.f32.mxu0 0.0
    %2298 = vmatmul.mubr.f32.gmra.mrb[0].mxu0 %v2004
    %v2299 = vpop.f32.mrb[0].mxu0
    %v2300 = vadd.f32 %v1939, %v2299
    %v2301 = vpop.f32.mrb[0].mxu0
    %v2302 = vadd.f32 %v1939, %v2301
    %2303 = vmatprep.mubr.f32.mxu0 0.0
    %2304 = vmatmul.mubr.f32.gmra.mrb[0].mxu0 %v2007
    %v2305 = vpop.f32.mrb[0].mxu0
    %v2306 = vadd.f32 %v1944, %v2305
    %v2307 = vpop.f32.mrb[0].mxu0
    %v2308 = vadd.f32 %v1944, %v2307
    %2309 = vmatprep.mubr.f32.mxu0 0.0
    %2310 = vmatmul.mubr.f32.gmra.mrb[0].mxu0 %v2010
    %v2311 = vpop.f32.mrb[0].mxu0
    %v2312 = vadd.f32 %v1949, %v2311
    %v2313 = vpop.f32.mrb[0].mxu0
    %v2314 = vadd.f32 %v1949, %v2313
    %2315 = vmatprep.mubr.f32.mxu0 0.0
    %2316 = vmatmul.mubr.f32.gmra.mrb[0].mxu0 %v2013
    %v2317 = vpop.f32.mrb[0].mxu0
    %v2318 = vadd.f32 %v1954, %v2317
    %v2319 = vpop.f32.mrb[0].mxu0
    %v2320 = vadd.f32 %v1954, %v2319
    %2321 = vmatprep.mubr.f32.mxu0 0.0
    %2322 = vmatmul.mubr.f32.gmra.mrb[0].mxu0 %v2016
    %v2323 = vpop.f32.mrb[0].mxu0
    %v2324 = vadd.f32 %v1959, %v2323
    %v2325 = vpop.f32.mrb[0].mxu0
    %v2326 = vadd.f32 %v1959, %v2325
    %2327 = vmatprep.mubr.f32.mxu0 0.0
    %2328 = vmatmul.mubr.f32.gmra.mrb[0].mxu0 %v2019
    %v2329 = vpop.f32.mrb[0].mxu0
    %v2330 = vadd.f32 %v1964, %v2329
    %v2331 = vpop.f32.mrb[0].mxu0
    %v2332 = vadd.f32 %v1964, %v2331
    %2333 = vmatprep.mubr.f32.mxu0 0.0
    %2334 = vmatmul.mubr.f32.gmra.mrb[0].mxu0 %v2022
    %v2335 = vpop.f32.mrb[0].mxu0
    %v2336 = vadd.f32 %v1969, %v2335
    %v2337 = vpop.f32.mrb[0].mxu0
    %v2338 = vadd.f32 %v1969, %v2337
    %2339 = vmatprep.mubr.f32.mxu0 0.0
    %2340 = vmatmul.mubr.f32.gmra.mrb[0].mxu0 %v2025
    %v2341 = vpop.f32.mrb[0].mxu0
    %v2342 = vadd.f32 %v1974, %v2341
    %v2343 = vpop.f32.mrb[0].mxu0
    %v2344 = vadd.f32 %v1974, %v2343
    %2345 = vmatprep.mubr.f32.mxu0 0.0
    %2346 = vmatmul.mubr.f32.gmra.mrb[0].mxu0 %v2028
    %v2347 = vpop.f32.mrb[0].mxu0
    %v2348 = vadd.f32 %v1979, %v2347
    %v2349 = vpop.f32.mrb[0].mxu0
    %v2350 = vadd.f32 %v1979, %v2349
    %2351 = vdwg.mxu0
    %2352 = vmatprep.subr.mxu0 %v1858
    %2353 = vmatpush1.msra.mxu0 %v1857
    %2354 = vmatprep.subr.mxu0 %v1866
    %2355 = vmatpush1.msra.mxu0 %v1865
    %2356 = vmatprep.subr.mxu0 0.0
    %2357 = vmatpush1.msra.mxu0 0.0
    %2358 = vmatprep.subr.mxu0 0.0
    %2359 = vmatpush1.msra.mxu0 0.0
    %2360 = vmatprep.subr.mxu0 0.0
    %2361 = vmatpush1.msra.mxu0 0.0
    %2362 = vmatprep.subr.mxu0 0.0
    %2363 = vmatpush1.msra.mxu0 0.0
    %2364 = vmatprep.subr.mxu0 0.0
    %2365 = vmatpush1.msra.mxu0 0.0
    %2366 = vmatprep.subr.mxu0 0.0
    %2367 = vmatpush1.msra.mxu0 0.0
    %2368 = vmatprep.subr.mxu0 0.0
    %2369 = vmatpush1.msra.mxu0 0.0
    %2370 = vmatprep.subr.mxu0 0.0
    %2371 = vmatpush1.msra.mxu0 0.0
    %2372 = vmatprep.subr.mxu0 0.0
    %2373 = vmatpush1.msra.mxu0 0.0
    %2374 = vmatprep.subr.mxu0 0.0
    %2375 = vmatpush1.msra.mxu0 0.0
    %2376 = vmatprep.subr.mxu0 0.0
    %2377 = vmatpush1.msra.mxu0 0.0
    %2378 = vmatprep.subr.mxu0 0.0
    %2379 = vmatpush1.msra.mxu0 0.0
    %2380 = vmatprep.subr.mxu0 0.0
    %2381 = vmatpush1.msra.mxu0 0.0
    %2382 = vmatprep.subr.mxu0 0.0
    %2383 = vmatpush1.msra.mxu0 0.0
    %2384 = vmatprep.subr.mxu0 0.0
    %2385 = vmatpush1.msra.mxu0 0.0
    %2386 = vmatprep.subr.mxu0 0.0
    %2387 = vmatpush1.msra.mxu0 0.0
    %2388 = vmatprep.subr.mxu0 0.0
    %2389 = vmatpush1.msra.mxu0 0.0
    %2390 = vmatprep.subr.mxu0 0.0
    %2391 = vmatpush1.msra.mxu0 0.0
    %2392 = vmatprep.subr.mxu0 0.0
    %2393 = vmatpush1.msra.mxu0 0.0
    %2394 = vmatprep.subr.mxu0 0.0
    %2395 = vmatpush1.msra.mxu0 0.0
    %2396 = vmatprep.subr.mxu0 0.0
    %2397 = vmatpush1.msra.mxu0 0.0
    %2398 = vmatprep.subr.mxu0 0.0
    %2399 = vmatpush1.msra.mxu0 0.0
    %2400 = vmatprep.subr.mxu0 0.0
    %2401 = vmatpush1.msra.mxu0 0.0
    %2402 = vmatprep.subr.mxu0 0.0
    %2403 = vmatpush1.msra.mxu0 0.0
    %2404 = vmatprep.subr.mxu0 0.0
    %2405 = vmatpush1.msra.mxu0 0.0
    %2406 = vmatprep.subr.mxu0 0.0
    %2407 = vmatpush1.msra.mxu0 0.0
    %2408 = vmatprep.subr.mxu0 0.0
    %2409 = vmatpush1.msra.mxu0 0.0
    %2410 = vmatprep.subr.mxu0 0.0
    %2411 = vmatpush1.msra.mxu0 0.0
    %2412 = vmatprep.subr.mxu0 0.0
    %2413 = vmatpush1.msra.mxu0 0.0
    %2414 = vmatprep.subr.mxu0 0.0
    %2415 = vmatpush1.msra.mxu0 0.0
    %2416 = vmatprep.mubr.f32.mxu0 0.0
    %2417 = vmatmul.mubr.f32.gmra.mrb[0].mxu0 %v1983
    %v2418 = vpop.f32.mrb[0].mxu0
    %v2419 = vadd.f32 %v1904, %v2418
    %v2420 = vpop.f32.mrb[0].mxu0
    %v2421 = vadd.f32 %v1904, %v2420
    %2422 = vmatprep.mubr.f32.mxu0 0.0
    %2423 = vmatmul.mubr.f32.gmra.mrb[0].mxu0 %v1986
    %v2424 = vpop.f32.mrb[0].mxu0
    %v2425 = vadd.f32 %v1909, %v2424
    %v2426 = vpop.f32.mrb[0].mxu0
    %v2427 = vadd.f32 %v1909, %v2426
    %2428 = vmatprep.mubr.f32.mxu0 0.0
    %2429 = vmatmul.mubr.f32.gmra.mrb[0].mxu0 %v1989
    %v2430 = vpop.f32.mrb[0].mxu0
    %v2431 = vadd.f32 %v1914, %v2430
    %v2432 = vpop.f32.mrb[0].mxu0
    %v2433 = vadd.f32 %v1914, %v2432
    %2434 = vmatprep.mubr.f32.mxu0 0.0
    %2435 = vmatmul.mubr.f32.gmra.mrb[0].mxu0 %v1992
    %v2436 = vpop.f32.mrb[0].mxu0
    %v2437 = vadd.f32 %v1919, %v2436
    %v2438 = vpop.f32.mrb[0].mxu0
    %v2439 = vadd.f32 %v1919, %v2438
    %2440 = vmatprep.mubr.f32.mxu0 0.0
    %2441 = vmatmul.mubr.f32.gmra.mrb[0].mxu0 %v1995
    %v2442 = vpop.f32.mrb[0].mxu0
    %v2443 = vadd.f32 %v1924, %v2442
    %v2444 = vpop.f32.mrb[0].mxu0
    %v2445 = vadd.f32 %v1924, %v2444
    %2446 = vmatprep.mubr.f32.mxu0 0.0
    %2447 = vmatmul.mubr.f32.gmra.mrb[0].mxu0 %v1998
    %v2448 = vpop.f32.mrb[0].mxu0
    %v2449 = vadd.f32 %v1929, %v2448
    %v2450 = vpop.f32.mrb[0].mxu0
    %v2451 = vadd.f32 %v1929, %v2450
    %2452 = vmatprep.mubr.f32.mxu0 0.0
    %2453 = vmatmul.mubr.f32.gmra.mrb[0].mxu0 %v2001
    %v2454 = vpop.f32.mrb[0].mxu0
    %v2455 = vadd.f32 %v1934, %v2454
    %v2456 = vpop.f32.mrb[0].mxu0
    %v2457 = vadd.f32 %v1934, %v2456
    %2458 = vmatprep.mubr.f32.mxu0 0.0
    %2459 = vmatmul.mubr.f32.gmra.mrb[0].mxu0 %v2004
    %v2460 = vpop.f32.mrb[0].mxu0
    %v2461 = vadd.f32 %v1939, %v2460
    %v2462 = vpop.f32.mrb[0].mxu0
    %v2463 = vadd.f32 %v1939, %v2462
    %2464 = vmatprep.mubr.f32.mxu0 0.0
    %2465 = vmatmul.mubr.f32.gmra.mrb[0].mxu0 %v2007
    %v2466 = vpop.f32.mrb[0].mxu0
    %v2467 = vadd.f32 %v1944, %v2466
    %v2468 = vpop.f32.mrb[0].mxu0
    %v2469 = vadd.f32 %v1944, %v2468
    %2470 = vmatprep.mubr.f32.mxu0 0.0
    %2471 = vmatmul.mubr.f32.gmra.mrb[0].mxu0 %v2010
    %v2472 = vpop.f32.mrb[0].mxu0
    %v2473 = vadd.f32 %v1949, %v2472
    %v2474 = vpop.f32.mrb[0].mxu0
    %v2475 = vadd.f32 %v1949, %v2474
    %2476 = vmatprep.mubr.f32.mxu0 0.0
    %2477 = vmatmul.mubr.f32.gmra.mrb[0].mxu0 %v2013
    %v2478 = vpop.f32.mrb[0].mxu0
    %v2479 = vadd.f32 %v1954, %v2478
    %v2480 = vpop.f32.mrb[0].mxu0
    %v2481 = vadd.f32 %v1954, %v2480
    %2482 = vmatprep.mubr.f32.mxu0 0.0
    %2483 = vmatmul.mubr.f32.gmra.mrb[0].mxu0 %v2016
    %v2484 = vpop.f32.mrb[0].mxu0
    %v2485 = vadd.f32 %v1959, %v2484
    %v2486 = vpop.f32.mrb[0].mxu0
    %v2487 = vadd.f32 %v1959, %v2486
    %2488 = vmatprep.mubr.f32.mxu0 0.0
    %2489 = vmatmul.mubr.f32.gmra.mrb[0].mxu0 %v2019
    %v2490 = vpop.f32.mrb[0].mxu0
    %v2491 = vadd.f32 %v1964, %v2490
    %v2492 = vpop.f32.mrb[0].mxu0
    %v2493 = vadd.f32 %v1964, %v2492
    %2494 = vmatprep.mubr.f32.mxu0 0.0
    %2495 = vmatmul.mubr.f32.gmra.mrb[0].mxu0 %v2022
    %v2496 = vpop.f32.mrb[0].mxu0
    %v2497 = vadd.f32 %v1969, %v2496
    %v2498 = vpop.f32.mrb[0].mxu0
    %v2499 = vadd.f32 %v1969, %v2498
    %2500 = vmatprep.mubr.f32.mxu0 0.0
    %2501 = vmatmul.mubr.f32.gmra.mrb[0].mxu0 %v2025
    %v2502 = vpop.f32.mrb[0].mxu0
    %v2503 = vadd.f32 %v1974, %v2502
    %v2504 = vpop.f32.mrb[0].mxu0
    %v2505 = vadd.f32 %v1974, %v2504
    %2506 = vmatprep.mubr.f32.mxu0 0.0
    %2507 = vmatmul.mubr.f32.gmra.mrb[0].mxu0 %v2028
    %v2508 = vpop.f32.mrb[0].mxu0
    %v2509 = vadd.f32 %v1979, %v2508
    %v2510 = vpop.f32.mrb[0].mxu0
    %v2511 = vadd.f32 %v1979, %v2510
    %2512 = vdwg.mxu0
    %2513 = vmatprep.subr.mxu0 %v1860
    %2514 = vmatpush1.msra.mxu0 %v1859
    %2515 = vmatprep.subr.mxu0 %v1868
    %2516 = vmatpush1.msra.mxu0 %v1867
    %2517 = vmatprep.subr.mxu0 0.0
    %2518 = vmatpush1.msra.mxu0 0.0
    %2519 = vmatprep.subr.mxu0 0.0
    %2520 = vmatpush1.msra.mxu0 0.0
    %2521 = vmatprep.subr.mxu0 0.0
    %2522 = vmatpush1.msra.mxu0 0.0
    %2523 = vmatprep.subr.mxu0 0.0
    %2524 = vmatpush1.msra.mxu0 0.0
    %2525 = vmatprep.subr.mxu0 0.0
    %2526 = vmatpush1.msra.mxu0 0.0
    %2527 = vmatprep.subr.mxu0 0.0
    %2528 = vmatpush1.msra.mxu0 0.0
    %2529 = vmatprep.subr.mxu0 0.0
    %2530 = vmatpush1.msra.mxu0 0.0
    %2531 = vmatprep.subr.mxu0 0.0
    %2532 = vmatpush1.msra.mxu0 0.0
    %2533 = vmatprep.subr.mxu0 0.0
    %2534 = vmatpush1.msra.mxu0 0.0
    %2535 = vmatprep.subr.mxu0 0.0
    %2536 = vmatpush1.msra.mxu0 0.0
    %2537 = vmatprep.subr.mxu0 0.0
    %2538 = vmatpush1.msra.mxu0 0.0
    %2539 = vmatprep.subr.mxu0 0.0
    %2540 = vmatpush1.msra.mxu0 0.0
    %2541 = vmatprep.subr.mxu0 0.0
    %2542 = vmatpush1.msra.mxu0 0.0
    %2543 = vmatprep.subr.mxu0 0.0
    %2544 = vmatpush1.msra.mxu0 0.0
    %2545 = vmatprep.subr.mxu0 0.0
    %2546 = vmatpush1.msra.mxu0 0.0
    %2547 = vmatprep.subr.mxu0 0.0
    %2548 = vmatpush1.msra.mxu0 0.0
    %2549 = vmatprep.subr.mxu0 0.0
    %2550 = vmatpush1.msra.mxu0 0.0
    %2551 = vmatprep.subr.mxu0 0.0
    %2552 = vmatpush1.msra.mxu0 0.0
    %2553 = vmatprep.subr.mxu0 0.0
    %2554 = vmatpush1.msra.mxu0 0.0
    %2555 = vmatprep.subr.mxu0 0.0
    %2556 = vmatpush1.msra.mxu0 0.0
    %2557 = vmatprep.subr.mxu0 0.0
    %2558 = vmatpush1.msra.mxu0 0.0
    %2559 = vmatprep.subr.mxu0 0.0
    %2560 = vmatpush1.msra.mxu0 0.0
    %2561 = vmatprep.subr.mxu0 0.0
    %2562 = vmatpush1.msra.mxu0 0.0
    %2563 = vmatprep.subr.mxu0 0.0
    %2564 = vmatpush1.msra.mxu0 0.0
    %2565 = vmatprep.subr.mxu0 0.0
    %2566 = vmatpush1.msra.mxu0 0.0
    %2567 = vmatprep.subr.mxu0 0.0
    %2568 = vmatpush1.msra.mxu0 0.0
    %2569 = vmatprep.subr.mxu0 0.0
    %2570 = vmatpush1.msra.mxu0 0.0
    %2571 = vmatprep.subr.mxu0 0.0
    %2572 = vmatpush1.msra.mxu0 0.0
    %2573 = vmatprep.subr.mxu0 0.0
    %2574 = vmatpush1.msra.mxu0 0.0
    %2575 = vmatprep.subr.mxu0 0.0
    %2576 = vmatpush1.msra.mxu0 0.0
    %2577 = vmatprep.mubr.f32.mxu0 0.0
    %2578 = vmatmul.mubr.f32.gmra.mrb[0].mxu0 %v1983
    %v2579 = vpop.f32.mrb[0].mxu0
    %v2580 = vadd.f32 %v1904, %v2579
    %v2581 = vpop.f32.mrb[0].mxu0
    %v2582 = vadd.f32 %v1904, %v2581
    %2583 = vmatprep.mubr.f32.mxu0 0.0
    %2584 = vmatmul.mubr.f32.gmra.mrb[0].mxu0 %v1986
    %v2585 = vpop.f32.mrb[0].mxu0
    %v2586 = vadd.f32 %v1909, %v2585
    %v2587 = vpop.f32.mrb[0].mxu0
    %v2588 = vadd.f32 %v1909, %v2587
    %2589 = vmatprep.mubr.f32.mxu0 0.0
    %2590 = vmatmul.mubr.f32.gmra.mrb[0].mxu0 %v1989
    %v2591 = vpop.f32.mrb[0].mxu0
    %v2592 = vadd.f32 %v1914, %v2591
    %v2593 = vpop.f32.mrb[0].mxu0
    %v2594 = vadd.f32 %v1914, %v2593
    %2595 = vmatprep.mubr.f32.mxu0 0.0
    %2596 = vmatmul.mubr.f32.gmra.mrb[0].mxu0 %v1992
    %v2597 = vpop.f32.mrb[0].mxu0
    %v2598 = vadd.f32 %v1919, %v2597
    %v2599 = vpop.f32.mrb[0].mxu0
    %v2600 = vadd.f32 %v1919, %v2599
    %2601 = vmatprep.mubr.f32.mxu0 0.0
    %2602 = vmatmul.mubr.f32.gmra.mrb[0].mxu0 %v1995
    %v2603 = vpop.f32.mrb[0].mxu0
    %v2604 = vadd.f32 %v1924, %v2603
    %v2605 = vpop.f32.mrb[0].mxu0
    %v2606 = vadd.f32 %v1924, %v2605
    %2607 = vmatprep.mubr.f32.mxu0 0.0
    %2608 = vmatmul.mubr.f32.gmra.mrb[0].mxu0 %v1998
    %v2609 = vpop.f32.mrb[0].mxu0
    %v2610 = vadd.f32 %v1929, %v2609
    %v2611 = vpop.f32.mrb[0].mxu0
    %v2612 = vadd.f32 %v1929, %v2611
    %2613 = vmatprep.mubr.f32.mxu0 0.0
    %2614 = vmatmul.mubr.f32.gmra.mrb[0].mxu0 %v2001
    %v2615 = vpop.f32.mrb[0].mxu0
    %v2616 = vadd.f32 %v1934, %v2615
    %v2617 = vpop.f32.mrb[0].mxu0
    %v2618 = vadd.f32 %v1934, %v2617
    %2619 = vmatprep.mubr.f32.mxu0 0.0
    %2620 = vmatmul.mubr.f32.gmra.mrb[0].mxu0 %v2004
    %v2621 = vpop.f32.mrb[0].mxu0
    %v2622 = vadd.f32 %v1939, %v2621
    %v2623 = vpop.f32.mrb[0].mxu0
    %v2624 = vadd.f32 %v1939, %v2623
    %2625 = vmatprep.mubr.f32.mxu0 0.0
    %2626 = vmatmul.mubr.f32.gmra.mrb[0].mxu0 %v2007
    %v2627 = vpop.f32.mrb[0].mxu0
    %v2628 = vadd.f32 %v1944, %v2627
    %v2629 = vpop.f32.mrb[0].mxu0
    %v2630 = vadd.f32 %v1944, %v2629
    %2631 = vmatprep.mubr.f32.mxu0 0.0
    %2632 = vmatmul.mubr.f32.gmra.mrb[0].mxu0 %v2010
    %v2633 = vpop.f32.mrb[0].mxu0
    %v2634 = vadd.f32 %v1949, %v2633
    %v2635 = vpop.f32.mrb[0].mxu0
    %v2636 = vadd.f32 %v1949, %v2635
    %2637 = vmatprep.mubr.f32.mxu0 0.0
    %2638 = vmatmul.mubr.f32.gmra.mrb[0].mxu0 %v2013
    %v2639 = vpop.f32.mrb[0].mxu0
    %v2640 = vadd.f32 %v1954, %v2639
    %v2641 = vpop.f32.mrb[0].mxu0
    %v2642 = vadd.f32 %v1954, %v2641
    %2643 = vmatprep.mubr.f32.mxu0 0.0
    %2644 = vmatmul.mubr.f32.gmra.mrb[0].mxu0 %v2016
    %v2645 = vpop.f32.mrb[0].mxu0
    %v2646 = vadd.f32 %v1959, %v2645
    %v2647 = vpop.f32.mrb[0].mxu0
    %v2648 = vadd.f32 %v1959, %v2647
    %2649 = vmatprep.mubr.f32.mxu0 0.0
    %2650 = vmatmul.mubr.f32.gmra.mrb[0].mxu0 %v2019
    %v2651 = vpop.f32.mrb[0].mxu0
    %v2652 = vadd.f32 %v1964, %v2651
    %v2653 = vpop.f32.mrb[0].mxu0
    %v2654 = vadd.f32 %v1964, %v2653
    %2655 = vmatprep.mubr.f32.mxu0 0.0
    %2656 = vmatmul.mubr.f32.gmra.mrb[0].mxu0 %v2022
    %v2657 = vpop.f32.mrb[0].mxu0
    %v2658 = vadd.f32 %v1969, %v2657
    %v2659 = vpop.f32.mrb[0].mxu0
    %v2660 = vadd.f32 %v1969, %v2659
    %2661 = vmatprep.mubr.f32.mxu0 0.0
    %2662 = vmatmul.mubr.f32.gmra.mrb[0].mxu0 %v2025
    %v2663 = vpop.f32.mrb[0].mxu0
    %v2664 = vadd.f32 %v1974, %v2663
    %v2665 = vpop.f32.mrb[0].mxu0
    %v2666 = vadd.f32 %v1974, %v2665
    %2667 = vmatprep.mubr.f32.mxu0 0.0
    %2668 = vmatmul.mubr.f32.gmra.mrb[0].mxu0 %v2028
    %v2669 = vpop.f32.mrb[0].mxu0
    %v2670 = vadd.f32 %v1979, %v2669
    %v2671 = vpop.f32.mrb[0].mxu0
    %v2672 = vadd.f32 %v1979, %v2671
    %2673 = vdwg.mxu0
    %v2674 = vmul.f32 %v2097, 0.01
    %v2675 = vmul.f32 %v2099, 0.01
    %v2676 = vmul.f32 %v2258, 0.01
    %v2677 = vmul.f32 %v2260, 0.01
    %v2678 = vmul.f32 %v2419, 0.01
    %v2679 = vmul.f32 %v2421, 0.01
    %v2680 = vmul.f32 %v2580, 0.01
    %v2681 = vmul.f32 %v2582, 0.01
    %v2682 = vmul.f32 %v2103, 0.01
    %v2683 = vmul.f32 %v2105, 0.01
    %v2684 = vmul.f32 %v2264, 0.01
    %v2685 = vmul.f32 %v2266, 0.01
    %v2686 = vmul.f32 %v2425, 0.01
    %v2687 = vmul.f32 %v2427, 0.01
    %v2688 = vmul.f32 %v2586, 0.01
    %v2689 = vmul.f32 %v2588, 0.01
    %v2690 = vmul.f32 %v2109, 0.01
    %v2691 = vmul.f32 %v2111, 0.01
    %v2692 = vmul.f32 %v2270, 0.01
    %v2693 = vmul.f32 %v2272, 0.01
    %v2694 = vmul.f32 %v2431, 0.01
    %v2695 = vmul.f32 %v2433, 0.01
    %v2696 = vmul.f32 %v2592, 0.01
    %v2697 = vmul.f32 %v2594, 0.01
    %v2698 = vmul.f32 %v2115, 0.01
    %v2699 = vmul.f32 %v2117, 0.01
    %v2700 = vmul.f32 %v2276, 0.01
    %v2701 = vmul.f32 %v2278, 0.01
    %v2702 = vmul.f32 %v2437, 0.01
    %v2703 = vmul.f32 %v2439, 0.01
    %v2704 = vmul.f32 %v2598, 0.01
    %v2705 = vmul.f32 %v2600, 0.01
    %v2706 = vmul.f32 %v2121, 0.01
    %v2707 = vmul.f32 %v2123, 0.01
    %v2708 = vmul.f32 %v2282, 0.01
    %v2709 = vmul.f32 %v2284, 0.01
    %v2710 = vmul.f32 %v2443, 0.01
    %v2711 = vmul.f32 %v2445, 0.01
    %v2712 = vmul.f32 %v2604, 0.01
    %v2713 = vmul.f32 %v2606, 0.01
    %v2714 = vmul.f32 %v2127, 0.01
    %v2715 = vmul.f32 %v2129, 0.01
    %v2716 = vmul.f32 %v2288, 0.01
    %v2717 = vmul.f32 %v2290, 0.01
    %v2718 = vmul.f32 %v2449, 0.01
    %v2719 = vmul.f32 %v2451, 0.01
    %v2720 = vmul.f32 %v2610, 0.01
    %v2721 = vmul.f32 %v2612, 0.01
    %v2722 = vmul.f32 %v2133, 0.01
    %v2723 = vmul.f32 %v2135, 0.01
    %v2724 = vmul.f32 %v2294, 0.01
    %v2725 = vmul.f32 %v2296, 0.01
    %v2726 = vmul.f32 %v2455, 0.01
    %v2727 = vmul.f32 %v2457, 0.01
    %v2728 = vmul.f32 %v2616, 0.01
    %v2729 = vmul.f32 %v2618, 0.01
    %v2730 = vmul.f32 %v2139, 0.01
    %v2731 = vmul.f32 %v2141, 0.01
    %v2732 = vmul.f32 %v2300, 0.01
    %v2733 = vmul.f32 %v2302, 0.01
    %v2734 = vmul.f32 %v2461, 0.01
    %v2735 = vmul.f32 %v2463, 0.01
    %v2736 = vmul.f32 %v2622, 0.01
    %v2737 = vmul.f32 %v2624, 0.01
    %v2738 = vmul.f32 %v2145, 0.01
    %v2739 = vmul.f32 %v2147, 0.01
    %v2740 = vmul.f32 %v2306, 0.01
    %v2741 = vmul.f32 %v2308, 0.01
    %v2742 = vmul.f32 %v2467, 0.01
    %v2743 = vmul.f32 %v2469, 0.01
    %v2744 = vmul.f32 %v2628, 0.01
    %v2745 = vmul.f32 %v2630, 0.01
    %v2746 = vmul.f32 %v2151, 0.01
    %v2747 = vmul.f32 %v2153, 0.01
    %v2748 = vmul.f32 %v2312, 0.01
    %v2749 = vmul.f32 %v2314, 0.01
    %v2750 = vmul.f32 %v2473, 0.01
    %v2751 = vmul.f32 %v2475, 0.01
    %v2752 = vmul.f32 %v2634, 0.01
    %v2753 = vmul.f32 %v2636, 0.01
    %v2754 = vmul.f32 %v2157, 0.01
    %v2755 = vmul.f32 %v2159, 0.01
    %v2756 = vmul.f32 %v2318, 0.01
    %v2757 = vmul.f32 %v2320, 0.01
    %v2758 = vmul.f32 %v2479, 0.01
    %v2759 = vmul.f32 %v2481, 0.01
    %v2760 = vmul.f32 %v2640, 0.01
    %v2761 = vmul.f32 %v2642, 0.01
    %v2762 = vmul.f32 %v2163, 0.01
    %v2763 = vmul.f32 %v2165, 0.01
    %v2764 = vmul.f32 %v2324, 0.01
    %v2765 = vmul.f32 %v2326, 0.01
    %v2766 = vmul.f32 %v2485, 0.01
    %v2767 = vmul.f32 %v2487, 0.01
    %v2768 = vmul.f32 %v2646, 0.01
    %v2769 = vmul.f32 %v2648, 0.01
    %v2770 = vmul.f32 %v2169, 0.01
    %v2771 = vmul.f32 %v2171, 0.01
    %v2772 = vmul.f32 %v2330, 0.01
    %v2773 = vmul.f32 %v2332, 0.01
    %v2774 = vmul.f32 %v2491, 0.01
    %v2775 = vmul.f32 %v2493, 0.01
    %v2776 = vmul.f32 %v2652, 0.01
    %v2777 = vmul.f32 %v2654, 0.01
    %v2778 = vmul.f32 %v2175, 0.01
    %v2779 = vmul.f32 %v2177, 0.01
    %v2780 = vmul.f32 %v2336, 0.01
    %v2781 = vmul.f32 %v2338, 0.01
    %v2782 = vmul.f32 %v2497, 0.01
    %v2783 = vmul.f32 %v2499, 0.01
    %v2784 = vmul.f32 %v2658, 0.01
    %v2785 = vmul.f32 %v2660, 0.01
    %v2786 = vmul.f32 %v2181, 0.01
    %v2787 = vmul.f32 %v2183, 0.01
    %v2788 = vmul.f32 %v2342, 0.01
    %v2789 = vmul.f32 %v2344, 0.01
    %v2790 = vmul.f32 %v2503, 0.01
    %v2791 = vmul.f32 %v2505, 0.01
    %v2792 = vmul.f32 %v2664, 0.01
    %v2793 = vmul.f32 %v2666, 0.01
    %v2794 = vmul.f32 %v2187, 0.01
    %v2795 = vmul.f32 %v2189, 0.01
    %v2796 = vmul.f32 %v2348, 0.01
    %v2797 = vmul.f32 %v2350, 0.01
    %v2798 = vmul.f32 %v2509, 0.01
    %v2799 = vmul.f32 %v2511, 0.01
    %v2800 = vmul.f32 %v2670, 0.01
    %v2801 = vmul.f32 %v2672, 0.01
    %v2802 = vmax.f32 %v2097, %v2674
    %v2803 = vmax.f32 %v2099, %v2675
    %v2804 = vmax.f32 %v2258, %v2676
    %v2805 = vmax.f32 %v2260, %v2677
    %v2806 = vmax.f32 %v2419, %v2678
    %v2807 = vmax.f32 %v2421, %v2679
    %v2808 = vmax.f32 %v2580, %v2680
    %v2809 = vmax.f32 %v2582, %v2681
    %v2810 = vmax.f32 %v2103, %v2682
    %v2811 = vmax.f32 %v2105, %v2683
    %v2812 = vmax.f32 %v2264, %v2684
    %v2813 = vmax.f32 %v2266, %v2685
    %v2814 = vmax.f32 %v2425, %v2686
    %v2815 = vmax.f32 %v2427, %v2687
    %v2816 = vmax.f32 %v2586, %v2688
    %v2817 = vmax.f32 %v2588, %v2689
    %v2818 = vmax.f32 %v2109, %v2690
    %v2819 = vmax.f32 %v2111, %v2691
    %v2820 = vmax.f32 %v2270, %v2692
    %v2821 = vmax.f32 %v2272, %v2693
    %v2822 = vmax.f32 %v2431, %v2694
    %v2823 = vmax.f32 %v2433, %v2695
    %v2824 = vmax.f32 %v2592, %v2696
    %v2825 = vmax.f32 %v2594, %v2697
    %v2826 = vmax.f32 %v2115, %v2698
    %v2827 = vmax.f32 %v2117, %v2699
    %v2828 = vmax.f32 %v2276, %v2700
    %v2829 = vmax.f32 %v2278, %v2701
    %v2830 = vmax.f32 %v2437, %v2702
    %v2831 = vmax.f32 %v2439, %v2703
    %v2832 = vmax.f32 %v2598, %v2704
    %v2833 = vmax.f32 %v2600, %v2705
    %v2834 = vmax.f32 %v2121, %v2706
    %v2835 = vmax.f32 %v2123, %v2707
    %v2836 = vmax.f32 %v2282, %v2708
    %v2837 = vmax.f32 %v2284, %v2709
    %v2838 = vmax.f32 %v2443, %v2710
    %v2839 = vmax.f32 %v2445, %v2711
    %v2840 = vmax.f32 %v2604, %v2712
    %v2841 = vmax.f32 %v2606, %v2713
    %v2842 = vmax.f32 %v2127, %v2714
    %v2843 = vmax.f32 %v2129, %v2715
    %v2844 = vmax.f32 %v2288, %v2716
    %v2845 = vmax.f32 %v2290, %v2717
    %v2846 = vmax.f32 %v2449, %v2718
    %v2847 = vmax.f32 %v2451, %v2719
    %v2848 = vmax.f32 %v2610, %v2720
    %v2849 = vmax.f32 %v2612, %v2721
    %v2850 = vmax.f32 %v2133, %v2722
    %v2851 = vmax.f32 %v2135, %v2723
    %v2852 = vmax.f32 %v2294, %v2724
    %v2853 = vmax.f32 %v2296, %v2725
    %v2854 = vmax.f32 %v2455, %v2726
    %v2855 = vmax.f32 %v2457, %v2727
    %v2856 = vmax.f32 %v2616, %v2728
    %v2857 = vmax.f32 %v2618, %v2729
    %v2858 = vmax.f32 %v2139, %v2730
    %v2859 = vmax.f32 %v2141, %v2731
    %v2860 = vmax.f32 %v2300, %v2732
    %v2861 = vmax.f32 %v2302, %v2733
    %v2862 = vmax.f32 %v2461, %v2734
    %v2863 = vmax.f32 %v2463, %v2735
    %v2864 = vmax.f32 %v2622, %v2736
    %v2865 = vmax.f32 %v2624, %v2737
    %v2866 = vmax.f32 %v2145, %v2738
    %v2867 = vmax.f32 %v2147, %v2739
    %v2868 = vmax.f32 %v2306, %v2740
    %v2869 = vmax.f32 %v2308, %v2741
    %v2870 = vmax.f32 %v2467, %v2742
    %v2871 = vmax.f32 %v2469, %v2743
    %v2872 = vmax.f32 %v2628, %v2744
    %v2873 = vmax.f32 %v2630, %v2745
    %v2874 = vmax.f32 %v2151, %v2746
    %v2875 = vmax.f32 %v2153, %v2747
    %v2876 = vmax.f32 %v2312, %v2748
    %v2877 = vmax.f32 %v2314, %v2749
    %v2878 = vmax.f32 %v2473, %v2750
    %v2879 = vmax.f32 %v2475, %v2751
    %v2880 = vmax.f32 %v2634, %v2752
    %v2881 = vmax.f32 %v2636, %v2753
    %v2882 = vmax.f32 %v2157, %v2754
    %v2883 = vmax.f32 %v2159, %v2755
    %v2884 = vmax.f32 %v2318, %v2756
    %v2885 = vmax.f32 %v2320, %v2757
    %v2886 = vmax.f32 %v2479, %v2758
    %v2887 = vmax.f32 %v2481, %v2759
    %v2888 = vmax.f32 %v2640, %v2760
    %v2889 = vmax.f32 %v2642, %v2761
    %v2890 = vmax.f32 %v2163, %v2762
    %v2891 = vmax.f32 %v2165, %v2763
    %v2892 = vmax.f32 %v2324, %v2764
    %v2893 = vmax.f32 %v2326, %v2765
    %v2894 = vmax.f32 %v2485, %v2766
    %v2895 = vmax.f32 %v2487, %v2767
    %v2896 = vmax.f32 %v2646, %v2768
    %v2897 = vmax.f32 %v2648, %v2769
    %v2898 = vmax.f32 %v2169, %v2770
    %v2899 = vmax.f32 %v2171, %v2771
    %v2900 = vmax.f32 %v2330, %v2772
    %v2901 = vmax.f32 %v2332, %v2773
    %v2902 = vmax.f32 %v2491, %v2774
    %v2903 = vmax.f32 %v2493, %v2775
    %v2904 = vmax.f32 %v2652, %v2776
    %v2905 = vmax.f32 %v2654, %v2777
    %v2906 = vmax.f32 %v2175, %v2778
    %v2907 = vmax.f32 %v2177, %v2779
    %v2908 = vmax.f32 %v2336, %v2780
    %v2909 = vmax.f32 %v2338, %v2781
    %v2910 = vmax.f32 %v2497, %v2782
    %v2911 = vmax.f32 %v2499, %v2783
    %v2912 = vmax.f32 %v2658, %v2784
    %v2913 = vmax.f32 %v2660, %v2785
    %v2914 = vmax.f32 %v2181, %v2786
    %v2915 = vmax.f32 %v2183, %v2787
    %v2916 = vmax.f32 %v2342, %v2788
    %v2917 = vmax.f32 %v2344, %v2789
    %v2918 = vmax.f32 %v2503, %v2790
    %v2919 = vmax.f32 %v2505, %v2791
    %v2920 = vmax.f32 %v2664, %v2792
    %v2921 = vmax.f32 %v2666, %v2793
    %v2922 = vmax.f32 %v2187, %v2794
    %v2923 = vmax.f32 %v2189, %v2795
    %v2924 = vmax.f32 %v2348, %v2796
    %v2925 = vmax.f32 %v2350, %v2797
    %v2926 = vmax.f32 %v2509, %v2798
    %v2927 = vmax.f32 %v2511, %v2799
    %v2928 = vmax.f32 %v2670, %v2800
    %v2929 = vmax.f32 %v2672, %v2801
    %v2930 = vmul.f32 %v18, 0.62831855
    %v2931 = vand.u32 2147483647, %v2930
    %vm2932 = vcmp.le.f32.partialorder %v2931, 0.7853982
    %vm2933 = vcmp.lt.s32.totalorder %v2930, 0
    %v2934 = vand.u32 %v2930, 2139095040
    %v2935 = vshrl.u32 %v2934, 23
    %v2936 = vsub.s32 %v2935, 127
    %v2937 = vand.u32 2147483647, %v2930
    %v2938 = vand.u32 %v2937, 8388607
    %v2939 = vor.u32 %v2938, 8388608
    %v2940 = vsub.s32 0, %v2939
    %v2941 = vadd.s32 %v2936, 1
    %vm2942 = vcmp.gt.s32.totalorder %v2941, 0
    %v2943 = vsel %vm2942, %v2941, 0
    %v2944 = vshrl.u32 %v2943, 5
    %v2945 = vand.u32 %v2943, 31
    %v2946 = vsub.s32 32, %v2945
    %v2947 = vshrl.u32 683565275, %v2946
    %v2948 = vshll.u32 683565275, %v2945
    %v2949 = vshrl.u32 2475754826, %v2946
    %v2950 = vor.u32 %v2948, %v2949
    %v2951 = vshll.u32 2475754826, %v2945
    %v2952 = vshrl.u32 2131351028, %v2946
    %v2953 = vor.u32 %v2951, %v2952
    %v2954 = vshll.u32 2131351028, %v2945
    %v2955 = vshrl.u32 2102212464, %v2946
    %v2956 = vor.u32 %v2954, %v2955
    %v2957 = vshll.u32 2102212464, %v2945
    %v2958 = vshrl.u32 920167782, %v2946
    %v2959 = vor.u32 %v2957, %v2958
    %v2960 = vshll.u32 920167782, %v2945
    %v2961 = vshrl.u32 1326507024, %v2946
    %v2962 = vor.u32 %v2960, %v2961
    %vm2963 = vcmp.lt.s32.totalorder %v2944, 1
    %vm2964 = vcmp.lt.s32.totalorder %v2944, 2
    %vm2965 = vcmp.lt.s32.totalorder %v2944, 3
    %vm2966 = vcmp.lt.s32.totalorder %v2944, 4
    %v2967 = vsel %vm2963, %v2947, %v2950
    %v2968 = vsel %vm2966, %v2956, 2102212464
    %v2969 = vsel %vm2965, %v2953, %v2968
    %v2970 = vsel %vm2964, %v2967, %v2969
    %v2971 = vsel %vm2963, %v2950, %v2953
    %v2972 = vsel %vm2966, %v2959, 920167782
    %v2973 = vsel %vm2965, %v2956, %v2972
    %v2974 = vsel %vm2964, %v2971, %v2973
    %v2975 = vsel %vm2963, %v2953, %v2956
    %v2976 = vsel %vm2966, %v2962, 1326507024
    %v2977 = vsel %vm2965, %v2959, %v2976
    %v2978 = vsel %vm2964, %v2975, %v2977
    %v2979 = vshll.u32 %v2939, 8
    %v2980 = vmul.u32.u64.compose %v2979, %v2978
    %v2981 = vextract.low.u32 %v2980
    %v2982 = vextract.high.u32 %v2980
    %v2983 = vmul.u32.u64.compose %v2979, %v2974
    %v2984 = vextract.low.u32 %v2983
    %v2985 = vextract.high.u32 %v2983
    %v2986 = vmul.u32 %v2979, %v2970
    %v2987 = vadd.s32 %v2982, %v2984
    %vm2988 = vc.u32 %v2982, %v2984
    %v2989 = vadd.s32 %v2985, 1
    %v2990 = vsel %vm2988, %v2989, %v2985
    %v2991 = vadd.s32 %v2986, %v2990
    %v2992 = vadd.s32 %v2991, 536870912
    %v2993 = vshrl.u32 %v2992, 30
    %v2994 = vshll.u32 %v2993, 30
    %v2995 = vsub.s32 %v2991, %v2994
    %vm2996 = vcmp.lt.s32.totalorder %v2995, 0
    %v2997 = vsub.s32 0, %v2995
    %v2998 = vsel %vm2996, %v2997, %v2995
    %v2999 = vclz %v2998
    %v3000 = vsub.s32 %v2999, 2
    %vm3001 = vcmp.gt.s32.totalorder 0, %v3000
    %v3002 = vsel %vm3001, 0, %v3000
    %v3003 = vsub.s32 32, %v3002
    %v3004 = vshll.u32 %v2995, %v3002
    %v3005 = vshrl.u32 %v2987, %v3003
    %v3006 = vor.u32 %v3004, %v3005
    %v3007 = vsub.s32 4294967266, %v3002
    %v3008 = vadd.s32 %v3007, 127
    %v3009 = vshll.u32 %v3008, 23
    %v3010 = vor.u32 4788187, %v3009
    %v3011 = vand.u32 2147483647, %v3010
    %v3013 = vcvt.s32.f32 %v3006
    %v3014 = vmul.f32 %v3013, %v3011
    %v3015 = vxor.u32 %v3014, 2147483648
    %v3016 = vsel %vm2933, %v3015, %v3014
    %v3017 = vsub.s32 4, %v2993
    %v3018 = vsel %vm2933, %v3017, %v2993
    %v3019 = vsel %vm2932, %v2930, %v3016
    %v3020 = vsel %vm2932, 0, %v3018
    %v3021 = vcosq.f32.pop %v3019
    %v3022 = vsinq.f32.pop %v3019
    %vm3023 = vweird.f32 %v2930
    %v3024 = vand.u32 %v3020, 3
    %vm3025 = vcmp.lt.s32.totalorder %v3024, 2
    %vm3026 = vcmp.eq.s32.totalorder %v3024, 0
    %v3027 = vxor.u32 %v3022, 2147483648
    %v3028 = vsel %vm3026, %v3021, %v3027
    %vm3029 = vcmp.eq.s32.totalorder %v3024, 2
    %v3030 = vxor.u32 %v3021, 2147483648
    %v3031 = vsel %vm3029, %v3030, %v3022
    %v3032 = vsel %vm3025, %v3028, %v3031
    %v3033 = vsel %vm3023, nan, %v3032
    %v3034 = vadd.f32 %v3033, 1.0
    %v3035 = vmul.f32 %v3034, 0.5
    %vm3036 = vcmp.ge.f32.partialorder %v18, 5.0
    %v3037 = vsel %vm3036, 0.0, %v3035
    %v3039 = vlaneseq
    %v3040 = vshrl.u32 %v3039, 7
    %v3041 = vsub.s32 0, %v3040
    %v3042 = vrot.slane %v3037, %v3041
    %v3043 = vlaneseq
    %v3044 = vshrl.u32 %v3043, 7
    %v3045 = vsub.s32 1, %v3044
    %v3046 = vrot.slane %v3037, %v3045
    %v3047 = vlaneseq
    %v3048 = vshrl.u32 %v3047, 7
    %v3049 = vsub.s32 2, %v3048
    %v3050 = vrot.slane %v3037, %v3049
    %v3051 = vlaneseq
    %v3052 = vshrl.u32 %v3051, 7
    %v3053 = vsub.s32 3, %v3052
    %v3054 = vrot.slane %v3037, %v3053
    %v3055 = vlaneseq
    %v3056 = vshrl.u32 %v3055, 7
    %v3057 = vsub.s32 4, %v3056
    %v3058 = vrot.slane %v3037, %v3057
    %v3059 = vlaneseq
    %v3060 = vshrl.u32 %v3059, 7
    %v3061 = vsub.s32 5, %v3060
    %v3062 = vrot.slane %v3037, %v3061
    %v3063 = vlaneseq
    %v3064 = vshrl.u32 %v3063, 7
    %v3065 = vsub.s32 6, %v3064
    %v3066 = vrot.slane %v3037, %v3065
    %v3067 = vlaneseq
    %v3068 = vshrl.u32 %v3067, 7
    %v3069 = vsub.s32 7, %v3068
    %v3070 = vrot.slane %v3037, %v3069
    %v3079 = vmul.f32 %v2802, %v3042
    %v3080 = vmul.f32 %v2803, %v3046
    %v3081 = vmul.f32 %v2804, %v3050
    %v3082 = vmul.f32 %v2805, %v3054
    %v3083 = vmul.f32 %v2806, %v3058
    %v3084 = vmul.f32 %v2807, %v3062
    %v3085 = vmul.f32 %v2808, %v3066
    %v3086 = vmul.f32 %v2809, %v3070
    %v3087 = vmul.f32 %v2810, %v3042
    %v3088 = vmul.f32 %v2811, %v3046
    %v3089 = vmul.f32 %v2812, %v3050
    %v3090 = vmul.f32 %v2813, %v3054
    %v3091 = vmul.f32 %v2814, %v3058
    %v3092 = vmul.f32 %v2815, %v3062
    %v3093 = vmul.f32 %v2816, %v3066
    %v3094 = vmul.f32 %v2817, %v3070
    %v3095 = vmul.f32 %v2818, %v3042
    %v3096 = vmul.f32 %v2819, %v3046
    %v3097 = vmul.f32 %v2820, %v3050
    %v3098 = vmul.f32 %v2821, %v3054
    %v3099 = vmul.f32 %v2822, %v3058
    %v3100 = vmul.f32 %v2823, %v3062
    %v3101 = vmul.f32 %v2824, %v3066
    %v3102 = vmul.f32 %v2825, %v3070
    %v3103 = vmul.f32 %v2826, %v3042
    %v3104 = vmul.f32 %v2827, %v3046
    %v3105 = vmul.f32 %v2828, %v3050
    %v3106 = vmul.f32 %v2829, %v3054
    %v3107 = vmul.f32 %v2830, %v3058
    %v3108 = vmul.f32 %v2831, %v3062
    %v3109 = vmul.f32 %v2832, %v3066
    %v3110 = vmul.f32 %v2833, %v3070
    %v3111 = vmul.f32 %v2834, %v3042
    %v3112 = vmul.f32 %v2835, %v3046
    %v3113 = vmul.f32 %v2836, %v3050
    %v3114 = vmul.f32 %v2837, %v3054
    %v3115 = vmul.f32 %v2838, %v3058
    %v3116 = vmul.f32 %v2839, %v3062
    %v3117 = vmul.f32 %v2840, %v3066
    %v3118 = vmul.f32 %v2841, %v3070
    %v3119 = vmul.f32 %v2842, %v3042
    %v3120 = vmul.f32 %v2843, %v3046
    %v3121 = vmul.f32 %v2844, %v3050
    %v3122 = vmul.f32 %v2845, %v3054
    %v3123 = vmul.f32 %v2846, %v3058
    %v3124 = vmul.f32 %v2847, %v3062
    %v3125 = vmul.f32 %v2848, %v3066
    %v3126 = vmul.f32 %v2849, %v3070
    %v3127 = vmul.f32 %v2850, %v3042
    %v3128 = vmul.f32 %v2851, %v3046
    %v3129 = vmul.f32 %v2852, %v3050
    %v3130 = vmul.f32 %v2853, %v3054
    %v3131 = vmul.f32 %v2854, %v3058
    %v3132 = vmul.f32 %v2855, %v3062
    %v3133 = vmul.f32 %v2856, %v3066
    %v3134 = vmul.f32 %v2857, %v3070
    %v3135 = vmul.f32 %v2858, %v3042
    %v3136 = vmul.f32 %v2859, %v3046
    %v3137 = vmul.f32 %v2860, %v3050
    %v3138 = vmul.f32 %v2861, %v3054
    %v3139 = vmul.f32 %v2862, %v3058
    %v3140 = vmul.f32 %v2863, %v3062
    %v3141 = vmul.f32 %v2864, %v3066
    %v3142 = vmul.f32 %v2865, %v3070
    %v3143 = vmul.f32 %v2866, %v3042
    %v3144 = vmul.f32 %v2867, %v3046
    %v3145 = vmul.f32 %v2868, %v3050
    %v3146 = vmul.f32 %v2869, %v3054
    %v3147 = vmul.f32 %v2870, %v3058
    %v3148 = vmul.f32 %v2871, %v3062
    %v3149 = vmul.f32 %v2872, %v3066
    %v3150 = vmul.f32 %v2873, %v3070
    %v3151 = vmul.f32 %v2874, %v3042
    %v3152 = vmul.f32 %v2875, %v3046
    %v3153 = vmul.f32 %v2876, %v3050
    %v3154 = vmul.f32 %v2877, %v3054
    %v3155 = vmul.f32 %v2878, %v3058
    %v3156 = vmul.f32 %v2879, %v3062
    %v3157 = vmul.f32 %v2880, %v3066
    %v3158 = vmul.f32 %v2881, %v3070
    %v3159 = vmul.f32 %v2882, %v3042
    %v3160 = vmul.f32 %v2883, %v3046
    %v3161 = vmul.f32 %v2884, %v3050
    %v3162 = vmul.f32 %v2885, %v3054
    %v3163 = vmul.f32 %v2886, %v3058
    %v3164 = vmul.f32 %v2887, %v3062
    %v3165 = vmul.f32 %v2888, %v3066
    %v3166 = vmul.f32 %v2889, %v3070
    %v3167 = vmul.f32 %v2890, %v3042
    %v3168 = vmul.f32 %v2891, %v3046
    %v3169 = vmul.f32 %v2892, %v3050
    %v3170 = vmul.f32 %v2893, %v3054
    %v3171 = vmul.f32 %v2894, %v3058
    %v3172 = vmul.f32 %v2895, %v3062
    %v3173 = vmul.f32 %v2896, %v3066
    %v3174 = vmul.f32 %v2897, %v3070
    %v3175 = vmul.f32 %v2898, %v3042
    %v3176 = vmul.f32 %v2899, %v3046
    %v3177 = vmul.f32 %v2900, %v3050
    %v3178 = vmul.f32 %v2901, %v3054
    %v3179 = vmul.f32 %v2902, %v3058
    %v3180 = vmul.f32 %v2903, %v3062
    %v3181 = vmul.f32 %v2904, %v3066
    %v3182 = vmul.f32 %v2905, %v3070
    %v3183 = vmul.f32 %v2906, %v3042
    %v3184 = vmul.f32 %v2907, %v3046
    %v3185 = vmul.f32 %v2908, %v3050
    %v3186 = vmul.f32 %v2909, %v3054
    %v3187 = vmul.f32 %v2910, %v3058
    %v3188 = vmul.f32 %v2911, %v3062
    %v3189 = vmul.f32 %v2912, %v3066
    %v3190 = vmul.f32 %v2913, %v3070
    %v3191 = vmul.f32 %v2914, %v3042
    %v3192 = vmul.f32 %v2915, %v3046
    %v3193 = vmul.f32 %v2916, %v3050
    %v3194 = vmul.f32 %v2917, %v3054
    %v3195 = vmul.f32 %v2918, %v3058
    %v3196 = vmul.f32 %v2919, %v3062
    %v3197 = vmul.f32 %v2920, %v3066
    %v3198 = vmul.f32 %v2921, %v3070
    %v3199 = vmul.f32 %v2922, %v3042
    %v3200 = vmul.f32 %v2923, %v3046
    %v3201 = vmul.f32 %v2924, %v3050
    %v3202 = vmul.f32 %v2925, %v3054
    %v3203 = vmul.f32 %v2926, %v3058
    %v3204 = vmul.f32 %v2927, %v3062
    %v3205 = vmul.f32 %v2928, %v3066
    %v3206 = vmul.f32 %v2929, %v3070
    %3207 = vxpose.xlu0.b32.start [1/16] %v3079, 128
    %3208 = vxpose.xlu0.b32.cont [2/16] %v3087, 128
    %3209 = vxpose.xlu0.b32.cont [3/16] %v3095, 128
    %3210 = vxpose.xlu0.b32.cont [4/16] %v3103, 128
    %3211 = vxpose.xlu0.b32.cont [5/16] %v3111, 128
    %3212 = vxpose.xlu0.b32.cont [6/16] %v3119, 128
    %3213 = vxpose.xlu0.b32.cont [7/16] %v3127, 128
    %3214 = vxpose.xlu0.b32.cont [8/16] %v3135, 128
    %3215 = vxpose.xlu0.b32.cont [9/16] %v3143, 128
    %3216 = vxpose.xlu0.b32.cont [10/16] %v3151, 128
    %3217 = vxpose.xlu0.b32.cont [11/16] %v3159, 128
    %3218 = vxpose.xlu0.b32.cont [12/16] %v3167, 128
    %3219 = vxpose.xlu0.b32.cont [13/16] %v3175, 128
    %3220 = vxpose.xlu0.b32.cont [14/16] %v3183, 128
    %3221 = vxpose.xlu0.b32.cont [15/16] %v3191, 128
    %3222 = vxpose.xlu0.b32.end [16/16] %v3199, 128
    %v3223 = vpop.trf.xlu0
    %v3224 = vpop.trf.xlu0
    %v3225 = vpop.trf.xlu0
    %v3226 = vpop.trf.xlu0
    %v3227 = vpop.trf.xlu0
    %v3228 = vpop.trf.xlu0
    %v3229 = vpop.trf.xlu0
    %v3230 = vpop.trf.xlu0
    %v3231 = vpop.trf.xlu0
    %v3232 = vpop.trf.xlu0
    %v3233 = vpop.trf.xlu0
    %v3234 = vpop.trf.xlu0
    %v3235 = vpop.trf.xlu0
    %v3236 = vpop.trf.xlu0
    %v3237 = vpop.trf.xlu0
    %v3238 = vpop.trf.xlu0
    %3239 = vxpose.xlu0.b32.start [1/16] %v3080, 128
    %3240 = vxpose.xlu0.b32.cont [2/16] %v3088, 128
    %3241 = vxpose.xlu0.b32.cont [3/16] %v3096, 128
    %3242 = vxpose.xlu0.b32.cont [4/16] %v3104, 128
    %3243 = vxpose.xlu0.b32.cont [5/16] %v3112, 128
    %3244 = vxpose.xlu0.b32.cont [6/16] %v3120, 128
    %3245 = vxpose.xlu0.b32.cont [7/16] %v3128, 128
    %3246 = vxpose.xlu0.b32.cont [8/16] %v3136, 128
    %3247 = vxpose.xlu0.b32.cont [9/16] %v3144, 128
    %3248 = vxpose.xlu0.b32.cont [10/16] %v3152, 128
    %3249 = vxpose.xlu0.b32.cont [11/16] %v3160, 128
    %3250 = vxpose.xlu0.b32.cont [12/16] %v3168, 128
    %3251 = vxpose.xlu0.b32.cont [13/16] %v3176, 128
    %3252 = vxpose.xlu0.b32.cont [14/16] %v3184, 128
    %3253 = vxpose.xlu0.b32.cont [15/16] %v3192, 128
    %3254 = vxpose.xlu0.b32.end [16/16] %v3200, 128
    %v3255 = vpop.trf.xlu0
    %v3256 = vpop.trf.xlu0
    %v3257 = vpop.trf.xlu0
    %v3258 = vpop.trf.xlu0
    %v3259 = vpop.trf.xlu0
    %v3260 = vpop.trf.xlu0
    %v3261 = vpop.trf.xlu0
    %v3262 = vpop.trf.xlu0
    %v3263 = vpop.trf.xlu0
    %v3264 = vpop.trf.xlu0
    %v3265 = vpop.trf.xlu0
    %v3266 = vpop.trf.xlu0
    %v3267 = vpop.trf.xlu0
    %v3268 = vpop.trf.xlu0
    %v3269 = vpop.trf.xlu0
    %v3270 = vpop.trf.xlu0
    %3271 = vxpose.xlu0.b32.start [1/16] %v3081, 128
    %3272 = vxpose.xlu0.b32.cont [2/16] %v3089, 128
    %3273 = vxpose.xlu0.b32.cont [3/16] %v3097, 128
    %3274 = vxpose.xlu0.b32.cont [4/16] %v3105, 128
    %3275 = vxpose.xlu0.b32.cont [5/16] %v3113, 128
    %3276 = vxpose.xlu0.b32.cont [6/16] %v3121, 128
    %3277 = vxpose.xlu0.b32.cont [7/16] %v3129, 128
    %3278 = vxpose.xlu0.b32.cont [8/16] %v3137, 128
    %3279 = vxpose.xlu0.b32.cont [9/16] %v3145, 128
    %3280 = vxpose.xlu0.b32.cont [10/16] %v3153, 128
    %3281 = vxpose.xlu0.b32.cont [11/16] %v3161, 128
    %3282 = vxpose.xlu0.b32.cont [12/16] %v3169, 128
    %3283 = vxpose.xlu0.b32.cont [13/16] %v3177, 128
    %3284 = vxpose.xlu0.b32.cont [14/16] %v3185, 128
    %3285 = vxpose.xlu0.b32.cont [15/16] %v3193, 128
    %3286 = vxpose.xlu0.b32.end [16/16] %v3201, 128
    %v3287 = vpop.trf.xlu0
    %v3288 = vpop.trf.xlu0
    %v3289 = vpop.trf.xlu0
    %v3290 = vpop.trf.xlu0
    %v3291 = vpop.trf.xlu0
    %v3292 = vpop.trf.xlu0
    %v3293 = vpop.trf.xlu0
    %v3294 = vpop.trf.xlu0
    %v3295 = vpop.trf.xlu0
    %v3296 = vpop.trf.xlu0
    %v3297 = vpop.trf.xlu0
    %v3298 = vpop.trf.xlu0
    %v3299 = vpop.trf.xlu0
    %v3300 = vpop.trf.xlu0
    %v3301 = vpop.trf.xlu0
    %v3302 = vpop.trf.xlu0
    %3303 = vxpose.xlu0.b32.start [1/16] %v3082, 128
    %3304 = vxpose.xlu0.b32.cont [2/16] %v3090, 128
    %3305 = vxpose.xlu0.b32.cont [3/16] %v3098, 128
    %3306 = vxpose.xlu0.b32.cont [4/16] %v3106, 128
    %3307 = vxpose.xlu0.b32.cont [5/16] %v3114, 128
    %3308 = vxpose.xlu0.b32.cont [6/16] %v3122, 128
    %3309 = vxpose.xlu0.b32.cont [7/16] %v3130, 128
    %3310 = vxpose.xlu0.b32.cont [8/16] %v3138, 128
    %3311 = vxpose.xlu0.b32.cont [9/16] %v3146, 128
    %3312 = vxpose.xlu0.b32.cont [10/16] %v3154, 128
    %3313 = vxpose.xlu0.b32.cont [11/16] %v3162, 128
    %3314 = vxpose.xlu0.b32.cont [12/16] %v3170, 128
    %3315 = vxpose.xlu0.b32.cont [13/16] %v3178, 128
    %3316 = vxpose.xlu0.b32.cont [14/16] %v3186, 128
    %3317 = vxpose.xlu0.b32.cont [15/16] %v3194, 128
    %3318 = vxpose.xlu0.b32.end [16/16] %v3202, 128
    %v3319 = vpop.trf.xlu0
    %v3320 = vpop.trf.xlu0
    %v3321 = vpop.trf.xlu0
    %v3322 = vpop.trf.xlu0
    %v3323 = vpop.trf.xlu0
    %v3324 = vpop.trf.xlu0
    %v3325 = vpop.trf.xlu0
    %v3326 = vpop.trf.xlu0
    %v3327 = vpop.trf.xlu0
    %v3328 = vpop.trf.xlu0
    %v3329 = vpop.trf.xlu0
    %v3330 = vpop.trf.xlu0
    %v3331 = vpop.trf.xlu0
    %v3332 = vpop.trf.xlu0
    %v3333 = vpop.trf.xlu0
    %v3334 = vpop.trf.xlu0
    %3335 = vxpose.xlu0.b32.start [1/16] %v3083, 128
    %3336 = vxpose.xlu0.b32.cont [2/16] %v3091, 128
    %3337 = vxpose.xlu0.b32.cont [3/16] %v3099, 128
    %3338 = vxpose.xlu0.b32.cont [4/16] %v3107, 128
    %3339 = vxpose.xlu0.b32.cont [5/16] %v3115, 128
    %3340 = vxpose.xlu0.b32.cont [6/16] %v3123, 128
    %3341 = vxpose.xlu0.b32.cont [7/16] %v3131, 128
    %3342 = vxpose.xlu0.b32.cont [8/16] %v3139, 128
    %3343 = vxpose.xlu0.b32.cont [9/16] %v3147, 128
    %3344 = vxpose.xlu0.b32.cont [10/16] %v3155, 128
    %3345 = vxpose.xlu0.b32.cont [11/16] %v3163, 128
    %3346 = vxpose.xlu0.b32.cont [12/16] %v3171, 128
    %3347 = vxpose.xlu0.b32.cont [13/16] %v3179, 128
    %3348 = vxpose.xlu0.b32.cont [14/16] %v3187, 128
    %3349 = vxpose.xlu0.b32.cont [15/16] %v3195, 128
    %3350 = vxpose.xlu0.b32.end [16/16] %v3203, 128
    %v3351 = vpop.trf.xlu0
    %v3352 = vpop.trf.xlu0
    %v3353 = vpop.trf.xlu0
    %v3354 = vpop.trf.xlu0
    %v3355 = vpop.trf.xlu0
    %v3356 = vpop.trf.xlu0
    %v3357 = vpop.trf.xlu0
    %v3358 = vpop.trf.xlu0
    %v3359 = vpop.trf.xlu0
    %v3360 = vpop.trf.xlu0
    %v3361 = vpop.trf.xlu0
    %v3362 = vpop.trf.xlu0
    %v3363 = vpop.trf.xlu0
    %v3364 = vpop.trf.xlu0
    %v3365 = vpop.trf.xlu0
    %v3366 = vpop.trf.xlu0
    %3367 = vxpose.xlu0.b32.start [1/16] %v3084, 128
    %3368 = vxpose.xlu0.b32.cont [2/16] %v3092, 128
    %3369 = vxpose.xlu0.b32.cont [3/16] %v3100, 128
    %3370 = vxpose.xlu0.b32.cont [4/16] %v3108, 128
    %3371 = vxpose.xlu0.b32.cont [5/16] %v3116, 128
    %3372 = vxpose.xlu0.b32.cont [6/16] %v3124, 128
    %3373 = vxpose.xlu0.b32.cont [7/16] %v3132, 128
    %3374 = vxpose.xlu0.b32.cont [8/16] %v3140, 128
    %3375 = vxpose.xlu0.b32.cont [9/16] %v3148, 128
    %3376 = vxpose.xlu0.b32.cont [10/16] %v3156, 128
    %3377 = vxpose.xlu0.b32.cont [11/16] %v3164, 128
    %3378 = vxpose.xlu0.b32.cont [12/16] %v3172, 128
    %3379 = vxpose.xlu0.b32.cont [13/16] %v3180, 128
    %3380 = vxpose.xlu0.b32.cont [14/16] %v3188, 128
    %3381 = vxpose.xlu0.b32.cont [15/16] %v3196, 128
    %3382 = vxpose.xlu0.b32.end [16/16] %v3204, 128
    %v3383 = vpop.trf.xlu0
    %v3384 = vpop.trf.xlu0
    %v3385 = vpop.trf.xlu0
    %v3386 = vpop.trf.xlu0
    %v3387 = vpop.trf.xlu0
    %v3388 = vpop.trf.xlu0
    %v3389 = vpop.trf.xlu0
    %v3390 = vpop.trf.xlu0
    %v3391 = vpop.trf.xlu0
    %v3392 = vpop.trf.xlu0
    %v3393 = vpop.trf.xlu0
    %v3394 = vpop.trf.xlu0
    %v3395 = vpop.trf.xlu0
    %v3396 = vpop.trf.xlu0
    %v3397 = vpop.trf.xlu0
    %v3398 = vpop.trf.xlu0
    %3399 = vxpose.xlu0.b32.start [1/16] %v3085, 128
    %3400 = vxpose.xlu0.b32.cont [2/16] %v3093, 128
    %3401 = vxpose.xlu0.b32.cont [3/16] %v3101, 128
    %3402 = vxpose.xlu0.b32.cont [4/16] %v3109, 128
    %3403 = vxpose.xlu0.b32.cont [5/16] %v3117, 128
    %3404 = vxpose.xlu0.b32.cont [6/16] %v3125, 128
    %3405 = vxpose.xlu0.b32.cont [7/16] %v3133, 128
    %3406 = vxpose.xlu0.b32.cont [8/16] %v3141, 128
    %3407 = vxpose.xlu0.b32.cont [9/16] %v3149, 128
    %3408 = vxpose.xlu0.b32.cont [10/16] %v3157, 128
    %3409 = vxpose.xlu0.b32.cont [11/16] %v3165, 128
    %3410 = vxpose.xlu0.b32.cont [12/16] %v3173, 128
    %3411 = vxpose.xlu0.b32.cont [13/16] %v3181, 128
    %3412 = vxpose.xlu0.b32.cont [14/16] %v3189, 128
    %3413 = vxpose.xlu0.b32.cont [15/16] %v3197, 128
    %3414 = vxpose.xlu0.b32.end [16/16] %v3205, 128
    %v3415 = vpop.trf.xlu0
    %v3416 = vpop.trf.xlu0
    %v3417 = vpop.trf.xlu0
    %v3418 = vpop.trf.xlu0
    %v3419 = vpop.trf.xlu0
    %v3420 = vpop.trf.xlu0
    %v3421 = vpop.trf.xlu0
    %v3422 = vpop.trf.xlu0
    %v3423 = vpop.trf.xlu0
    %v3424 = vpop.trf.xlu0
    %v3425 = vpop.trf.xlu0
    %v3426 = vpop.trf.xlu0
    %v3427 = vpop.trf.xlu0
    %v3428 = vpop.trf.xlu0
    %v3429 = vpop.trf.xlu0
    %v3430 = vpop.trf.xlu0
    %3431 = vxpose.xlu0.b32.start [1/16] %v3086, 128
    %3432 = vxpose.xlu0.b32.cont [2/16] %v3094, 128
    %3433 = vxpose.xlu0.b32.cont [3/16] %v3102, 128
    %3434 = vxpose.xlu0.b32.cont [4/16] %v3110, 128
    %3435 = vxpose.xlu0.b32.cont [5/16] %v3118, 128
    %3436 = vxpose.xlu0.b32.cont [6/16] %v3126, 128
    %3437 = vxpose.xlu0.b32.cont [7/16] %v3134, 128
    %3438 = vxpose.xlu0.b32.cont [8/16] %v3142, 128
    %3439 = vxpose.xlu0.b32.cont [9/16] %v3150, 128
    %3440 = vxpose.xlu0.b32.cont [10/16] %v3158, 128
    %3441 = vxpose.xlu0.b32.cont [11/16] %v3166, 128
    %3442 = vxpose.xlu0.b32.cont [12/16] %v3174, 128
    %3443 = vxpose.xlu0.b32.cont [13/16] %v3182, 128
    %3444 = vxpose.xlu0.b32.cont [14/16] %v3190, 128
    %3445 = vxpose.xlu0.b32.cont [15/16] %v3198, 128
    %3446 = vxpose.xlu0.b32.end [16/16] %v3206, 128
    %v3447 = vpop.trf.xlu0
    %v3448 = vpop.trf.xlu0
    %v3449 = vpop.trf.xlu0
    %v3450 = vpop.trf.xlu0
    %v3451 = vpop.trf.xlu0
    %v3452 = vpop.trf.xlu0
    %v3453 = vpop.trf.xlu0
    %v3454 = vpop.trf.xlu0
    %v3455 = vpop.trf.xlu0
    %v3456 = vpop.trf.xlu0
    %v3457 = vpop.trf.xlu0
    %v3458 = vpop.trf.xlu0
    %v3459 = vpop.trf.xlu0
    %v3460 = vpop.trf.xlu0
    %v3461 = vpop.trf.xlu0
    %v3462 = vpop.trf.xlu0
    %3463 = vst [vmem:[#allocation2] sm:$0xff] %v3223
    %3464 = vst [vmem:[#allocation2 + $0x8] sm:$0xff] %v3224
    %3465 = vst [vmem:[#allocation2 + $0x10] sm:$0xff] %v3225
    %3466 = vst [vmem:[#allocation2 + $0x18] sm:$0xff] %v3226
    %3467 = vst [vmem:[#allocation2 + $0x20] sm:$0xff] %v3227
    %3468 = vst [vmem:[#allocation2 + $0x28] sm:$0xff] %v3228
    %3469 = vst [vmem:[#allocation2 + $0x30] sm:$0xff] %v3229
    %3470 = vst [vmem:[#allocation2 + $0x38] sm:$0xff] %v3230
    %3471 = vst [vmem:[#allocation2 + $0x40] sm:$0xff] %v3231
    %3472 = vst [vmem:[#allocation2 + $0x48] sm:$0xff] %v3232
    %3473 = vst [vmem:[#allocation2 + $0x50] sm:$0xff] %v3233
    %3474 = vst [vmem:[#allocation2 + $0x58] sm:$0xff] %v3234
    %3475 = vst [vmem:[#allocation2 + $0x60] sm:$0xff] %v3235
    %3476 = vst [vmem:[#allocation2 + $0x68] sm:$0xff] %v3236
    %3477 = vst [vmem:[#allocation2 + $0x70] sm:$0xff] %v3237
    %3478 = vst [vmem:[#allocation2 + $0x78] sm:$0xff] %v3238
    %3479 = vst [vmem:[#allocation2 + $0x80] sm:$0xff] %v3255
    %3480 = vst [vmem:[#allocation2 + $0x88] sm:$0xff] %v3256
    %3481 = vst [vmem:[#allocation2 + $0x90] sm:$0xff] %v3257
    %3482 = vst [vmem:[#allocation2 + $0x98] sm:$0xff] %v3258
    %3483 = vst [vmem:[#allocation2 + $0xa0] sm:$0xff] %v3259
    %3484 = vst [vmem:[#allocation2 + $0xa8] sm:$0xff] %v3260
    %3485 = vst [vmem:[#allocation2 + $0xb0] sm:$0xff] %v3261
    %3486 = vst [vmem:[#allocation2 + $0xb8] sm:$0xff] %v3262
    %3487 = vst [vmem:[#allocation2 + $0xc0] sm:$0xff] %v3263
    %3488 = vst [vmem:[#allocation2 + $0xc8] sm:$0xff] %v3264
    %3489 = vst [vmem:[#allocation2 + $0xd0] sm:$0xff] %v3265
    %3490 = vst [vmem:[#allocation2 + $0xd8] sm:$0xff] %v3266
    %3491 = vst [vmem:[#allocation2 + $0xe0] sm:$0xff] %v3267
    %3492 = vst [vmem:[#allocation2 + $0xe8] sm:$0xff] %v3268
    %3493 = vst [vmem:[#allocation2 + $0xf0] sm:$0xff] %v3269
    %3494 = vst [vmem:[#allocation2 + $0xf8] sm:$0xff] %v3270
    %3495 = vst [vmem:[#allocation2 + $0x100] sm:$0xff] %v3287
    %3496 = vst [vmem:[#allocation2 + $0x108] sm:$0xff] %v3288
    %3497 = vst [vmem:[#allocation2 + $0x110] sm:$0xff] %v3289
    %3498 = vst [vmem:[#allocation2 + $0x118] sm:$0xff] %v3290
    %3499 = vst [vmem:[#allocation2 + $0x120] sm:$0xff] %v3291
    %3500 = vst [vmem:[#allocation2 + $0x128] sm:$0xff] %v3292
    %3501 = vst [vmem:[#allocation2 + $0x130] sm:$0xff] %v3293
    %3502 = vst [vmem:[#allocation2 + $0x138] sm:$0xff] %v3294
    %3503 = vst [vmem:[#allocation2 + $0x140] sm:$0xff] %v3295
    %3504 = vst [vmem:[#allocation2 + $0x148] sm:$0xff] %v3296
    %3505 = vst [vmem:[#allocation2 + $0x150] sm:$0xff] %v3297
    %3506 = vst [vmem:[#allocation2 + $0x158] sm:$0xff] %v3298
    %3507 = vst [vmem:[#allocation2 + $0x160] sm:$0xff] %v3299
    %3508 = vst [vmem:[#allocation2 + $0x168] sm:$0xff] %v3300
    %3509 = vst [vmem:[#allocation2 + $0x170] sm:$0xff] %v3301
    %3510 = vst [vmem:[#allocation2 + $0x178] sm:$0xff] %v3302
    %3511 = vst [vmem:[#allocation2 + $0x180] sm:$0xff] %v3319
    %3512 = vst [vmem:[#allocation2 + $0x188] sm:$0xff] %v3320
    %3513 = vst [vmem:[#allocation2 + $0x190] sm:$0xff] %v3321
    %3514 = vst [vmem:[#allocation2 + $0x198] sm:$0xff] %v3322
    %3515 = vst [vmem:[#allocation2 + $0x1a0] sm:$0xff] %v3323
    %3516 = vst [vmem:[#allocation2 + $0x1a8] sm:$0xff] %v3324
    %3517 = vst [vmem:[#allocation2 + $0x1b0] sm:$0xff] %v3325
    %3518 = vst [vmem:[#allocation2 + $0x1b8] sm:$0xff] %v3326
    %3519 = vst [vmem:[#allocation2 + $0x1c0] sm:$0xff] %v3327
    %3520 = vst [vmem:[#allocation2 + $0x1c8] sm:$0xff] %v3328
    %3521 = vst [vmem:[#allocation2 + $0x1d0] sm:$0xff] %v3329
    %3522 = vst [vmem:[#allocation2 + $0x1d8] sm:$0xff] %v3330
    %3523 = vst [vmem:[#allocation2 + $0x1e0] sm:$0xff] %v3331
    %3524 = vst [vmem:[#allocation2 + $0x1e8] sm:$0xff] %v3332
    %3525 = vst [vmem:[#allocation2 + $0x1f0] sm:$0xff] %v3333
    %3526 = vst [vmem:[#allocation2 + $0x1f8] sm:$0xff] %v3334
    %3527 = vst [vmem:[#allocation2 + $0x200] sm:$0xff] %v3351
    %3528 = vst [vmem:[#allocation2 + $0x208] sm:$0xff] %v3352
    %3529 = vst [vmem:[#allocation2 + $0x210] sm:$0xff] %v3353
    %3530 = vst [vmem:[#allocation2 + $0x218] sm:$0xff] %v3354
    %3531 = vst [vmem:[#allocation2 + $0x220] sm:$0xff] %v3355
    %3532 = vst [vmem:[#allocation2 + $0x228] sm:$0xff] %v3356
    %3533 = vst [vmem:[#allocation2 + $0x230] sm:$0xff] %v3357
    %3534 = vst [vmem:[#allocation2 + $0x238] sm:$0xff] %v3358
    %3535 = vst [vmem:[#allocation2 + $0x240] sm:$0xff] %v3359
    %3536 = vst [vmem:[#allocation2 + $0x248] sm:$0xff] %v3360
    %3537 = vst [vmem:[#allocation2 + $0x250] sm:$0xff] %v3361
    %3538 = vst [vmem:[#allocation2 + $0x258] sm:$0xff] %v3362
    %3539 = vst [vmem:[#allocation2 + $0x260] sm:$0xff] %v3363
    %3540 = vst [vmem:[#allocation2 + $0x268] sm:$0xff] %v3364
    %3541 = vst [vmem:[#allocation2 + $0x270] sm:$0xff] %v3365
    %3542 = vst [vmem:[#allocation2 + $0x278] sm:$0xff] %v3366
    %3543 = vst [vmem:[#allocation2 + $0x280] sm:$0xff] %v3383
    %3544 = vst [vmem:[#allocation2 + $0x288] sm:$0xff] %v3384
    %3545 = vst [vmem:[#allocation2 + $0x290] sm:$0xff] %v3385
    %3546 = vst [vmem:[#allocation2 + $0x298] sm:$0xff] %v3386
    %3547 = vst [vmem:[#allocation2 + $0x2a0] sm:$0xff] %v3387
    %3548 = vst [vmem:[#allocation2 + $0x2a8] sm:$0xff] %v3388
    %3549 = vst [vmem:[#allocation2 + $0x2b0] sm:$0xff] %v3389
    %3550 = vst [vmem:[#allocation2 + $0x2b8] sm:$0xff] %v3390
    %3551 = vst [vmem:[#allocation2 + $0x2c0] sm:$0xff] %v3391
    %3552 = vst [vmem:[#allocation2 + $0x2c8] sm:$0xff] %v3392
    %3553 = vst [vmem:[#allocation2 + $0x2d0] sm:$0xff] %v3393
    %3554 = vst [vmem:[#allocation2 + $0x2d8] sm:$0xff] %v3394
    %3555 = vst [vmem:[#allocation2 + $0x2e0] sm:$0xff] %v3395
    %3556 = vst [vmem:[#allocation2 + $0x2e8] sm:$0xff] %v3396
    %3557 = vst [vmem:[#allocation2 + $0x2f0] sm:$0xff] %v3397
    %3558 = vst [vmem:[#allocation2 + $0x2f8] sm:$0xff] %v3398
    %3559 = vst [vmem:[#allocation2 + $0x300] sm:$0xff] %v3415
    %3560 = vst [vmem:[#allocation2 + $0x308] sm:$0xff] %v3416
    %3561 = vst [vmem:[#allocation2 + $0x310] sm:$0xff] %v3417
    %3562 = vst [vmem:[#allocation2 + $0x318] sm:$0xff] %v3418
    %3563 = vst [vmem:[#allocation2 + $0x320] sm:$0xff] %v3419
    %3564 = vst [vmem:[#allocation2 + $0x328] sm:$0xff] %v3420
    %3565 = vst [vmem:[#allocation2 + $0x330] sm:$0xff] %v3421
    %3566 = vst [vmem:[#allocation2 + $0x338] sm:$0xff] %v3422
    %3567 = vst [vmem:[#allocation2 + $0x340] sm:$0xff] %v3423
    %3568 = vst [vmem:[#allocation2 + $0x348] sm:$0xff] %v3424
    %3569 = vst [vmem:[#allocation2 + $0x350] sm:$0xff] %v3425
    %3570 = vst [vmem:[#allocation2 + $0x358] sm:$0xff] %v3426
    %3571 = vst [vmem:[#allocation2 + $0x360] sm:$0xff] %v3427
    %3572 = vst [vmem:[#allocation2 + $0x368] sm:$0xff] %v3428
    %3573 = vst [vmem:[#allocation2 + $0x370] sm:$0xff] %v3429
    %3574 = vst [vmem:[#allocation2 + $0x378] sm:$0xff] %v3430
    %3575 = vst [vmem:[#allocation2 + $0x380] sm:$0xff] %v3447
    %3576 = vst [vmem:[#allocation2 + $0x388] sm:$0xff] %v3448
    %3577 = vst [vmem:[#allocation2 + $0x390] sm:$0xff] %v3449
    %3578 = vst [vmem:[#allocation2 + $0x398] sm:$0xff] %v3450
    %3579 = vst [vmem:[#allocation2 + $0x3a0] sm:$0xff] %v3451
    %3580 = vst [vmem:[#allocation2 + $0x3a8] sm:$0xff] %v3452
    %3581 = vst [vmem:[#allocation2 + $0x3b0] sm:$0xff] %v3453
    %3582 = vst [vmem:[#allocation2 + $0x3b8] sm:$0xff] %v3454
    %3583 = vst [vmem:[#allocation2 + $0x3c0] sm:$0xff] %v3455
    %3584 = vst [vmem:[#allocation2 + $0x3c8] sm:$0xff] %v3456
    %3585 = vst [vmem:[#allocation2 + $0x3d0] sm:$0xff] %v3457
    %3586 = vst [vmem:[#allocation2 + $0x3d8] sm:$0xff] %v3458
    %3587 = vst [vmem:[#allocation2 + $0x3e0] sm:$0xff] %v3459
    %3588 = vst [vmem:[#allocation2 + $0x3e8] sm:$0xff] %v3460
    %3589 = vst [vmem:[#allocation2 + $0x3f0] sm:$0xff] %v3461
    %3590 = vst [vmem:[#allocation2 + $0x3f8] sm:$0xff] %v3462
    // Predicated region
    $region18: #{tpu_custom_call.1} parent=1 // pred_check
      _
    $region19: #{tpu_custom_call.1} parent=1 // pred_check_branch
      %3592 = sbr.rel (0) target = $region21
    $region20: #{tpu_custom_call.1} parent=1 // pred_region
      %s3594 = ssub.s32 16384, 16384
      %3595 = vsyncadd [#allocation3], %s3594
      %s3596 = sshll.u32 [#allocation2], 4
      %s3597 = int_to_ptr.vmem [resolvable:$true] %s3596
      %3602 = dma.vmem_to_hbm [thread:$0]  %s3597, 16384, %s4, [#allocation3], 128, 128, 8
    $region21: #{tpu_custom_call.1} parent=1 // pred_fallthru
      _
    // Predicated region
    $region22: #{tpu_custom_call.1} parent=1 // pred_check
      _
    $region23: #{tpu_custom_call.1} parent=1 // pred_check_branch
      %3604 = sbr.rel (0) target = $region25
    $region24: #{tpu_custom_call.1} parent=1 // pred_region
      %3605 = dma.done [#allocation3], 16384
    $region25: #{tpu_custom_call.1} parent=1 // pred_fallthru
      _
    %3606 = vsyncpa [#allocation3], 1

</llo_original>
